<compile_context>
chip_gen: v7x
topology: tpu7x:2x2x1
jax: 0.10.0
libtpu: 0.0.40
codegen_flags: <defaults>
</compile_context>

<pallas_src>
import functools

import jax
import jax.numpy as jnp
from jax.experimental import pallas as pl
from jax.experimental.pallas import tpu as pltpu

# ---------------------------------------------------------------------------
# Scaled-down ViT config (ViT-Base/16 architecture, small dims for the demo)
# ---------------------------------------------------------------------------
IMG = 32          # image spatial size   (224 in the real model)
PATCH = 16        # patch size
IN_CH = 3         # input channels
EMBED = 32        # embedding dim        (768 in the real model)
DEPTH = 2         # number of blocks     (12 in the real model)
HEADS = 4         # attention heads      (12 in the real model)
HEAD_DIM = EMBED // HEADS
MLP_HIDDEN = 4 * EMBED
N_CLASSES = 10
HEAD_PAD = 128    # classifier output padded to a full lane tile
EPS = 1e-6        # timm ViT LayerNorm eps

N_PATCH = (IMG // PATCH) ** 2      # 4
SEQ = N_PATCH + 1                  # 5 (+1 cls token)
T_PAD = 8                          # per-image sequence padded to a sublane multiple
PATCH_DIM = IN_CH * PATCH * PATCH  # 768
ATTN_SCALE = HEAD_DIM ** -0.5


# ---------------------------------------------------------------------------
# In-kernel helpers (pure f32 elementwise math)
# ---------------------------------------------------------------------------
def _layernorm(x, g, b):
    mu = jnp.mean(x, axis=-1, keepdims=True)
    xc = x - mu
    var = jnp.mean(xc * xc, axis=-1, keepdims=True)
    return xc * jax.lax.rsqrt(var + EPS) * g + b


def _gelu_tanh(y):
    # TODO(synk): PyTorch nn.GELU defaults to exact erf GELU; the tanh
    # approximation is used here for Mosaic-safe lowering (~1e-3 deviation).
    c = 0.7978845608028654  # sqrt(2/pi)
    return 0.5 * y * (1.0 + jnp.tanh(c * (y + 0.044715 * y * y * y)))


# ---------------------------------------------------------------------------
# Fused ViT kernel: patch-embed prologue + DEPTH blocks + head epilogue
# ---------------------------------------------------------------------------
def _vit_kernel(batch,
                patches_ref, pw_ref, pb_ref, init_ref, bias_ref,
                ln1g_ref, ln1b_ref, qkvw_ref, qkvb_ref,
                projw_ref, projb_ref, ln2g_ref, ln2b_ref,
                fc1w_ref, fc1b_ref, fc2w_ref, fc2b_ref,
                ng_ref, nb_ref, hw_ref, hb_ref,
                o_ref, x_scr):
    d = pl.program_id(0)

    # ---- prologue (depth 0): patch embed + cls token + pos embed -> x_scr ----
    @pl.when(d == 0)
    def _():
        pe = jnp.dot(patches_ref[...], pw_ref[...],
                     preferred_element_type=jnp.float32) + pb_ref[...]
        init = init_ref[...]                                  # [T_PAD, EMBED]
        for b in range(batch):
            # row 0: cls + pos[0]; rows SEQ.. : zeros (init pad rows are zero)
            x_scr[pl.ds(b * T_PAD, T_PAD), :] = init
            # rows 1..N_PATCH: patch tokens + pos
            x_scr[pl.ds(b * T_PAD + 1, N_PATCH), :] = (
                init[1:1 + N_PATCH, :] + pe[b * N_PATCH:(b + 1) * N_PATCH, :])

    x = x_scr[...]                                            # [R, EMBED] f32

    # ---- attention branch: LN1 -> QKV -> MHA -> proj -> residual ----
    h = _layernorm(x, ln1g_ref[...], ln1b_ref[...])
    qkv = jnp.dot(h.astype(jnp.bfloat16), qkvw_ref[...],
                  preferred_element_type=jnp.float32) + qkvb_ref[...]   # [R, 3E]

    # head-batched q/k/v: [HEADS, R, HEAD_DIM]
    q = jnp.stack([qkv[:, i * HEAD_DIM:(i + 1) * HEAD_DIM]
                   for i in range(HEADS)], axis=0).astype(jnp.bfloat16)
    k = jnp.stack([qkv[:, EMBED + i * HEAD_DIM:EMBED + (i + 1) * HEAD_DIM]
                   for i in range(HEADS)], axis=0).astype(jnp.bfloat16)
    v = jnp.stack([qkv[:, 2 * EMBED + i * HEAD_DIM:2 * EMBED + (i + 1) * HEAD_DIM]
                   for i in range(HEADS)], axis=0).astype(jnp.bfloat16)

    # all heads at once; bias masks pad key columns AND cross-batch terms
    s = jnp.einsum('hqd,hkd->hqk', q, k,
                   preferred_element_type=jnp.float32) * ATTN_SCALE     # [H,R,R]
    s = s + bias_ref[...]
    s = s - jnp.max(s, axis=-1, keepdims=True)
    p = jnp.exp(s)
    p = p * pl.reciprocal(jnp.sum(p, axis=-1, keepdims=True), approx=True)
    o = jnp.einsum('hqk,hkd->hqd', p.astype(jnp.bfloat16), v,
                   preferred_element_type=jnp.float32)                   # [H,R,Dh]

    # folded output projection: concat_h(o_h) @ Wp == sum_h o_h @ Wp[h]
    proj = jnp.einsum('hqd,hde->hqe', o.astype(jnp.bfloat16), projw_ref[...],
                      preferred_element_type=jnp.float32)                # [H,R,E]
    x = x + jnp.sum(proj, axis=0) + projb_ref[...]

    # ---- MLP branch: LN2 -> FC1+GELU -> FC2 -> residual ----
    h = _layernorm(x, ln2g_ref[...], ln2b_ref[...])
    h1 = jnp.dot(h.astype(jnp.bfloat16), fc1w_ref[...],
                 preferred_element_type=jnp.float32) + fc1b_ref[...]
    g = _gelu_tanh(h1)
    h2 = jnp.dot(g.astype(jnp.bfloat16), fc2w_ref[...],
                 preferred_element_type=jnp.float32) + fc2b_ref[...]
    x = x + h2

    x_scr[...] = x                                            # carry to next depth

    # ---- epilogue (last depth): final LN (cls rows) + classifier head ----
    @pl.when(d == DEPTH - 1)
    def _():
        cls = jnp.concatenate(
            [x[b * T_PAD:b * T_PAD + 1, :] for b in range(batch)], axis=0)  # [B,E]
        hn = _layernorm(cls, ng_ref[...], nb_ref[...])
        y = jnp.dot(hn.astype(jnp.bfloat16), hw_ref[...],
                    preferred_element_type=jnp.float32) + hb_ref[...]        # [B,128]
        o_ref[...] = y.astype(o_ref.dtype)


# ---------------------------------------------------------------------------
# Pallas wrapper: single fused call, grid over depth, weights depth-stacked
# ---------------------------------------------------------------------------
def pallas_vit(patches, init, attn_bias, params, *, batch):
    R = batch * T_PAD
    blk = params["blocks"]

    def rep(shape):           # same block every grid step (fetched once)
        n = len(shape)
        return pl.BlockSpec(shape, lambda d, n=n: (0,) * n)

    def stk(shape):           # depth-stacked weight, leading dim squeezed
        n = len(shape)
        return pl.BlockSpec((None,) + shape, lambda d, n=n: (d,) + (0,) * n)

    in_specs = [
        rep((batch * N_PATCH, PATCH_DIM)),   # patches
        rep((PATCH_DIM, EMBED)),             # patch_w
        rep((1, EMBED)),                     # patch_b
        rep((T_PAD, EMBED)),                 # init (cls + pos, pad rows zero)
        rep((R, R)),                         # attention bias / mask
        stk((1, EMBED)),                     # ln1_g
        stk((1, EMBED)),                     # ln1_b
        stk((EMBED, 3 * EMBED)),             # qkv_w
        stk((1, 3 * EMBED)),                 # qkv_b
        stk((HEADS, HEAD_DIM, EMBED)),       # proj_w (head-split)
        stk((1, EMBED)),                     # proj_b
        stk((1, EMBED)),                     # ln2_g
        stk((1, EMBED)),                     # ln2_b
        stk((EMBED, MLP_HIDDEN)),            # fc1_w
        stk((1, MLP_HIDDEN)),                # fc1_b
        stk((MLP_HIDDEN, EMBED)),            # fc2_w
        stk((1, EMBED)),                     # fc2_b
        rep((1, EMBED)),                     # norm_g
        rep((1, EMBED)),                     # norm_b
        rep((EMBED, HEAD_PAD)),              # head_w
        rep((1, HEAD_PAD)),                  # head_b
    ]

    operands = (
        patches, params["patch_w"], params["patch_b"], init, attn_bias,
        blk["ln1_g"], blk["ln1_b"], blk["qkv_w"], blk["qkv_b"],
        blk["proj_w"], blk["proj_b"], blk["ln2_g"], blk["ln2_b"],
        blk["fc1_w"], blk["fc1_b"], blk["fc2_w"], blk["fc2_b"],
        params["norm_g"], params["norm_b"], params["head_w"], params["head_b"])

    flops_block = (2 * R * EMBED * 3 * EMBED
                   + 2 * HEADS * (2 * R * R * HEAD_DIM)
                   + 2 * HEADS * R * HEAD_DIM * EMBED
                   + 2 * (2 * R * EMBED * MLP_HIDDEN))
    flops = (DEPTH * flops_block
             + 2 * batch * N_PATCH * PATCH_DIM * EMBED
             + 2 * batch * EMBED * HEAD_PAD)
    trans = DEPTH * (HEADS * R * R + R * MLP_HIDDEN)
    bytes_acc = int(sum(a.size * a.dtype.itemsize for a in operands)
                    + batch * HEAD_PAD * 4)

    return pl.pallas_call(
        functools.partial(_vit_kernel, batch),
        out_shape=jax.ShapeDtypeStruct((batch, HEAD_PAD), jnp.float32),
        grid=(DEPTH,),
        in_specs=in_specs,
        out_specs=pl.BlockSpec((batch, HEAD_PAD), lambda d: (0, 0)),
        scratch_shapes=[pltpu.VMEM((R, EMBED), jnp.float32)],
        compiler_params=pltpu.CompilerParams(
            dimension_semantics=("arbitrary",),
            vmem_limit_bytes=32 * 1024 * 1024),
        cost_estimate=pl.CostEstimate(flops=flops, transcendentals=trans,
                                      bytes_accessed=bytes_acc),
    )(*operands)


# ---------------------------------------------------------------------------
# Parameter construction (deterministic, synthetic; weights depth-stacked)
# ---------------------------------------------------------------------------
def init_params(key):
    def normal(k, shape, std=0.02, dtype=jnp.float32):
        return (std * jax.random.normal(k, shape)).astype(dtype)

    keys = iter(jax.random.split(key, 16))

    pos = normal(next(keys), (1, SEQ, EMBED))
    pos = jnp.pad(pos, ((0, 0), (0, T_PAD - SEQ), (0, 0)))     # pad rows = 0

    head_w = normal(next(keys), (EMBED, N_CLASSES))
    head_w = jnp.pad(head_w, ((0, 0), (0, HEAD_PAD - N_CLASSES)))
    head_w = head_w.astype(jnp.bfloat16)

    return {
        "patch_w": normal(next(keys), (PATCH_DIM, EMBED), dtype=jnp.bfloat16),
        "patch_b": jnp.zeros((1, EMBED), jnp.float32),
        "cls_token": normal(next(keys), (1, 1, EMBED)),
        "pos_embed": pos,
        "norm_g": jnp.ones((1, EMBED), jnp.float32),
        "norm_b": jnp.zeros((1, EMBED), jnp.float32),
        "head_w": head_w,
        "head_b": jnp.zeros((1, HEAD_PAD), jnp.float32),
        "blocks": {
            "ln1_g": jnp.ones((DEPTH, 1, EMBED), jnp.float32),
            "ln1_b": jnp.zeros((DEPTH, 1, EMBED), jnp.float32),
            "qkv_w": normal(next(keys), (DEPTH, EMBED, 3 * EMBED),
                            dtype=jnp.bfloat16),
            "qkv_b": jnp.zeros((DEPTH, 1, 3 * EMBED), jnp.float32),
            # proj weight stored head-split: [DEPTH, HEADS, HEAD_DIM, EMBED]
            # (the [EMBED, EMBED] projection with its input dim split per head)
            "proj_w": normal(next(keys), (DEPTH, HEADS, HEAD_DIM, EMBED),
                             dtype=jnp.bfloat16),
            "proj_b": jnp.zeros((DEPTH, 1, EMBED), jnp.float32),
            "ln2_g": jnp.ones((DEPTH, 1, EMBED), jnp.float32),
            "ln2_b": jnp.zeros((DEPTH, 1, EMBED), jnp.float32),
            "fc1_w": normal(next(keys), (DEPTH, EMBED, MLP_HIDDEN),
                            dtype=jnp.bfloat16),
            "fc1_b": jnp.zeros((DEPTH, 1, MLP_HIDDEN), jnp.float32),
            "fc2_w": normal(next(keys), (DEPTH, MLP_HIDDEN, EMBED),
                            dtype=jnp.bfloat16),
            "fc2_b": jnp.zeros((DEPTH, 1, EMBED), jnp.float32),
        },
    }


# ---------------------------------------------------------------------------
# Forward pass (cheap glue in JAX, all compute in the fused Pallas kernel)
# ---------------------------------------------------------------------------
def patchify(x):
    # x: [B, C, H, W] (NCHW) -> [B, N_patch, C*P*P] matching the (C, ph, pw)
    # flatten order of timm's PatchEmbed Conv2d weight.
    B, C, H, W = x.shape
    hp, wp = H // PATCH, W // PATCH
    x = x.reshape(B, C, hp, PATCH, wp, PATCH)
    x = x.transpose(0, 2, 4, 1, 3, 5)                 # [B, hp, wp, C, P, P]
    return x.reshape(B, hp * wp, C * PATCH * PATCH)


@jax.jit
def vit_forward(x, params):
    B = x.shape[0]
    patches = patchify(x).reshape(B * N_PATCH, PATCH_DIM).astype(jnp.bfloat16)

    # row 0: cls + pos[0]; rows 1..N_PATCH: pos; pad rows stay zero
    init = params["pos_embed"][0].at[0].add(params["cls_token"][0, 0])
    init = init.astype(jnp.float32)

    # block-diagonal (per-image) attention bias that also masks pad key columns
    r = jnp.arange(B * T_PAD)
    same_img = (r[:, None] // T_PAD) == (r[None, :] // T_PAD)
    key_real = (r[None, :] % T_PAD) < SEQ
    attn_bias = jnp.where(same_img & key_real, 0.0, -1e30).astype(jnp.float32)

    logits = pallas_vit(patches, init, attn_bias, params, batch=B)  # [B, 128]
    return logits[:, :N_CLASSES]                                    # [B, n_classes]


# ---------------------------------------------------------------------------
if __name__ == "__main__":
    key = jax.random.PRNGKey(0)
    k_img, k_par = jax.random.split(key)
    x = jax.random.normal(k_img, (2, IN_CH, IMG, IMG), dtype=jnp.float32)
    params = init_params(k_par)

    logits = vit_forward(x, params)
    logits = jax.block_until_ready(logits)

    assert logits.shape == (2, N_CLASSES)
    assert bool(jnp.all(jnp.isfinite(logits)))
    print("KERNEL_OK")
</pallas_src>

<mosaic_0001>
module attributes {stable_mosaic.version = 11 : i64} {
  func.func @_vit_kernel(%arg0: i32, %arg1: memref<8x768xbf16, #tpu.memory_space<vmem>>, %arg2: memref<768x32xbf16, #tpu.memory_space<vmem>>, %arg3: memref<1x32xf32, #tpu.memory_space<vmem>>, %arg4: memref<8x32xf32, #tpu.memory_space<vmem>>, %arg5: memref<16x16xf32, #tpu.memory_space<vmem>>, %arg6: memref<1x1x32xf32, #tpu.memory_space<vmem>>, %arg7: memref<1x1x32xf32, #tpu.memory_space<vmem>>, %arg8: memref<1x32x96xbf16, #tpu.memory_space<vmem>>, %arg9: memref<1x1x96xf32, #tpu.memory_space<vmem>>, %arg10: memref<1x4x8x32xbf16, #tpu.memory_space<vmem>>, %arg11: memref<1x1x32xf32, #tpu.memory_space<vmem>>, %arg12: memref<1x1x32xf32, #tpu.memory_space<vmem>>, %arg13: memref<1x1x32xf32, #tpu.memory_space<vmem>>, %arg14: memref<1x32x128xbf16, #tpu.memory_space<vmem>>, %arg15: memref<1x1x128xf32, #tpu.memory_space<vmem>>, %arg16: memref<1x128x32xbf16, #tpu.memory_space<vmem>>, %arg17: memref<1x1x32xf32, #tpu.memory_space<vmem>>, %arg18: memref<1x32xf32, #tpu.memory_space<vmem>>, %arg19: memref<1x32xf32, #tpu.memory_space<vmem>>, %arg20: memref<32x128xbf16, #tpu.memory_space<vmem>>, %arg21: memref<1x128xf32, #tpu.memory_space<vmem>>, %arg22: memref<2x128xf32, #tpu.memory_space<vmem>>, %arg23: memref<16x32xf32, #tpu.memory_space<vmem>>) attributes {dimension_semantics = [#tpu.dimension_semantics<arbitrary>], iteration_bounds = array<i64: 2>, scalar_prefetch = 0 : i64, scratch_operands = 1 : i64, tpu.core_type = #tpu.core_type<tc>, window_params = [{pipeline_mode = #tpu.pipeline_mode<synchronous>, transform_indices = @transform_0, window_bounds = array<i64: 8, 768>}, {pipeline_mode = #tpu.pipeline_mode<synchronous>, transform_indices = @transform_1, window_bounds = array<i64: 768, 32>}, {pipeline_mode = #tpu.pipeline_mode<synchronous>, transform_indices = @transform_2, window_bounds = array<i64: 1, 32>}, {pipeline_mode = #tpu.pipeline_mode<synchronous>, transform_indices = @transform_3, window_bounds = array<i64: 8, 32>}, {pipeline_mode = #tpu.pipeline_mode<synchronous>, transform_indices = @transform_4, window_bounds = array<i64: 16, 16>}, {transform_indices = @transform_5, window_bounds = array<i64: 1, 1, 32>}, {transform_indices = @transform_6, window_bounds = array<i64: 1, 1, 32>}, {transform_indices = @transform_7, window_bounds = array<i64: 1, 32, 96>}, {transform_indices = @transform_8, window_bounds = array<i64: 1, 1, 96>}, {transform_indices = @transform_9, window_bounds = array<i64: 1, 4, 8, 32>}, {transform_indices = @transform_10, window_bounds = array<i64: 1, 1, 32>}, {transform_indices = @transform_11, window_bounds = array<i64: 1, 1, 32>}, {transform_indices = @transform_12, window_bounds = array<i64: 1, 1, 32>}, {transform_indices = @transform_13, window_bounds = array<i64: 1, 32, 128>}, {transform_indices = @transform_14, window_bounds = array<i64: 1, 1, 128>}, {transform_indices = @transform_15, window_bounds = array<i64: 1, 128, 32>}, {transform_indices = @transform_16, window_bounds = array<i64: 1, 1, 32>}, {pipeline_mode = #tpu.pipeline_mode<synchronous>, transform_indices = @transform_17, window_bounds = array<i64: 1, 32>}, {pipeline_mode = #tpu.pipeline_mode<synchronous>, transform_indices = @transform_18, window_bounds = array<i64: 1, 32>}, {pipeline_mode = #tpu.pipeline_mode<synchronous>, transform_indices = @transform_19, window_bounds = array<i64: 32, 128>}, {pipeline_mode = #tpu.pipeline_mode<synchronous>, transform_indices = @transform_20, window_bounds = array<i64: 1, 128>}, {pipeline_mode = #tpu.pipeline_mode<synchronous>, transform_indices = @transform_21, window_bounds = array<i64: 2, 128>}]} {
    %c0_i32 = arith.constant 0 : i32
    %0 = arith.cmpi eq, %arg0, %c0_i32 : i32
    %1 = arith.extui %0 : i1 to i32
    %c0_i32_0 = arith.constant 0 : i32
    %2 = arith.cmpi ne, %1, %c0_i32_0 : i32
    scf.if %2 {
      %c0_67 = arith.constant 0 : index
      %c0_68 = arith.constant 0 : index
      %153 = vector.load %arg1[%c0_67, %c0_68] : memref<8x768xbf16, #tpu.memory_space<vmem>>, vector<8x768xbf16>
      %c0_69 = arith.constant 0 : index
      %c0_70 = arith.constant 0 : index
      %154 = vector.load %arg2[%c0_69, %c0_70] : memref<768x32xbf16, #tpu.memory_space<vmem>>, vector<768x32xbf16>
      %cst_71 = arith.constant dense<0.000000e+00> : vector<8x32xf32>
      %155 = tpu.matmul %153, %154, %cst_71 {dimension_numbers = #tpu.dot_dimension_numbers<[1], [0], [0], [1], [0, 0, 1, 1], [], []>} : vector<8x768xbf16>, vector<768x32xbf16>, vector<8x32xf32> -> vector<8x32xf32>
      %c0_72 = arith.constant 0 : index
      %c0_73 = arith.constant 0 : index
      %156 = vector.load %arg3[%c0_72, %c0_73] : memref<1x32xf32, #tpu.memory_space<vmem>>, vector<1x32xf32>
      %157 = vector.broadcast %156 : vector<1x32xf32> to vector<8x32xf32>
      %158 = arith.addf %155, %157 : vector<8x32xf32>
      %c0_74 = arith.constant 0 : index
      %c0_75 = arith.constant 0 : index
      %159 = vector.load %arg4[%c0_74, %c0_75] : memref<8x32xf32, #tpu.memory_space<vmem>>, vector<8x32xf32>
      %c0_76 = arith.constant 0 : index
      %c0_77 = arith.constant 0 : index
      %160 = vector.load %arg23[%c0_76, %c0_77] : memref<16x32xf32, #tpu.memory_space<vmem>>, vector<8x32xf32>
      tpu.vector_store %arg23[%c0_76, %c0_77], %159 {strides = array<i32>} : memref<16x32xf32, #tpu.memory_space<vmem>>, vector<8x32xf32>,
      %161 = vector.extract_strided_slice %159 {offsets = [1, 0], sizes = [4, 32], strides = [1, 1]} : vector<8x32xf32> to vector<4x32xf32>
      %162 = vector.extract_strided_slice %158 {offsets = [0, 0], sizes = [4, 32], strides = [1, 1]} : vector<8x32xf32> to vector<4x32xf32>
      %163 = arith.addf %161, %162 : vector<4x32xf32>
      %c1 = arith.constant 1 : index
      %c0_78 = arith.constant 0 : index
      %164 = vector.load %arg23[%c1, %c0_78] : memref<16x32xf32, #tpu.memory_space<vmem>>, vector<4x32xf32>
      tpu.vector_store %arg23[%c1, %c0_78], %163 {strides = array<i32>} : memref<16x32xf32, #tpu.memory_space<vmem>>, vector<4x32xf32>,
      %c8 = arith.constant 8 : index
      %c0_79 = arith.constant 0 : index
      %165 = vector.load %arg23[%c8, %c0_79] : memref<16x32xf32, #tpu.memory_space<vmem>>, vector<8x32xf32>
      tpu.vector_store %arg23[%c8, %c0_79], %159 {strides = array<i32>} : memref<16x32xf32, #tpu.memory_space<vmem>>, vector<8x32xf32>,
      %166 = vector.extract_strided_slice %159 {offsets = [1, 0], sizes = [4, 32], strides = [1, 1]} : vector<8x32xf32> to vector<4x32xf32>
      %167 = vector.extract_strided_slice %158 {offsets = [4, 0], sizes = [4, 32], strides = [1, 1]} : vector<8x32xf32> to vector<4x32xf32>
      %168 = arith.addf %166, %167 : vector<4x32xf32>
      %c9 = arith.constant 9 : index
      %c0_80 = arith.constant 0 : index
      %169 = vector.load %arg23[%c9, %c0_80] : memref<16x32xf32, #tpu.memory_space<vmem>>, vector<4x32xf32>
      tpu.vector_store %arg23[%c9, %c0_80], %168 {strides = array<i32>} : memref<16x32xf32, #tpu.memory_space<vmem>>, vector<4x32xf32>,
    } else {
    }
    %c0 = arith.constant 0 : index
    %c0_1 = arith.constant 0 : index
    %3 = vector.load %arg23[%c0, %c0_1] : memref<16x32xf32, #tpu.memory_space<vmem>>, vector<16x32xf32>
    %c0_2 = arith.constant 0 : index
    %c0_3 = arith.constant 0 : index
    %c0_4 = arith.constant 0 : index
    %4 = vector.load %arg6[%c0_2, %c0_3, %c0_4] : memref<1x1x32xf32, #tpu.memory_space<vmem>>, vector<1x1x32xf32>
    %5 = vector.shape_cast %4 : vector<1x1x32xf32> to vector<1x32xf32>
    %c0_5 = arith.constant 0 : index
    %c0_6 = arith.constant 0 : index
    %c0_7 = arith.constant 0 : index
    %6 = vector.load %arg7[%c0_5, %c0_6, %c0_7] : memref<1x1x32xf32, #tpu.memory_space<vmem>>, vector<1x1x32xf32>
    %7 = vector.shape_cast %6 : vector<1x1x32xf32> to vector<1x32xf32>
    %cst = arith.constant dense<0.000000e+00> : vector<16xf32>
    %8 = vector.multi_reduction <add>, %3, %cst [1] : vector<16x32xf32> to vector<16xf32>
    %9 = vector.shape_cast %8 : vector<16xf32> to vector<16x1xf32>
    %cst_8 = arith.constant 3.200000e+01 : f32
    %10 = vector.broadcast %cst_8 : f32 to vector<16x1xf32>
    %11 = arith.divf %9, %10 : vector<16x1xf32>
    %12 = vector.broadcast %11 : vector<16x1xf32> to vector<16x32xf32>
    %13 = arith.subf %3, %12 : vector<16x32xf32>
    %14 = arith.mulf %13, %13 : vector<16x32xf32>
    %cst_9 = arith.constant dense<0.000000e+00> : vector<16xf32>
    %15 = vector.multi_reduction <add>, %14, %cst_9 [1] : vector<16x32xf32> to vector<16xf32>
    %16 = vector.shape_cast %15 : vector<16xf32> to vector<16x1xf32>
    %cst_10 = arith.constant 3.200000e+01 : f32
    %17 = vector.broadcast %cst_10 : f32 to vector<16x1xf32>
    %18 = arith.divf %16, %17 : vector<16x1xf32>
    %cst_11 = arith.constant 9.99999997E-7 : f32
    %19 = vector.broadcast %cst_11 : f32 to vector<16x1xf32>
    %20 = arith.addf %18, %19 : vector<16x1xf32>
    %21 = math.rsqrt %20 : vector<16x1xf32>
    %22 = vector.broadcast %21 : vector<16x1xf32> to vector<16x32xf32>
    %23 = arith.mulf %13, %22 : vector<16x32xf32>
    %24 = vector.broadcast %5 : vector<1x32xf32> to vector<16x32xf32>
    %25 = arith.mulf %23, %24 : vector<16x32xf32>
    %26 = vector.broadcast %7 : vector<1x32xf32> to vector<16x32xf32>
    %27 = arith.addf %25, %26 : vector<16x32xf32>
    %28 = arith.truncf %27 : vector<16x32xf32> to vector<16x32xbf16>
    %c0_12 = arith.constant 0 : index
    %c0_13 = arith.constant 0 : index
    %c0_14 = arith.constant 0 : index
    %29 = vector.load %arg8[%c0_12, %c0_13, %c0_14] : memref<1x32x96xbf16, #tpu.memory_space<vmem>>, vector<1x32x96xbf16>
    %30 = vector.shape_cast %29 : vector<1x32x96xbf16> to vector<32x96xbf16>
    %cst_15 = arith.constant dense<0.000000e+00> : vector<16x96xf32>
    %31 = tpu.matmul %28, %30, %cst_15 {dimension_numbers = #tpu.dot_dimension_numbers<[1], [0], [0], [1], [0, 0, 1, 1], [], []>} : vector<16x32xbf16>, vector<32x96xbf16>, vector<16x96xf32> -> vector<16x96xf32>
    %c0_16 = arith.constant 0 : index
    %c0_17 = arith.constant 0 : index
    %c0_18 = arith.constant 0 : index
    %32 = vector.load %arg9[%c0_16, %c0_17, %c0_18] : memref<1x1x96xf32, #tpu.memory_space<vmem>>, vector<1x1x96xf32>
    %33 = vector.shape_cast %32 : vector<1x1x96xf32> to vector<1x96xf32>
    %34 = vector.broadcast %33 : vector<1x96xf32> to vector<16x96xf32>
    %35 = arith.addf %31, %34 : vector<16x96xf32>
    %36 = vector.extract_strided_slice %35 {offsets = [0, 0], sizes = [16, 8], strides = [1, 1]} : vector<16x96xf32> to vector<16x8xf32>
    %37 = vector.extract_strided_slice %35 {offsets = [0, 8], sizes = [16, 8], strides = [1, 1]} : vector<16x96xf32> to vector<16x8xf32>
    %38 = vector.extract_strided_slice %35 {offsets = [0, 16], sizes = [16, 8], strides = [1, 1]} : vector<16x96xf32> to vector<16x8xf32>
    %39 = vector.extract_strided_slice %35 {offsets = [0, 24], sizes = [16, 8], strides = [1, 1]} : vector<16x96xf32> to vector<16x8xf32>
    %40 = vector.shape_cast %36 : vector<16x8xf32> to vector<1x16x8xf32>
    %41 = vector.shape_cast %37 : vector<16x8xf32> to vector<1x16x8xf32>
    %42 = vector.shape_cast %38 : vector<16x8xf32> to vector<1x16x8xf32>
    %43 = vector.shape_cast %39 : vector<16x8xf32> to vector<1x16x8xf32>
    %44 = tpu.concatenate %40, %41, %42, %43 in 0 : vector<1x16x8xf32>, vector<1x16x8xf32>, vector<1x16x8xf32>, vector<1x16x8xf32> -> vector<4x16x8xf32>
    %45 = arith.truncf %44 : vector<4x16x8xf32> to vector<4x16x8xbf16>
    %46 = vector.extract_strided_slice %35 {offsets = [0, 32], sizes = [16, 8], strides = [1, 1]} : vector<16x96xf32> to vector<16x8xf32>
    %47 = vector.extract_strided_slice %35 {offsets = [0, 40], sizes = [16, 8], strides = [1, 1]} : vector<16x96xf32> to vector<16x8xf32>
    %48 = vector.extract_strided_slice %35 {offsets = [0, 48], sizes = [16, 8], strides = [1, 1]} : vector<16x96xf32> to vector<16x8xf32>
    %49 = vector.extract_strided_slice %35 {offsets = [0, 56], sizes = [16, 8], strides = [1, 1]} : vector<16x96xf32> to vector<16x8xf32>
    %50 = vector.shape_cast %46 : vector<16x8xf32> to vector<1x16x8xf32>
    %51 = vector.shape_cast %47 : vector<16x8xf32> to vector<1x16x8xf32>
    %52 = vector.shape_cast %48 : vector<16x8xf32> to vector<1x16x8xf32>
    %53 = vector.shape_cast %49 : vector<16x8xf32> to vector<1x16x8xf32>
    %54 = tpu.concatenate %50, %51, %52, %53 in 0 : vector<1x16x8xf32>, vector<1x16x8xf32>, vector<1x16x8xf32>, vector<1x16x8xf32> -> vector<4x16x8xf32>
    %55 = arith.truncf %54 : vector<4x16x8xf32> to vector<4x16x8xbf16>
    %56 = vector.extract_strided_slice %35 {offsets = [0, 64], sizes = [16, 8], strides = [1, 1]} : vector<16x96xf32> to vector<16x8xf32>
    %57 = vector.extract_strided_slice %35 {offsets = [0, 72], sizes = [16, 8], strides = [1, 1]} : vector<16x96xf32> to vector<16x8xf32>
    %58 = vector.extract_strided_slice %35 {offsets = [0, 80], sizes = [16, 8], strides = [1, 1]} : vector<16x96xf32> to vector<16x8xf32>
    %59 = vector.extract_strided_slice %35 {offsets = [0, 88], sizes = [16, 8], strides = [1, 1]} : vector<16x96xf32> to vector<16x8xf32>
    %60 = vector.shape_cast %56 : vector<16x8xf32> to vector<1x16x8xf32>
    %61 = vector.shape_cast %57 : vector<16x8xf32> to vector<1x16x8xf32>
    %62 = vector.shape_cast %58 : vector<16x8xf32> to vector<1x16x8xf32>
    %63 = vector.shape_cast %59 : vector<16x8xf32> to vector<1x16x8xf32>
    %64 = tpu.concatenate %60, %61, %62, %63 in 0 : vector<1x16x8xf32>, vector<1x16x8xf32>, vector<1x16x8xf32>, vector<1x16x8xf32> -> vector<4x16x8xf32>
    %65 = arith.truncf %64 : vector<4x16x8xf32> to vector<4x16x8xbf16>
    "tpu.trace_start"() <{level = 10 : i32, message = "hqd,hkd->hqk"}> : () -> ()
    %cst_19 = arith.constant dense<0.000000e+00> : vector<4x16x16xf32>
    %66 = tpu.matmul %45, %55, %cst_19 {dimension_numbers = #tpu.dot_dimension_numbers<[2], [2], [1], [1], [0, 0, 0, 1, 1, 1], [0], [0]>} : vector<4x16x8xbf16>, vector<4x16x8xbf16>, vector<4x16x16xf32> -> vector<4x16x16xf32>
    "tpu.trace_stop"() : () -> ()
    %cst_20 = arith.constant 0.353553385 : f32
    %67 = vector.broadcast %cst_20 : f32 to vector<4x16x16xf32>
    %68 = arith.mulf %66, %67 : vector<4x16x16xf32>
    %c0_21 = arith.constant 0 : index
    %c0_22 = arith.constant 0 : index
    %69 = vector.load %arg5[%c0_21, %c0_22] : memref<16x16xf32, #tpu.memory_space<vmem>>, vector<16x16xf32>
    %70 = vector.shape_cast %69 : vector<16x16xf32> to vector<1x16x16xf32>
    %71 = vector.broadcast %70 : vector<1x16x16xf32> to vector<4x16x16xf32>
    %72 = arith.addf %68, %71 : vector<4x16x16xf32>
    %cst_23 = arith.constant dense<0xFF800000> : vector<4x16xf32>
    %73 = vector.multi_reduction <maximumf>, %72, %cst_23 [2] : vector<4x16x16xf32> to vector<4x16xf32>
    %74 = vector.shape_cast %73 : vector<4x16xf32> to vector<4x16x1xf32>
    %75 = vector.broadcast %74 : vector<4x16x1xf32> to vector<4x16x16xf32>
    %76 = arith.subf %72, %75 : vector<4x16x16xf32>
    %77 = math.exp %76 : vector<4x16x16xf32>
    %cst_24 = arith.constant dense<0.000000e+00> : vector<4x16xf32>
    %78 = vector.multi_reduction <add>, %77, %cst_24 [2] : vector<4x16x16xf32> to vector<4x16xf32>
    %79 = vector.shape_cast %78 : vector<4x16xf32> to vector<4x16x1xf32>
    %80 = tpu.reciprocal %79 {approx = true} : vector<4x16x1xf32> -> vector<4x16x1xf32>
    %81 = vector.broadcast %80 : vector<4x16x1xf32> to vector<4x16x16xf32>
    %82 = arith.mulf %77, %81 : vector<4x16x16xf32>
    %83 = arith.truncf %82 : vector<4x16x16xf32> to vector<4x16x16xbf16>
    "tpu.trace_start"() <{level = 10 : i32, message = "hqk,hkd->hqd"}> : () -> ()
    %cst_25 = arith.constant dense<0.000000e+00> : vector<4x16x8xf32>
    %84 = tpu.matmul %83, %65, %cst_25 {dimension_numbers = #tpu.dot_dimension_numbers<[2], [1], [1], [2], [0, 0, 0, 1, 1, 2], [0], [0]>} : vector<4x16x16xbf16>, vector<4x16x8xbf16>, vector<4x16x8xf32> -> vector<4x16x8xf32>
    "tpu.trace_stop"() : () -> ()
    %85 = arith.truncf %84 : vector<4x16x8xf32> to vector<4x16x8xbf16>
    %c0_26 = arith.constant 0 : index
    %c0_27 = arith.constant 0 : index
    %c0_28 = arith.constant 0 : index
    %c0_29 = arith.constant 0 : index
    %86 = vector.load %arg10[%c0_26, %c0_27, %c0_28, %c0_29] : memref<1x4x8x32xbf16, #tpu.memory_space<vmem>>, vector<1x4x8x32xbf16>
    %87 = vector.shape_cast %86 : vector<1x4x8x32xbf16> to vector<4x8x32xbf16>
    "tpu.trace_start"() <{level = 10 : i32, message = "hqd,hde->hqe"}> : () -> ()
    %cst_30 = arith.constant dense<0.000000e+00> : vector<4x16x32xf32>
    %88 = tpu.matmul %85, %87, %cst_30 {dimension_numbers = #tpu.dot_dimension_numbers<[2], [1], [1], [2], [0, 0, 0, 1, 1, 2], [0], [0]>} : vector<4x16x8xbf16>, vector<4x8x32xbf16>, vector<4x16x32xf32> -> vector<4x16x32xf32>
    "tpu.trace_stop"() : () -> ()
    %cst_31 = arith.constant dense<0.000000e+00> : vector<16x32xf32>
    %89 = vector.multi_reduction <add>, %88, %cst_31 [0] : vector<4x16x32xf32> to vector<16x32xf32>
    %90 = arith.addf %3, %89 : vector<16x32xf32>
    %c0_32 = arith.constant 0 : index
    %c0_33 = arith.constant 0 : index
    %c0_34 = arith.constant 0 : index
    %91 = vector.load %arg11[%c0_32, %c0_33, %c0_34] : memref<1x1x32xf32, #tpu.memory_space<vmem>>, vector<1x1x32xf32>
    %92 = vector.shape_cast %91 : vector<1x1x32xf32> to vector<1x32xf32>
    %93 = vector.broadcast %92 : vector<1x32xf32> to vector<16x32xf32>
    %94 = arith.addf %90, %93 : vector<16x32xf32>
    %c0_35 = arith.constant 0 : index
    %c0_36 = arith.constant 0 : index
    %c0_37 = arith.constant 0 : index
    %95 = vector.load %arg12[%c0_35, %c0_36, %c0_37] : memref<1x1x32xf32, #tpu.memory_space<vmem>>, vector<1x1x32xf32>
    %96 = vector.shape_cast %95 : vector<1x1x32xf32> to vector<1x32xf32>
    %c0_38 = arith.constant 0 : index
    %c0_39 = arith.constant 0 : index
    %c0_40 = arith.constant 0 : index
    %97 = vector.load %arg13[%c0_38, %c0_39, %c0_40] : memref<1x1x32xf32, #tpu.memory_space<vmem>>, vector<1x1x32xf32>
    %98 = vector.shape_cast %97 : vector<1x1x32xf32> to vector<1x32xf32>
    %cst_41 = arith.constant dense<0.000000e+00> : vector<16xf32>
    %99 = vector.multi_reduction <add>, %94, %cst_41 [1] : vector<16x32xf32> to vector<16xf32>
    %100 = vector.shape_cast %99 : vector<16xf32> to vector<16x1xf32>
    %cst_42 = arith.constant 3.200000e+01 : f32
    %101 = vector.broadcast %cst_42 : f32 to vector<16x1xf32>
    %102 = arith.divf %100, %101 : vector<16x1xf32>
    %103 = vector.broadcast %102 : vector<16x1xf32> to vector<16x32xf32>
    %104 = arith.subf %94, %103 : vector<16x32xf32>
    %105 = arith.mulf %104, %104 : vector<16x32xf32>
    %cst_43 = arith.constant dense<0.000000e+00> : vector<16xf32>
    %106 = vector.multi_reduction <add>, %105, %cst_43 [1] : vector<16x32xf32> to vector<16xf32>
    %107 = vector.shape_cast %106 : vector<16xf32> to vector<16x1xf32>
    %cst_44 = arith.constant 3.200000e+01 : f32
    %108 = vector.broadcast %cst_44 : f32 to vector<16x1xf32>
    %109 = arith.divf %107, %108 : vector<16x1xf32>
    %cst_45 = arith.constant 9.99999997E-7 : f32
    %110 = vector.broadcast %cst_45 : f32 to vector<16x1xf32>
    %111 = arith.addf %109, %110 : vector<16x1xf32>
    %112 = math.rsqrt %111 : vector<16x1xf32>
    %113 = vector.broadcast %112 : vector<16x1xf32> to vector<16x32xf32>
    %114 = arith.mulf %104, %113 : vector<16x32xf32>
    %115 = vector.broadcast %96 : vector<1x32xf32> to vector<16x32xf32>
    %116 = arith.mulf %114, %115 : vector<16x32xf32>
    %117 = vector.broadcast %98 : vector<1x32xf32> to vector<16x32xf32>
    %118 = arith.addf %116, %117 : vector<16x32xf32>
    %119 = arith.truncf %118 : vector<16x32xf32> to vector<16x32xbf16>
    %c0_46 = arith.constant 0 : index
    %c0_47 = arith.constant 0 : index
    %c0_48 = arith.constant 0 : index
    %120 = vector.load %arg14[%c0_46, %c0_47, %c0_48] : memref<1x32x128xbf16, #tpu.memory_space<vmem>>, vector<1x32x128xbf16>
    %121 = vector.shape_cast %120 : vector<1x32x128xbf16> to vector<32x128xbf16>
    %cst_49 = arith.constant dense<0.000000e+00> : vector<16x128xf32>
    %122 = tpu.matmul %119, %121, %cst_49 {dimension_numbers = #tpu.dot_dimension_numbers<[1], [0], [0], [1], [0, 0, 1, 1], [], []>} : vector<16x32xbf16>, vector<32x128xbf16>, vector<16x128xf32> -> vector<16x128xf32>
    %c0_50 = arith.constant 0 : index
    %c0_51 = arith.constant 0 : index
    %c0_52 = arith.constant 0 : index
    %123 = vector.load %arg15[%c0_50, %c0_51, %c0_52] : memref<1x1x128xf32, #tpu.memory_space<vmem>>, vector<1x1x128xf32>
    %124 = vector.shape_cast %123 : vector<1x1x128xf32> to vector<1x128xf32>
    %125 = vector.broadcast %124 : vector<1x128xf32> to vector<16x128xf32>
    %126 = arith.addf %122, %125 : vector<16x128xf32>
    %cst_53 = arith.constant 5.000000e-01 : f32
    %127 = vector.broadcast %cst_53 : f32 to vector<16x128xf32>
    %128 = arith.mulf %127, %126 : vector<16x128xf32>
    %cst_54 = arith.constant 4.471500e-02 : f32
    %129 = vector.broadcast %cst_54 : f32 to vector<16x128xf32>
    %130 = arith.mulf %129, %126 : vector<16x128xf32>
    %131 = arith.mulf %130, %126 : vector<16x128xf32>
    %132 = arith.mulf %131, %126 : vector<16x128xf32>
    %133 = arith.addf %126, %132 : vector<16x128xf32>
    %cst_55 = arith.constant 0.797884583 : f32
    %134 = vector.broadcast %cst_55 : f32 to vector<16x128xf32>
    %135 = arith.mulf %134, %133 : vector<16x128xf32>
    %136 = math.tanh %135 : vector<16x128xf32>
    %cst_56 = arith.constant 1.000000e+00 : f32
    %137 = vector.broadcast %cst_56 : f32 to vector<16x128xf32>
    %138 = arith.addf %137, %136 : vector<16x128xf32>
    %139 = arith.mulf %128, %138 : vector<16x128xf32>
    %140 = arith.truncf %139 : vector<16x128xf32> to vector<16x128xbf16>
    %c0_57 = arith.constant 0 : index
    %c0_58 = arith.constant 0 : index
    %c0_59 = arith.constant 0 : index
    %141 = vector.load %arg16[%c0_57, %c0_58, %c0_59] : memref<1x128x32xbf16, #tpu.memory_space<vmem>>, vector<1x128x32xbf16>
    %142 = vector.shape_cast %141 : vector<1x128x32xbf16> to vector<128x32xbf16>
    %cst_60 = arith.constant dense<0.000000e+00> : vector<16x32xf32>
    %143 = tpu.matmul %140, %142, %cst_60 {dimension_numbers = #tpu.dot_dimension_numbers<[1], [0], [0], [1], [0, 0, 1, 1], [], []>} : vector<16x128xbf16>, vector<128x32xbf16>, vector<16x32xf32> -> vector<16x32xf32>
    %c0_61 = arith.constant 0 : index
    %c0_62 = arith.constant 0 : index
    %c0_63 = arith.constant 0 : index
    %144 = vector.load %arg17[%c0_61, %c0_62, %c0_63] : memref<1x1x32xf32, #tpu.memory_space<vmem>>, vector<1x1x32xf32>
    %145 = vector.shape_cast %144 : vector<1x1x32xf32> to vector<1x32xf32>
    %146 = vector.broadcast %145 : vector<1x32xf32> to vector<16x32xf32>
    %147 = arith.addf %143, %146 : vector<16x32xf32>
    %148 = arith.addf %94, %147 : vector<16x32xf32>
    %c0_64 = arith.constant 0 : index
    %c0_65 = arith.constant 0 : index
    %149 = vector.load %arg23[%c0_64, %c0_65] : memref<16x32xf32, #tpu.memory_space<vmem>>, vector<16x32xf32>
    tpu.vector_store %arg23[%c0_64, %c0_65], %148 {strides = array<i32>} : memref<16x32xf32, #tpu.memory_space<vmem>>, vector<16x32xf32>,
    %c1_i32 = arith.constant 1 : i32
    %150 = arith.cmpi eq, %arg0, %c1_i32 : i32
    %151 = arith.extui %150 : i1 to i32
    %c0_i32_66 = arith.constant 0 : i32
    %152 = arith.cmpi ne, %151, %c0_i32_66 : i32
    scf.if %152 {
      %153 = vector.extract_strided_slice %148 {offsets = [0, 0], sizes = [1, 32], strides = [1, 1]} : vector<16x32xf32> to vector<1x32xf32>
      %154 = vector.extract_strided_slice %148 {offsets = [8, 0], sizes = [1, 32], strides = [1, 1]} : vector<16x32xf32> to vector<1x32xf32>
      %155 = tpu.concatenate %153, %154 in 0 : vector<1x32xf32>, vector<1x32xf32> -> vector<2x32xf32>
      %c0_67 = arith.constant 0 : index
      %c0_68 = arith.constant 0 : index
      %156 = vector.load %arg18[%c0_67, %c0_68] : memref<1x32xf32, #tpu.memory_space<vmem>>, vector<1x32xf32>
      %c0_69 = arith.constant 0 : index
      %c0_70 = arith.constant 0 : index
      %157 = vector.load %arg19[%c0_69, %c0_70] : memref<1x32xf32, #tpu.memory_space<vmem>>, vector<1x32xf32>
      %cst_71 = arith.constant dense<0.000000e+00> : vector<2xf32>
      %158 = vector.multi_reduction <add>, %155, %cst_71 [1] : vector<2x32xf32> to vector<2xf32>
      %159 = vector.shape_cast %158 : vector<2xf32> to vector<2x1xf32>
      %cst_72 = arith.constant 3.200000e+01 : f32
      %160 = vector.broadcast %cst_72 : f32 to vector<2x1xf32>
      %161 = arith.divf %159, %160 : vector<2x1xf32>
      %162 = vector.broadcast %161 : vector<2x1xf32> to vector<2x32xf32>
      %163 = arith.subf %155, %162 : vector<2x32xf32>
      %164 = arith.mulf %163, %163 : vector<2x32xf32>
      %cst_73 = arith.constant dense<0.000000e+00> : vector<2xf32>
      %165 = vector.multi_reduction <add>, %164, %cst_73 [1] : vector<2x32xf32> to vector<2xf32>
      %166 = vector.shape_cast %165 : vector<2xf32> to vector<2x1xf32>
      %cst_74 = arith.constant 3.200000e+01 : f32
      %167 = vector.broadcast %cst_74 : f32 to vector<2x1xf32>
      %168 = arith.divf %166, %167 : vector<2x1xf32>
      %cst_75 = arith.constant 9.99999997E-7 : f32
      %169 = vector.broadcast %cst_75 : f32 to vector<2x1xf32>
      %170 = arith.addf %168, %169 : vector<2x1xf32>
      %171 = math.rsqrt %170 : vector<2x1xf32>
      %172 = vector.broadcast %171 : vector<2x1xf32> to vector<2x32xf32>
      %173 = arith.mulf %163, %172 : vector<2x32xf32>
      %174 = vector.broadcast %156 : vector<1x32xf32> to vector<2x32xf32>
      %175 = arith.mulf %173, %174 : vector<2x32xf32>
      %176 = vector.broadcast %157 : vector<1x32xf32> to vector<2x32xf32>
      %177 = arith.addf %175, %176 : vector<2x32xf32>
      %178 = arith.truncf %177 : vector<2x32xf32> to vector<2x32xbf16>
      %c0_76 = arith.constant 0 : index
      %c0_77 = arith.constant 0 : index
      %179 = vector.load %arg20[%c0_76, %c0_77] : memref<32x128xbf16, #tpu.memory_space<vmem>>, vector<32x128xbf16>
      %cst_78 = arith.constant dense<0.000000e+00> : vector<2x128xf32>
      %180 = tpu.matmul %178, %179, %cst_78 {dimension_numbers = #tpu.dot_dimension_numbers<[1], [0], [0], [1], [0, 0, 1, 1], [], []>} : vector<2x32xbf16>, vector<32x128xbf16>, vector<2x128xf32> -> vector<2x128xf32>
      %c0_79 = arith.constant 0 : index
      %c0_80 = arith.constant 0 : index
      %181 = vector.load %arg21[%c0_79, %c0_80] : memref<1x128xf32, #tpu.memory_space<vmem>>, vector<1x128xf32>
      %182 = vector.broadcast %181 : vector<1x128xf32> to vector<2x128xf32>
      %183 = arith.addf %180, %182 : vector<2x128xf32>
      %c0_81 = arith.constant 0 : index
      %c0_82 = arith.constant 0 : index
      %184 = vector.load %arg22[%c0_81, %c0_82] : memref<2x128xf32, #tpu.memory_space<vmem>>, vector<2x128xf32>
      tpu.vector_store %arg22[%c0_81, %c0_82], %183 {strides = array<i32>} : memref<2x128xf32, #tpu.memory_space<vmem>>, vector<2x128xf32>,
    } else {
    }
    return
  }
  func.func @transform_0(%arg0: i32) -> (i32, i32) {
    %c0_i32 = arith.constant 0 : i32
    %c0_i32_0 = arith.constant 0 : i32
    %c0_i32_1 = arith.constant 0 : i32
    return %c0_i32, %c0_i32_0 : i32, i32
  }
  func.func @transform_1(%arg0: i32) -> (i32, i32) {
    %c0_i32 = arith.constant 0 : i32
    %c0_i32_0 = arith.constant 0 : i32
    %c0_i32_1 = arith.constant 0 : i32
    return %c0_i32, %c0_i32_0 : i32, i32
  }
  func.func @transform_2(%arg0: i32) -> (i32, i32) {
    %c0_i32 = arith.constant 0 : i32
    %c0_i32_0 = arith.constant 0 : i32
    %c0_i32_1 = arith.constant 0 : i32
    return %c0_i32, %c0_i32_0 : i32, i32
  }
  func.func @transform_3(%arg0: i32) -> (i32, i32) {
    %c0_i32 = arith.constant 0 : i32
    %c0_i32_0 = arith.constant 0 : i32
    %c0_i32_1 = arith.constant 0 : i32
    return %c0_i32, %c0_i32_0 : i32, i32
  }
  func.func @transform_4(%arg0: i32) -> (i32, i32) {
    %c0_i32 = arith.constant 0 : i32
    %c0_i32_0 = arith.constant 0 : i32
    %c0_i32_1 = arith.constant 0 : i32
    return %c0_i32, %c0_i32_0 : i32, i32
  }
  func.func @transform_5(%arg0: i32) -> (i32, i32, i32) {
    %c0_i32 = arith.constant 0 : i32
    %c0_i32_0 = arith.constant 0 : i32
    %c0_i32_1 = arith.constant 0 : i32
    return %arg0, %c0_i32, %c0_i32_0 : i32, i32, i32
  }
  func.func @transform_6(%arg0: i32) -> (i32, i32, i32) {
    %c0_i32 = arith.constant 0 : i32
    %c0_i32_0 = arith.constant 0 : i32
    %c0_i32_1 = arith.constant 0 : i32
    return %arg0, %c0_i32, %c0_i32_0 : i32, i32, i32
  }
  func.func @transform_7(%arg0: i32) -> (i32, i32, i32) {
    %c0_i32 = arith.constant 0 : i32
    %c0_i32_0 = arith.constant 0 : i32
    %c0_i32_1 = arith.constant 0 : i32
    return %arg0, %c0_i32, %c0_i32_0 : i32, i32, i32
  }
  func.func @transform_8(%arg0: i32) -> (i32, i32, i32) {
    %c0_i32 = arith.constant 0 : i32
    %c0_i32_0 = arith.constant 0 : i32
    %c0_i32_1 = arith.constant 0 : i32
    return %arg0, %c0_i32, %c0_i32_0 : i32, i32, i32
  }
  func.func @transform_9(%arg0: i32) -> (i32, i32, i32, i32) {
    %c0_i32 = arith.constant 0 : i32
    %c0_i32_0 = arith.constant 0 : i32
    %c0_i32_1 = arith.constant 0 : i32
    %c0_i32_2 = arith.constant 0 : i32
    return %arg0, %c0_i32, %c0_i32_0, %c0_i32_1 : i32, i32, i32, i32
  }
  func.func @transform_10(%arg0: i32) -> (i32, i32, i32) {
    %c0_i32 = arith.constant 0 : i32
    %c0_i32_0 = arith.constant 0 : i32
    %c0_i32_1 = arith.constant 0 : i32
    return %arg0, %c0_i32, %c0_i32_0 : i32, i32, i32
  }
  func.func @transform_11(%arg0: i32) -> (i32, i32, i32) {
    %c0_i32 = arith.constant 0 : i32
    %c0_i32_0 = arith.constant 0 : i32
    %c0_i32_1 = arith.constant 0 : i32
    return %arg0, %c0_i32, %c0_i32_0 : i32, i32, i32
  }
  func.func @transform_12(%arg0: i32) -> (i32, i32, i32) {
    %c0_i32 = arith.constant 0 : i32
    %c0_i32_0 = arith.constant 0 : i32
    %c0_i32_1 = arith.constant 0 : i32
    return %arg0, %c0_i32, %c0_i32_0 : i32, i32, i32
  }
  func.func @transform_13(%arg0: i32) -> (i32, i32, i32) {
    %c0_i32 = arith.constant 0 : i32
    %c0_i32_0 = arith.constant 0 : i32
    %c0_i32_1 = arith.constant 0 : i32
    return %arg0, %c0_i32, %c0_i32_0 : i32, i32, i32
  }
  func.func @transform_14(%arg0: i32) -> (i32, i32, i32) {
    %c0_i32 = arith.constant 0 : i32
    %c0_i32_0 = arith.constant 0 : i32
    %c0_i32_1 = arith.constant 0 : i32
    return %arg0, %c0_i32, %c0_i32_0 : i32, i32, i32
  }
  func.func @transform_15(%arg0: i32) -> (i32, i32, i32) {
    %c0_i32 = arith.constant 0 : i32
    %c0_i32_0 = arith.constant 0 : i32
    %c0_i32_1 = arith.constant 0 : i32
    return %arg0, %c0_i32, %c0_i32_0 : i32, i32, i32
  }
  func.func @transform_16(%arg0: i32) -> (i32, i32, i32) {
    %c0_i32 = arith.constant 0 : i32
    %c0_i32_0 = arith.constant 0 : i32
    %c0_i32_1 = arith.constant 0 : i32
    return %arg0, %c0_i32, %c0_i32_0 : i32, i32, i32
  }
  func.func @transform_17(%arg0: i32) -> (i32, i32) {
    %c0_i32 = arith.constant 0 : i32
    %c0_i32_0 = arith.constant 0 : i32
    %c0_i32_1 = arith.constant 0 : i32
    return %c0_i32, %c0_i32_0 : i32, i32
  }
  func.func @transform_18(%arg0: i32) -> (i32, i32) {
    %c0_i32 = arith.constant 0 : i32
    %c0_i32_0 = arith.constant 0 : i32
    %c0_i32_1 = arith.constant 0 : i32
    return %c0_i32, %c0_i32_0 : i32, i32
  }
  func.func @transform_19(%arg0: i32) -> (i32, i32) {
    %c0_i32 = arith.constant 0 : i32
    %c0_i32_0 = arith.constant 0 : i32
    %c0_i32_1 = arith.constant 0 : i32
    return %c0_i32, %c0_i32_0 : i32, i32
  }
  func.func @transform_20(%arg0: i32) -> (i32, i32) {
    %c0_i32 = arith.constant 0 : i32
    %c0_i32_0 = arith.constant 0 : i32
    %c0_i32_1 = arith.constant 0 : i32
    return %c0_i32, %c0_i32_0 : i32, i32
  }
  func.func @transform_21(%arg0: i32) -> (i32, i32) {
    %c0_i32 = arith.constant 0 : i32
    %c0_i32_0 = arith.constant 0 : i32
    %c0_i32_1 = arith.constant 0 : i32
    return %c0_i32, %c0_i32_0 : i32, i32
  }
}

</mosaic_0001>

<llo_original>
// kernel: vit_forward.1
$region0: #{vit_forward.1}
  #allocation0 [shape = 'u32[]', space=smem, size = 0x4, offset = 0x4, fixed_abs, tag = 'smem constant byte address 0x4 - core index']
  #allocation1 [shape = 'u32[144,128]{1,0:T(1,128)}', space=vmem, size = 0x12000, scoped, tag = 'internal scratch']
  #allocation2 [shape = 'f32[16,32]{1,0:T(8,128)}', space=vmem, size = 0x2000, scoped, tag = 'scratch operand']
  %s0 = inlined_call_operand.vmem [shape: bf16[8,768], index: 0, kind: input, shape index: {}]
  %s1 = inlined_call_operand.vmem [shape: bf16[768,32], index: 1, kind: input, shape index: {}]
  %s2 = inlined_call_operand.vmem [shape: f32[1,32], index: 2, kind: input, shape index: {}]
  %s3 = inlined_call_operand.vmem [shape: f32[8,32], index: 3, kind: input, shape index: {}]
  %s4 = inlined_call_operand.vmem [shape: f32[16,16], index: 4, kind: input, shape index: {}]
  %s5 = inlined_call_operand.vmem [shape: f32[2,1,32], index: 5, kind: input, shape index: {}]
  %s6 = inlined_call_operand.vmem [shape: f32[2,1,32], index: 6, kind: input, shape index: {}]
  %s7 = inlined_call_operand.vmem [shape: bf16[2,32,96], index: 7, kind: input, shape index: {}]
  %s8 = inlined_call_operand.vmem [shape: f32[2,1,96], index: 8, kind: input, shape index: {}]
  %s9 = inlined_call_operand.vmem [shape: bf16[2,4,8,32], index: 9, kind: input, shape index: {}]
  %s10 = inlined_call_operand.vmem [shape: f32[2,1,32], index: 10, kind: input, shape index: {}]
  %s11 = inlined_call_operand.vmem [shape: f32[2,1,32], index: 11, kind: input, shape index: {}]
  %s12 = inlined_call_operand.vmem [shape: f32[2,1,32], index: 12, kind: input, shape index: {}]
  %s13 = inlined_call_operand.vmem [shape: bf16[2,32,128], index: 13, kind: input, shape index: {}]
  %s14 = inlined_call_operand.vmem [shape: f32[2,1,128], index: 14, kind: input, shape index: {}]
  %s15 = inlined_call_operand.vmem [shape: bf16[2,128,32], index: 15, kind: input, shape index: {}]
  %s16 = inlined_call_operand.vmem [shape: f32[2,1,32], index: 16, kind: input, shape index: {}]
  %s17 = inlined_call_operand.vmem [shape: f32[1,32], index: 17, kind: input, shape index: {}]
  %s18 = inlined_call_operand.vmem [shape: f32[1,32], index: 18, kind: input, shape index: {}]
  %s19 = inlined_call_operand.vmem [shape: bf16[32,128], index: 19, kind: input, shape index: {}]
  %s20 = inlined_call_operand.vmem [shape: f32[1,128], index: 20, kind: input, shape index: {}]
  %s21 = inlined_call_operand.hbm [shape: f32[2,128], index: 21, kind: output, shape index: {}]
  %s22 = sld [smem:[#allocation0]]
  $region125: #{vit_forward.1} parent=0
    _
  %s24 = ssub.s32 1, %s22
  %s25 = scalar_select 0, %s24, %s22
  $region1: #{vit_forward.1} parent=0
    #allocation3 [shape = 'u8[1024]{0}', space=vmem, size = 0x400, scoped, tag = 'output window, operand 0, single buffered']
    #allocation4 [shape = 's32[2]{0}', space=sflag, size = 0x8, scoped, tag = 'scoped memory for vit_forward.1']
    %26 = vsyncpa [#allocation4], 0
    loop: start=0, step=1, limit=4
    $region2: #{vit_forward.1} parent=1 // loop_pre_header
      _
    $region3: #{vit_forward.1} parent=1 // loop_header
      %s28 = sphi 0, %s32
      %p29 = scmp.ge.s32.totalorder %s28, 4
      %s36 = sphi 0, %s36
      %s38 = sphi 0, %s36
      %s39 = sphi 0, %s38
      %s53 = sphi 0, %s39
      %s57 = sphi 0, %s57
      %s59 = sphi 0, %s57
      %s60 = sphi 0, %s59
      %s74 = sphi 0, %s60
      %s78 = sphi 0, %s78
      %s80 = sphi 0, %s78
      %s81 = sphi 0, %s80
      %s95 = sphi 0, %s81
      %s99 = sphi 0, %s99
      %s101 = sphi 0, %s99
      %s102 = sphi 0, %s101
      %s116 = sphi 0, %s102
      %s120 = sphi 0, %s120
      %s122 = sphi 0, %s120
      %s123 = sphi 0, %s122
      %s137 = sphi 0, %s123
      %s143 = sphi 0, %s145
      %s146 = sphi 0, %s143
      %s147 = sphi 0, %s146
      %s163 = sphi 0, %s147
      %s169 = sphi 0, %s171
      %s172 = sphi 0, %s169
      %s173 = sphi 0, %s172
      %s189 = sphi 0, %s173
      %s195 = sphi 0, %s197
      %s198 = sphi 0, %s195
      %s199 = sphi 0, %s198
      %s215 = sphi 0, %s199
      %s221 = sphi 0, %s223
      %s224 = sphi 0, %s221
      %s225 = sphi 0, %s224
      %s241 = sphi 0, %s225
      %s247 = sphi 0, %s249
      %s250 = sphi 0, %s247
      %s251 = sphi 0, %s250
      %s267 = sphi 0, %s251
      %s273 = sphi 0, %s275
      %s276 = sphi 0, %s273
      %s277 = sphi 0, %s276
      %s293 = sphi 0, %s277
      %s299 = sphi 0, %s301
      %s302 = sphi 0, %s299
      %s303 = sphi 0, %s302
      %s319 = sphi 0, %s303
      %s325 = sphi 0, %s327
      %s328 = sphi 0, %s325
      %s329 = sphi 0, %s328
      %s345 = sphi 0, %s329
      %s351 = sphi 0, %s353
      %s354 = sphi 0, %s351
      %s355 = sphi 0, %s354
      %s371 = sphi 0, %s355
      %s377 = sphi 0, %s379
      %s380 = sphi 0, %s377
      %s381 = sphi 0, %s380
      %s397 = sphi 0, %s381
      %s403 = sphi 0, %s405
      %s406 = sphi 0, %s403
      %s407 = sphi 0, %s406
      %s423 = sphi 0, %s407
      %s429 = sphi 0, %s431
      %s432 = sphi 0, %s429
      %s433 = sphi 0, %s432
      %s449 = sphi 0, %s433
      %s453 = sphi 0, %s453
      %s455 = sphi 0, %s453
      %s456 = sphi 0, %s455
      %s470 = sphi 0, %s456
      %s474 = sphi 0, %s474
      %s476 = sphi 0, %s474
      %s477 = sphi 0, %s476
      %s491 = sphi 0, %s477
      %s495 = sphi 0, %s495
      %s497 = sphi 0, %s495
      %s498 = sphi 0, %s497
      %s512 = sphi 0, %s498
      %s516 = sphi 0, %s516
      %s518 = sphi 0, %s516
      %s519 = sphi 0, %s518
      %s533 = sphi 0, %s519
      %s537 = sphi 0, %s537
      %s539 = sphi 0, %s537
      %s540 = sphi 0, %s539
      %s554 = sphi 0, %s540
    $region4: #{vit_forward.1} parent=1 // loop_header_branch
      %31 = sbr.rel (%p29) target = $region8
    $region5: #{vit_forward.1} parent=1 // loop_body
      %s33 = ssub.s32 %s28, 1
      %s34 = ssub.s32 %s28, 2
      %s35 = sadd.s32 %s28, 1
      %s37 = sadd.s32 %s36, 1
      %p40 = scmp.eq.s32.totalorder %s28, 1
      %p41 = scmp.ne.s32.totalorder %s36, %s38
      %p42 = scmp.eq.s32.totalorder %s28, 0
      %p43 = por %p41, %p42
      %p44 = scmp.ne.s32.totalorder %s36, %s38
      %p45 = scmp.eq.s32.totalorder %s33, 1
      %p46 = por %p44, %p45
      %p47 = scmp.ne.s32.totalorder %s38, %s39
      %p48 = scmp.eq.s32.totalorder %s33, 0
      %p49 = por %p47, %p48
      %p50 = scmp.ne.s32.totalorder %s38, %s39
      %p51 = scmp.eq.s32.totalorder %s34, 1
      %p52 = por %p50, %p51
      %p54 = scmp.ne.s32.totalorder %s39, %s53
      %p55 = scmp.eq.s32.totalorder %s34, 0
      %p56 = por %p54, %p55
      %s58 = sadd.s32 %s57, 1
      %p61 = scmp.eq.s32.totalorder %s28, 1
      %p62 = scmp.ne.s32.totalorder %s57, %s59
      %p63 = scmp.eq.s32.totalorder %s28, 0
      %p64 = por %p62, %p63
      %p65 = scmp.ne.s32.totalorder %s57, %s59
      %p66 = scmp.eq.s32.totalorder %s33, 1
      %p67 = por %p65, %p66
      %p68 = scmp.ne.s32.totalorder %s59, %s60
      %p69 = scmp.eq.s32.totalorder %s33, 0
      %p70 = por %p68, %p69
      %p71 = scmp.ne.s32.totalorder %s59, %s60
      %p72 = scmp.eq.s32.totalorder %s34, 1
      %p73 = por %p71, %p72
      %p75 = scmp.ne.s32.totalorder %s60, %s74
      %p76 = scmp.eq.s32.totalorder %s34, 0
      %p77 = por %p75, %p76
      %s79 = sadd.s32 %s78, 1
      %p82 = scmp.eq.s32.totalorder %s28, 1
      %p83 = scmp.ne.s32.totalorder %s78, %s80
      %p84 = scmp.eq.s32.totalorder %s28, 0
      %p85 = por %p83, %p84
      %p86 = scmp.ne.s32.totalorder %s78, %s80
      %p87 = scmp.eq.s32.totalorder %s33, 1
      %p88 = por %p86, %p87
      %p89 = scmp.ne.s32.totalorder %s80, %s81
      %p90 = scmp.eq.s32.totalorder %s33, 0
      %p91 = por %p89, %p90
      %p92 = scmp.ne.s32.totalorder %s80, %s81
      %p93 = scmp.eq.s32.totalorder %s34, 1
      %p94 = por %p92, %p93
      %p96 = scmp.ne.s32.totalorder %s81, %s95
      %p97 = scmp.eq.s32.totalorder %s34, 0
      %p98 = por %p96, %p97
      %s100 = sadd.s32 %s99, 1
      %p103 = scmp.eq.s32.totalorder %s28, 1
      %p104 = scmp.ne.s32.totalorder %s99, %s101
      %p105 = scmp.eq.s32.totalorder %s28, 0
      %p106 = por %p104, %p105
      %p107 = scmp.ne.s32.totalorder %s99, %s101
      %p108 = scmp.eq.s32.totalorder %s33, 1
      %p109 = por %p107, %p108
      %p110 = scmp.ne.s32.totalorder %s101, %s102
      %p111 = scmp.eq.s32.totalorder %s33, 0
      %p112 = por %p110, %p111
      %p113 = scmp.ne.s32.totalorder %s101, %s102
      %p114 = scmp.eq.s32.totalorder %s34, 1
      %p115 = por %p113, %p114
      %p117 = scmp.ne.s32.totalorder %s102, %s116
      %p118 = scmp.eq.s32.totalorder %s34, 0
      %p119 = por %p117, %p118
      %s121 = sadd.s32 %s120, 1
      %p124 = scmp.eq.s32.totalorder %s28, 1
      %p125 = scmp.ne.s32.totalorder %s120, %s122
      %p126 = scmp.eq.s32.totalorder %s28, 0
      %p127 = por %p125, %p126
      %p128 = scmp.ne.s32.totalorder %s120, %s122
      %p129 = scmp.eq.s32.totalorder %s33, 1
      %p130 = por %p128, %p129
      %p131 = scmp.ne.s32.totalorder %s122, %s123
      %p132 = scmp.eq.s32.totalorder %s33, 0
      %p133 = por %p131, %p132
      %p134 = scmp.ne.s32.totalorder %s122, %s123
      %p135 = scmp.eq.s32.totalorder %s34, 1
      %p136 = por %p134, %p135
      %p138 = scmp.ne.s32.totalorder %s123, %s137
      %p139 = scmp.eq.s32.totalorder %s34, 0
      %p140 = por %p138, %p139
      %s141 = ssub.s32 %s28, %s35
      %p142 = scmp.eq.s32.totalorder %s141, 0
      %s144 = sadd.s32 %s143, 1
      %s145 = scalar_select %p142, %s143, %s144
      %p148 = pneg %p142
      %p149 = scmp.eq.s32.totalorder %s28, 1
      %p150 = por %p148, %p149
      %p151 = scmp.ne.s32.totalorder %s143, %s146
      %p152 = scmp.eq.s32.totalorder %s28, 0
      %p153 = por %p151, %p152
      %p154 = scmp.ne.s32.totalorder %s143, %s146
      %p155 = scmp.eq.s32.totalorder %s33, 1
      %p156 = por %p154, %p155
      %p157 = scmp.ne.s32.totalorder %s146, %s147
      %p158 = scmp.eq.s32.totalorder %s33, 0
      %p159 = por %p157, %p158
      %p160 = scmp.ne.s32.totalorder %s146, %s147
      %p161 = scmp.eq.s32.totalorder %s34, 1
      %p162 = por %p160, %p161
      %p164 = scmp.ne.s32.totalorder %s147, %s163
      %p165 = scmp.eq.s32.totalorder %s34, 0
      %p166 = por %p164, %p165
      %s167 = ssub.s32 %s28, %s35
      %p168 = scmp.eq.s32.totalorder %s167, 0
      %s170 = sadd.s32 %s169, 1
      %s171 = scalar_select %p168, %s169, %s170
      %p174 = pneg %p168
      %p175 = scmp.eq.s32.totalorder %s28, 1
      %p176 = por %p174, %p175
      %p177 = scmp.ne.s32.totalorder %s169, %s172
      %p178 = scmp.eq.s32.totalorder %s28, 0
      %p179 = por %p177, %p178
      %p180 = scmp.ne.s32.totalorder %s169, %s172
      %p181 = scmp.eq.s32.totalorder %s33, 1
      %p182 = por %p180, %p181
      %p183 = scmp.ne.s32.totalorder %s172, %s173
      %p184 = scmp.eq.s32.totalorder %s33, 0
      %p185 = por %p183, %p184
      %p186 = scmp.ne.s32.totalorder %s172, %s173
      %p187 = scmp.eq.s32.totalorder %s34, 1
      %p188 = por %p186, %p187
      %p190 = scmp.ne.s32.totalorder %s173, %s189
      %p191 = scmp.eq.s32.totalorder %s34, 0
      %p192 = por %p190, %p191
      %s193 = ssub.s32 %s28, %s35
      %p194 = scmp.eq.s32.totalorder %s193, 0
      %s196 = sadd.s32 %s195, 1
      %s197 = scalar_select %p194, %s195, %s196
      %p200 = pneg %p194
      %p201 = scmp.eq.s32.totalorder %s28, 1
      %p202 = por %p200, %p201
      %p203 = scmp.ne.s32.totalorder %s195, %s198
      %p204 = scmp.eq.s32.totalorder %s28, 0
      %p205 = por %p203, %p204
      %p206 = scmp.ne.s32.totalorder %s195, %s198
      %p207 = scmp.eq.s32.totalorder %s33, 1
      %p208 = por %p206, %p207
      %p209 = scmp.ne.s32.totalorder %s198, %s199
      %p210 = scmp.eq.s32.totalorder %s33, 0
      %p211 = por %p209, %p210
      %p212 = scmp.ne.s32.totalorder %s198, %s199
      %p213 = scmp.eq.s32.totalorder %s34, 1
      %p214 = por %p212, %p213
      %p216 = scmp.ne.s32.totalorder %s199, %s215
      %p217 = scmp.eq.s32.totalorder %s34, 0
      %p218 = por %p216, %p217
      %s219 = ssub.s32 %s28, %s35
      %p220 = scmp.eq.s32.totalorder %s219, 0
      %s222 = sadd.s32 %s221, 1
      %s223 = scalar_select %p220, %s221, %s222
      %p226 = pneg %p220
      %p227 = scmp.eq.s32.totalorder %s28, 1
      %p228 = por %p226, %p227
      %p229 = scmp.ne.s32.totalorder %s221, %s224
      %p230 = scmp.eq.s32.totalorder %s28, 0
      %p231 = por %p229, %p230
      %p232 = scmp.ne.s32.totalorder %s221, %s224
      %p233 = scmp.eq.s32.totalorder %s33, 1
      %p234 = por %p232, %p233
      %p235 = scmp.ne.s32.totalorder %s224, %s225
      %p236 = scmp.eq.s32.totalorder %s33, 0
      %p237 = por %p235, %p236
      %p238 = scmp.ne.s32.totalorder %s224, %s225
      %p239 = scmp.eq.s32.totalorder %s34, 1
      %p240 = por %p238, %p239
      %p242 = scmp.ne.s32.totalorder %s225, %s241
      %p243 = scmp.eq.s32.totalorder %s34, 0
      %p244 = por %p242, %p243
      %s245 = ssub.s32 %s28, %s35
      %p246 = scmp.eq.s32.totalorder %s245, 0
      %s248 = sadd.s32 %s247, 1
      %s249 = scalar_select %p246, %s247, %s248
      %p252 = pneg %p246
      %p253 = scmp.eq.s32.totalorder %s28, 1
      %p254 = por %p252, %p253
      %p255 = scmp.ne.s32.totalorder %s247, %s250
      %p256 = scmp.eq.s32.totalorder %s28, 0
      %p257 = por %p255, %p256
      %p258 = scmp.ne.s32.totalorder %s247, %s250
      %p259 = scmp.eq.s32.totalorder %s33, 1
      %p260 = por %p258, %p259
      %p261 = scmp.ne.s32.totalorder %s250, %s251
      %p262 = scmp.eq.s32.totalorder %s33, 0
      %p263 = por %p261, %p262
      %p264 = scmp.ne.s32.totalorder %s250, %s251
      %p265 = scmp.eq.s32.totalorder %s34, 1
      %p266 = por %p264, %p265
      %p268 = scmp.ne.s32.totalorder %s251, %s267
      %p269 = scmp.eq.s32.totalorder %s34, 0
      %p270 = por %p268, %p269
      %s271 = ssub.s32 %s28, %s35
      %p272 = scmp.eq.s32.totalorder %s271, 0
      %s274 = sadd.s32 %s273, 1
      %s275 = scalar_select %p272, %s273, %s274
      %p278 = pneg %p272
      %p279 = scmp.eq.s32.totalorder %s28, 1
      %p280 = por %p278, %p279
      %p281 = scmp.ne.s32.totalorder %s273, %s276
      %p282 = scmp.eq.s32.totalorder %s28, 0
      %p283 = por %p281, %p282
      %p284 = scmp.ne.s32.totalorder %s273, %s276
      %p285 = scmp.eq.s32.totalorder %s33, 1
      %p286 = por %p284, %p285
      %p287 = scmp.ne.s32.totalorder %s276, %s277
      %p288 = scmp.eq.s32.totalorder %s33, 0
      %p289 = por %p287, %p288
      %p290 = scmp.ne.s32.totalorder %s276, %s277
      %p291 = scmp.eq.s32.totalorder %s34, 1
      %p292 = por %p290, %p291
      %p294 = scmp.ne.s32.totalorder %s277, %s293
      %p295 = scmp.eq.s32.totalorder %s34, 0
      %p296 = por %p294, %p295
      %s297 = ssub.s32 %s28, %s35
      %p298 = scmp.eq.s32.totalorder %s297, 0
      %s300 = sadd.s32 %s299, 1
      %s301 = scalar_select %p298, %s299, %s300
      %p304 = pneg %p298
      %p305 = scmp.eq.s32.totalorder %s28, 1
      %p306 = por %p304, %p305
      %p307 = scmp.ne.s32.totalorder %s299, %s302
      %p308 = scmp.eq.s32.totalorder %s28, 0
      %p309 = por %p307, %p308
      %p310 = scmp.ne.s32.totalorder %s299, %s302
      %p311 = scmp.eq.s32.totalorder %s33, 1
      %p312 = por %p310, %p311
      %p313 = scmp.ne.s32.totalorder %s302, %s303
      %p314 = scmp.eq.s32.totalorder %s33, 0
      %p315 = por %p313, %p314
      %p316 = scmp.ne.s32.totalorder %s302, %s303
      %p317 = scmp.eq.s32.totalorder %s34, 1
      %p318 = por %p316, %p317
      %p320 = scmp.ne.s32.totalorder %s303, %s319
      %p321 = scmp.eq.s32.totalorder %s34, 0
      %p322 = por %p320, %p321
      %s323 = ssub.s32 %s28, %s35
      %p324 = scmp.eq.s32.totalorder %s323, 0
      %s326 = sadd.s32 %s325, 1
      %s327 = scalar_select %p324, %s325, %s326
      %p330 = pneg %p324
      %p331 = scmp.eq.s32.totalorder %s28, 1
      %p332 = por %p330, %p331
      %p333 = scmp.ne.s32.totalorder %s325, %s328
      %p334 = scmp.eq.s32.totalorder %s28, 0
      %p335 = por %p333, %p334
      %p336 = scmp.ne.s32.totalorder %s325, %s328
      %p337 = scmp.eq.s32.totalorder %s33, 1
      %p338 = por %p336, %p337
      %p339 = scmp.ne.s32.totalorder %s328, %s329
      %p340 = scmp.eq.s32.totalorder %s33, 0
      %p341 = por %p339, %p340
      %p342 = scmp.ne.s32.totalorder %s328, %s329
      %p343 = scmp.eq.s32.totalorder %s34, 1
      %p344 = por %p342, %p343
      %p346 = scmp.ne.s32.totalorder %s329, %s345
      %p347 = scmp.eq.s32.totalorder %s34, 0
      %p348 = por %p346, %p347
      %s349 = ssub.s32 %s28, %s35
      %p350 = scmp.eq.s32.totalorder %s349, 0
      %s352 = sadd.s32 %s351, 1
      %s353 = scalar_select %p350, %s351, %s352
      %p356 = pneg %p350
      %p357 = scmp.eq.s32.totalorder %s28, 1
      %p358 = por %p356, %p357
      %p359 = scmp.ne.s32.totalorder %s351, %s354
      %p360 = scmp.eq.s32.totalorder %s28, 0
      %p361 = por %p359, %p360
      %p362 = scmp.ne.s32.totalorder %s351, %s354
      %p363 = scmp.eq.s32.totalorder %s33, 1
      %p364 = por %p362, %p363
      %p365 = scmp.ne.s32.totalorder %s354, %s355
      %p366 = scmp.eq.s32.totalorder %s33, 0
      %p367 = por %p365, %p366
      %p368 = scmp.ne.s32.totalorder %s354, %s355
      %p369 = scmp.eq.s32.totalorder %s34, 1
      %p370 = por %p368, %p369
      %p372 = scmp.ne.s32.totalorder %s355, %s371
      %p373 = scmp.eq.s32.totalorder %s34, 0
      %p374 = por %p372, %p373
      %s375 = ssub.s32 %s28, %s35
      %p376 = scmp.eq.s32.totalorder %s375, 0
      %s378 = sadd.s32 %s377, 1
      %s379 = scalar_select %p376, %s377, %s378
      %p382 = pneg %p376
      %p383 = scmp.eq.s32.totalorder %s28, 1
      %p384 = por %p382, %p383
      %p385 = scmp.ne.s32.totalorder %s377, %s380
      %p386 = scmp.eq.s32.totalorder %s28, 0
      %p387 = por %p385, %p386
      %p388 = scmp.ne.s32.totalorder %s377, %s380
      %p389 = scmp.eq.s32.totalorder %s33, 1
      %p390 = por %p388, %p389
      %p391 = scmp.ne.s32.totalorder %s380, %s381
      %p392 = scmp.eq.s32.totalorder %s33, 0
      %p393 = por %p391, %p392
      %p394 = scmp.ne.s32.totalorder %s380, %s381
      %p395 = scmp.eq.s32.totalorder %s34, 1
      %p396 = por %p394, %p395
      %p398 = scmp.ne.s32.totalorder %s381, %s397
      %p399 = scmp.eq.s32.totalorder %s34, 0
      %p400 = por %p398, %p399
      %s401 = ssub.s32 %s28, %s35
      %p402 = scmp.eq.s32.totalorder %s401, 0
      %s404 = sadd.s32 %s403, 1
      %s405 = scalar_select %p402, %s403, %s404
      %p408 = pneg %p402
      %p409 = scmp.eq.s32.totalorder %s28, 1
      %p410 = por %p408, %p409
      %p411 = scmp.ne.s32.totalorder %s403, %s406
      %p412 = scmp.eq.s32.totalorder %s28, 0
      %p413 = por %p411, %p412
      %p414 = scmp.ne.s32.totalorder %s403, %s406
      %p415 = scmp.eq.s32.totalorder %s33, 1
      %p416 = por %p414, %p415
      %p417 = scmp.ne.s32.totalorder %s406, %s407
      %p418 = scmp.eq.s32.totalorder %s33, 0
      %p419 = por %p417, %p418
      %p420 = scmp.ne.s32.totalorder %s406, %s407
      %p421 = scmp.eq.s32.totalorder %s34, 1
      %p422 = por %p420, %p421
      %p424 = scmp.ne.s32.totalorder %s407, %s423
      %p425 = scmp.eq.s32.totalorder %s34, 0
      %p426 = por %p424, %p425
      %s427 = ssub.s32 %s28, %s35
      %p428 = scmp.eq.s32.totalorder %s427, 0
      %s430 = sadd.s32 %s429, 1
      %s431 = scalar_select %p428, %s429, %s430
      %p434 = pneg %p428
      %p435 = scmp.eq.s32.totalorder %s28, 1
      %p436 = por %p434, %p435
      %p437 = scmp.ne.s32.totalorder %s429, %s432
      %p438 = scmp.eq.s32.totalorder %s28, 0
      %p439 = por %p437, %p438
      %p440 = scmp.ne.s32.totalorder %s429, %s432
      %p441 = scmp.eq.s32.totalorder %s33, 1
      %p442 = por %p440, %p441
      %p443 = scmp.ne.s32.totalorder %s432, %s433
      %p444 = scmp.eq.s32.totalorder %s33, 0
      %p445 = por %p443, %p444
      %p446 = scmp.ne.s32.totalorder %s432, %s433
      %p447 = scmp.eq.s32.totalorder %s34, 1
      %p448 = por %p446, %p447
      %p450 = scmp.ne.s32.totalorder %s433, %s449
      %p451 = scmp.eq.s32.totalorder %s34, 0
      %p452 = por %p450, %p451
      %s454 = sadd.s32 %s453, 1
      %p457 = scmp.eq.s32.totalorder %s28, 1
      %p458 = scmp.ne.s32.totalorder %s453, %s455
      %p459 = scmp.eq.s32.totalorder %s28, 0
      %p460 = por %p458, %p459
      %p461 = scmp.ne.s32.totalorder %s453, %s455
      %p462 = scmp.eq.s32.totalorder %s33, 1
      %p463 = por %p461, %p462
      %p464 = scmp.ne.s32.totalorder %s455, %s456
      %p465 = scmp.eq.s32.totalorder %s33, 0
      %p466 = por %p464, %p465
      %p467 = scmp.ne.s32.totalorder %s455, %s456
      %p468 = scmp.eq.s32.totalorder %s34, 1
      %p469 = por %p467, %p468
      %p471 = scmp.ne.s32.totalorder %s456, %s470
      %p472 = scmp.eq.s32.totalorder %s34, 0
      %p473 = por %p471, %p472
      %s475 = sadd.s32 %s474, 1
      %p478 = scmp.eq.s32.totalorder %s28, 1
      %p479 = scmp.ne.s32.totalorder %s474, %s476
      %p480 = scmp.eq.s32.totalorder %s28, 0
      %p481 = por %p479, %p480
      %p482 = scmp.ne.s32.totalorder %s474, %s476
      %p483 = scmp.eq.s32.totalorder %s33, 1
      %p484 = por %p482, %p483
      %p485 = scmp.ne.s32.totalorder %s476, %s477
      %p486 = scmp.eq.s32.totalorder %s33, 0
      %p487 = por %p485, %p486
      %p488 = scmp.ne.s32.totalorder %s476, %s477
      %p489 = scmp.eq.s32.totalorder %s34, 1
      %p490 = por %p488, %p489
      %p492 = scmp.ne.s32.totalorder %s477, %s491
      %p493 = scmp.eq.s32.totalorder %s34, 0
      %p494 = por %p492, %p493
      %s496 = sadd.s32 %s495, 1
      %p499 = scmp.eq.s32.totalorder %s28, 1
      %p500 = scmp.ne.s32.totalorder %s495, %s497
      %p501 = scmp.eq.s32.totalorder %s28, 0
      %p502 = por %p500, %p501
      %p503 = scmp.ne.s32.totalorder %s495, %s497
      %p504 = scmp.eq.s32.totalorder %s33, 1
      %p505 = por %p503, %p504
      %p506 = scmp.ne.s32.totalorder %s497, %s498
      %p507 = scmp.eq.s32.totalorder %s33, 0
      %p508 = por %p506, %p507
      %p509 = scmp.ne.s32.totalorder %s497, %s498
      %p510 = scmp.eq.s32.totalorder %s34, 1
      %p511 = por %p509, %p510
      %p513 = scmp.ne.s32.totalorder %s498, %s512
      %p514 = scmp.eq.s32.totalorder %s34, 0
      %p515 = por %p513, %p514
      %s517 = sadd.s32 %s516, 1
      %p520 = scmp.eq.s32.totalorder %s28, 1
      %p521 = scmp.ne.s32.totalorder %s516, %s518
      %p522 = scmp.eq.s32.totalorder %s28, 0
      %p523 = por %p521, %p522
      %p524 = scmp.ne.s32.totalorder %s516, %s518
      %p525 = scmp.eq.s32.totalorder %s33, 1
      %p526 = por %p524, %p525
      %p527 = scmp.ne.s32.totalorder %s518, %s519
      %p528 = scmp.eq.s32.totalorder %s33, 0
      %p529 = por %p527, %p528
      %p530 = scmp.ne.s32.totalorder %s518, %s519
      %p531 = scmp.eq.s32.totalorder %s34, 1
      %p532 = por %p530, %p531
      %p534 = scmp.ne.s32.totalorder %s519, %s533
      %p535 = scmp.eq.s32.totalorder %s34, 0
      %p536 = por %p534, %p535
      %s538 = sadd.s32 %s537, 1
      %p541 = scmp.eq.s32.totalorder %s28, 1
      %p542 = scmp.ne.s32.totalorder %s537, %s539
      %p543 = scmp.eq.s32.totalorder %s28, 0
      %p544 = por %p542, %p543
      %p545 = scmp.ne.s32.totalorder %s537, %s539
      %p546 = scmp.eq.s32.totalorder %s33, 1
      %p547 = por %p545, %p546
      %p548 = scmp.ne.s32.totalorder %s539, %s540
      %p549 = scmp.eq.s32.totalorder %s33, 0
      %p550 = por %p548, %p549
      %p551 = scmp.ne.s32.totalorder %s539, %s540
      %p552 = scmp.eq.s32.totalorder %s34, 1
      %p553 = por %p551, %p552
      %p555 = scmp.ne.s32.totalorder %s540, %s554
      %p556 = scmp.eq.s32.totalorder %s34, 0
      %p557 = por %p555, %p556
      %p558 = scmp.le.s32.totalorder 1, %s28
      %p559 = scmp.lt.s32.totalorder %s28, 3
      %p560 = pnand %p558, %p559
      %p561 = pneg %p560
      // Predicated region
      $region9: #{vit_forward.1} parent=5 // pred_check
        _
      $region10: #{vit_forward.1} parent=5 // pred_check_branch
        %563 = sbr.rel (%p560) target = $region12
      $region11: #{vit_forward.1} parent=5 // pred_region
        %s564 = ssub.s32 %s28, 1
        // Predicated region
        $region13: #{vit_forward.1} parent=11 // pred_check
          %p565 = pneg %p49
        $region14: #{vit_forward.1} parent=11 // pred_check_branch
          %567 = sbr.rel (%p565) target = $region16
        $region15: #{vit_forward.1} parent=11 // pred_region
          _
        $region16: #{vit_forward.1} parent=11 // pred_fallthru
          _
        // Predicated region
        $region17: #{vit_forward.1} parent=11 // pred_check
          %p568 = pneg %p70
        $region18: #{vit_forward.1} parent=11 // pred_check_branch
          %570 = sbr.rel (%p568) target = $region20
        $region19: #{vit_forward.1} parent=11 // pred_region
          _
        $region20: #{vit_forward.1} parent=11 // pred_fallthru
          _
        // Predicated region
        $region21: #{vit_forward.1} parent=11 // pred_check
          %p571 = pneg %p91
        $region22: #{vit_forward.1} parent=11 // pred_check_branch
          %573 = sbr.rel (%p571) target = $region24
        $region23: #{vit_forward.1} parent=11 // pred_region
          _
        $region24: #{vit_forward.1} parent=11 // pred_fallthru
          _
        // Predicated region
        $region25: #{vit_forward.1} parent=11 // pred_check
          %p574 = pneg %p112
        $region26: #{vit_forward.1} parent=11 // pred_check_branch
          %576 = sbr.rel (%p574) target = $region28
        $region27: #{vit_forward.1} parent=11 // pred_region
          _
        $region28: #{vit_forward.1} parent=11 // pred_fallthru
          _
        // Predicated region
        $region29: #{vit_forward.1} parent=11 // pred_check
          %p577 = pneg %p133
        $region30: #{vit_forward.1} parent=11 // pred_check_branch
          %579 = sbr.rel (%p577) target = $region32
        $region31: #{vit_forward.1} parent=11 // pred_region
          _
        $region32: #{vit_forward.1} parent=11 // pred_fallthru
          _
        // Predicated region
        $region33: #{vit_forward.1} parent=11 // pred_check
          %p580 = pneg %p466
        $region34: #{vit_forward.1} parent=11 // pred_check_branch
          %582 = sbr.rel (%p580) target = $region36
        $region35: #{vit_forward.1} parent=11 // pred_region
          _
        $region36: #{vit_forward.1} parent=11 // pred_fallthru
          _
        // Predicated region
        $region37: #{vit_forward.1} parent=11 // pred_check
          %p583 = pneg %p487
        $region38: #{vit_forward.1} parent=11 // pred_check_branch
          %585 = sbr.rel (%p583) target = $region40
        $region39: #{vit_forward.1} parent=11 // pred_region
          _
        $region40: #{vit_forward.1} parent=11 // pred_fallthru
          _
        // Predicated region
        $region41: #{vit_forward.1} parent=11 // pred_check
          %p586 = pneg %p508
        $region42: #{vit_forward.1} parent=11 // pred_check_branch
          %588 = sbr.rel (%p586) target = $region44
        $region43: #{vit_forward.1} parent=11 // pred_region
          _
        $region44: #{vit_forward.1} parent=11 // pred_fallthru
          _
        // Predicated region
        $region45: #{vit_forward.1} parent=11 // pred_check
          %p589 = pneg %p529
        $region46: #{vit_forward.1} parent=11 // pred_check_branch
          %591 = sbr.rel (%p589) target = $region48
        $region47: #{vit_forward.1} parent=11 // pred_region
          _
        $region48: #{vit_forward.1} parent=11 // pred_fallthru
          _
      $region12: #{vit_forward.1} parent=5 // pred_fallthru
        _
      %p592 = scmp.lt.s32.totalorder %s28, 2
      // Predicated region
      $region49: #{vit_forward.1} parent=5 // pred_check
        %p593 = pneg %p592
      $region50: #{vit_forward.1} parent=5 // pred_check_branch
        %595 = sbr.rel (%p593) target = $region52
      $region51: #{vit_forward.1} parent=5 // pred_region
        // Predicated region
        $region53: #{vit_forward.1} parent=51 // pred_check
          %p596 = pneg %p153
        $region54: #{vit_forward.1} parent=51 // pred_check_branch
          %598 = sbr.rel (%p596) target = $region56
        $region55: #{vit_forward.1} parent=51 // pred_region
          %p599 = scmp.lt.s32.totalorder %s28, 1
          %s600 = scalar_select %p599, %s28, 1
          %s601 = scalar_lea.vmem %s5, %s600
        $region56: #{vit_forward.1} parent=51 // pred_fallthru
          _
        // Predicated region
        $region57: #{vit_forward.1} parent=51 // pred_check
          %p602 = pneg %p179
        $region58: #{vit_forward.1} parent=51 // pred_check_branch
          %604 = sbr.rel (%p602) target = $region60
        $region59: #{vit_forward.1} parent=51 // pred_region
          %p605 = scmp.lt.s32.totalorder %s28, 1
          %s606 = scalar_select %p605, %s28, 1
          %s607 = scalar_lea.vmem %s6, %s606
        $region60: #{vit_forward.1} parent=51 // pred_fallthru
          _
        // Predicated region
        $region61: #{vit_forward.1} parent=51 // pred_check
          %p608 = pneg %p205
        $region62: #{vit_forward.1} parent=51 // pred_check_branch
          %610 = sbr.rel (%p608) target = $region64
        $region63: #{vit_forward.1} parent=51 // pred_region
          %p611 = scmp.lt.s32.totalorder %s28, 1
          %s612 = scalar_select %p611, %s28, 1
          %s613 = smul.addr %s612, 4
          %s614 = smul.addr %s613, 4
          %s615 = scalar_lea.vmem %s7, %s614
        $region64: #{vit_forward.1} parent=51 // pred_fallthru
          _
        // Predicated region
        $region65: #{vit_forward.1} parent=51 // pred_check
          %p616 = pneg %p231
        $region66: #{vit_forward.1} parent=51 // pred_check_branch
          %618 = sbr.rel (%p616) target = $region68
        $region67: #{vit_forward.1} parent=51 // pred_region
          %p619 = scmp.lt.s32.totalorder %s28, 1
          %s620 = scalar_select %p619, %s28, 1
          %s621 = scalar_lea.vmem %s8, %s620
        $region68: #{vit_forward.1} parent=51 // pred_fallthru
          _
        // Predicated region
        $region69: #{vit_forward.1} parent=51 // pred_check
          %p622 = pneg %p257
        $region70: #{vit_forward.1} parent=51 // pred_check_branch
          %624 = sbr.rel (%p622) target = $region72
        $region71: #{vit_forward.1} parent=51 // pred_region
          %p625 = scmp.lt.s32.totalorder %s28, 1
          %s626 = scalar_select %p625, %s28, 1
          %s627 = smul.addr %s626, 4
          %s628 = smul.addr %s627, 4
          %s629 = scalar_lea.vmem %s9, %s628
        $region72: #{vit_forward.1} parent=51 // pred_fallthru
          _
        // Predicated region
        $region73: #{vit_forward.1} parent=51 // pred_check
          %p630 = pneg %p283
        $region74: #{vit_forward.1} parent=51 // pred_check_branch
          %632 = sbr.rel (%p630) target = $region76
        $region75: #{vit_forward.1} parent=51 // pred_region
          %p633 = scmp.lt.s32.totalorder %s28, 1
          %s634 = scalar_select %p633, %s28, 1
          %s635 = scalar_lea.vmem %s10, %s634
        $region76: #{vit_forward.1} parent=51 // pred_fallthru
          _
        // Predicated region
        $region77: #{vit_forward.1} parent=51 // pred_check
          %p636 = pneg %p309
        $region78: #{vit_forward.1} parent=51 // pred_check_branch
          %638 = sbr.rel (%p636) target = $region80
        $region79: #{vit_forward.1} parent=51 // pred_region
          %p639 = scmp.lt.s32.totalorder %s28, 1
          %s640 = scalar_select %p639, %s28, 1
          %s641 = scalar_lea.vmem %s11, %s640
        $region80: #{vit_forward.1} parent=51 // pred_fallthru
          _
        // Predicated region
        $region81: #{vit_forward.1} parent=51 // pred_check
          %p642 = pneg %p335
        $region82: #{vit_forward.1} parent=51 // pred_check_branch
          %644 = sbr.rel (%p642) target = $region84
        $region83: #{vit_forward.1} parent=51 // pred_region
          %p645 = scmp.lt.s32.totalorder %s28, 1
          %s646 = scalar_select %p645, %s28, 1
          %s647 = scalar_lea.vmem %s12, %s646
        $region84: #{vit_forward.1} parent=51 // pred_fallthru
          _
        // Predicated region
        $region85: #{vit_forward.1} parent=51 // pred_check
          %p648 = pneg %p361
        $region86: #{vit_forward.1} parent=51 // pred_check_branch
          %650 = sbr.rel (%p648) target = $region88
        $region87: #{vit_forward.1} parent=51 // pred_region
          %p651 = scmp.lt.s32.totalorder %s28, 1
          %s652 = scalar_select %p651, %s28, 1
          %s653 = smul.addr %s652, 4
          %s654 = smul.addr %s653, 4
          %s655 = scalar_lea.vmem %s13, %s654
        $region88: #{vit_forward.1} parent=51 // pred_fallthru
          _
        // Predicated region
        $region89: #{vit_forward.1} parent=51 // pred_check
          %p656 = pneg %p387
        $region90: #{vit_forward.1} parent=51 // pred_check_branch
          %658 = sbr.rel (%p656) target = $region92
        $region91: #{vit_forward.1} parent=51 // pred_region
          %p659 = scmp.lt.s32.totalorder %s28, 1
          %s660 = scalar_select %p659, %s28, 1
          %s661 = scalar_lea.vmem %s14, %s660
        $region92: #{vit_forward.1} parent=51 // pred_fallthru
          _
        // Predicated region
        $region93: #{vit_forward.1} parent=51 // pred_check
          %p662 = pneg %p413
        $region94: #{vit_forward.1} parent=51 // pred_check_branch
          %664 = sbr.rel (%p662) target = $region96
        $region95: #{vit_forward.1} parent=51 // pred_region
          %p665 = scmp.lt.s32.totalorder %s28, 1
          %s666 = scalar_select %p665, %s28, 1
          %s667 = smul.addr %s666, 16
          %s668 = smul.addr %s667, 4
          %s669 = scalar_lea.vmem %s15, %s668
        $region96: #{vit_forward.1} parent=51 // pred_fallthru
          _
        // Predicated region
        $region97: #{vit_forward.1} parent=51 // pred_check
          %p670 = pneg %p439
        $region98: #{vit_forward.1} parent=51 // pred_check_branch
          %672 = sbr.rel (%p670) target = $region100
        $region99: #{vit_forward.1} parent=51 // pred_region
          %p673 = scmp.lt.s32.totalorder %s28, 1
          %s674 = scalar_select %p673, %s28, 1
          %s675 = scalar_lea.vmem %s16, %s674
        $region100: #{vit_forward.1} parent=51 // pred_fallthru
          _
      $region52: #{vit_forward.1} parent=5 // pred_fallthru
        _
      %p676 = scmp.le.s32.totalorder 1, %s28
      %p677 = scmp.lt.s32.totalorder %s28, 3
      %p678 = pnand %p676, %p677
      %p679 = pneg %p678
      // Predicated region
      $region101: #{vit_forward.1} parent=5 // pred_check
        _
      $region102: #{vit_forward.1} parent=5 // pred_check_branch
        %681 = sbr.rel (%p678) target = $region104
      $region103: #{vit_forward.1} parent=5 // pred_region
        %s682 = ssub.s32 %s28, 1
        %p683 = pneg %p49
        %p684 = pneg %p46
        %p685 = pneg %p70
        %p686 = pneg %p67
        %p687 = pneg %p91
        %p688 = pneg %p88
        %p689 = pneg %p112
        %p690 = pneg %p109
        %p691 = pneg %p133
        %p692 = pneg %p130
        %p693 = scmp.lt.s32.totalorder %s33, 1
        %s694 = scalar_select %p693, %s33, 1
        %s695 = scalar_lea.vmem %s5, %s694
        %p696 = pneg %p159
        %p697 = pneg %p156
        %p698 = scmp.lt.s32.totalorder %s33, 1
        %s699 = scalar_select %p698, %s33, 1
        %s700 = scalar_lea.vmem %s6, %s699
        %p701 = pneg %p185
        %p702 = pneg %p182
        %p703 = scmp.lt.s32.totalorder %s33, 1
        %s704 = scalar_select %p703, %s33, 1
        %s705 = smul.addr %s704, 4
        %s706 = smul.addr %s705, 4
        %s707 = scalar_lea.vmem %s7, %s706
        %p708 = pneg %p211
        %p709 = pneg %p208
        %p710 = scmp.lt.s32.totalorder %s33, 1
        %s711 = scalar_select %p710, %s33, 1
        %s712 = scalar_lea.vmem %s8, %s711
        %p713 = pneg %p237
        %p714 = pneg %p234
        %p715 = scmp.lt.s32.totalorder %s33, 1
        %s716 = scalar_select %p715, %s33, 1
        %s717 = smul.addr %s716, 4
        %s718 = smul.addr %s717, 4
        %s719 = scalar_lea.vmem %s9, %s718
        %p720 = pneg %p263
        %p721 = pneg %p260
        %p722 = scmp.lt.s32.totalorder %s33, 1
        %s723 = scalar_select %p722, %s33, 1
        %s724 = scalar_lea.vmem %s10, %s723
        %p725 = pneg %p289
        %p726 = pneg %p286
        %p727 = scmp.lt.s32.totalorder %s33, 1
        %s728 = scalar_select %p727, %s33, 1
        %s729 = scalar_lea.vmem %s11, %s728
        %p730 = pneg %p315
        %p731 = pneg %p312
        %p732 = scmp.lt.s32.totalorder %s33, 1
        %s733 = scalar_select %p732, %s33, 1
        %s734 = scalar_lea.vmem %s12, %s733
        %p735 = pneg %p341
        %p736 = pneg %p338
        %p737 = scmp.lt.s32.totalorder %s33, 1
        %s738 = scalar_select %p737, %s33, 1
        %s739 = smul.addr %s738, 4
        %s740 = smul.addr %s739, 4
        %s741 = scalar_lea.vmem %s13, %s740
        %p742 = pneg %p367
        %p743 = pneg %p364
        %p744 = scmp.lt.s32.totalorder %s33, 1
        %s745 = scalar_select %p744, %s33, 1
        %s746 = scalar_lea.vmem %s14, %s745
        %p747 = pneg %p393
        %p748 = pneg %p390
        %p749 = scmp.lt.s32.totalorder %s33, 1
        %s750 = scalar_select %p749, %s33, 1
        %s751 = smul.addr %s750, 16
        %s752 = smul.addr %s751, 4
        %s753 = scalar_lea.vmem %s15, %s752
        %p754 = pneg %p419
        %p755 = pneg %p416
        %p756 = scmp.lt.s32.totalorder %s33, 1
        %s757 = scalar_select %p756, %s33, 1
        %s758 = scalar_lea.vmem %s16, %s757
        %p759 = pneg %p445
        %p760 = pneg %p442
        %p761 = pneg %p466
        %p762 = pneg %p463
        %p763 = pneg %p487
        %p764 = pneg %p484
        %p765 = pneg %p508
        %p766 = pneg %p505
        %p767 = pneg %p529
        %p768 = pneg %p526
        %p769 = pneg %p550
        %p770 = pneg %p547
        %p771 = scmp.lt.s32.totalorder %s33, 1
        %s772 = scalar_select %p771, %s33, 1
        %s773 = scalar_lea.vmem %s5, %s772
        %p774 = scmp.lt.s32.totalorder %s33, 1
        %s775 = scalar_select %p774, %s33, 1
        %s776 = scalar_lea.vmem %s6, %s775
        %p777 = scmp.lt.s32.totalorder %s33, 1
        %s778 = scalar_select %p777, %s33, 1
        %s779 = smul.addr %s778, 4
        %s780 = smul.addr %s779, 4
        %s781 = scalar_lea.vmem %s7, %s780
        %p782 = scmp.lt.s32.totalorder %s33, 1
        %s783 = scalar_select %p782, %s33, 1
        %s784 = scalar_lea.vmem %s8, %s783
        %p785 = scmp.lt.s32.totalorder %s33, 1
        %s786 = scalar_select %p785, %s33, 1
        %s787 = smul.addr %s786, 4
        %s788 = smul.addr %s787, 4
        %s789 = scalar_lea.vmem %s9, %s788
        %p790 = scmp.lt.s32.totalorder %s33, 1
        %s791 = scalar_select %p790, %s33, 1
        %s792 = scalar_lea.vmem %s10, %s791
        %p793 = scmp.lt.s32.totalorder %s33, 1
        %s794 = scalar_select %p793, %s33, 1
        %s795 = scalar_lea.vmem %s11, %s794
        %p796 = scmp.lt.s32.totalorder %s33, 1
        %s797 = scalar_select %p796, %s33, 1
        %s798 = scalar_lea.vmem %s12, %s797
        %p799 = scmp.lt.s32.totalorder %s33, 1
        %s800 = scalar_select %p799, %s33, 1
        %s801 = smul.addr %s800, 4
        %s802 = smul.addr %s801, 4
        %s803 = scalar_lea.vmem %s13, %s802
        %p804 = scmp.lt.s32.totalorder %s33, 1
        %s805 = scalar_select %p804, %s33, 1
        %s806 = scalar_lea.vmem %s14, %s805
        %p807 = scmp.lt.s32.totalorder %s33, 1
        %s808 = scalar_select %p807, %s33, 1
        %s809 = smul.addr %s808, 16
        %s810 = smul.addr %s809, 4
        %s811 = scalar_lea.vmem %s15, %s810
        %p812 = scmp.lt.s32.totalorder %s33, 1
        %s813 = scalar_select %p812, %s33, 1
        %s814 = scalar_lea.vmem %s16, %s813
        %p816 = scmp.eq.s32.totalorder %s33, 0
        // Predicated region
        $region105: #{vit_forward.1} parent=103 // pred_check
          %p817 = pneg %p816
        $region106: #{vit_forward.1} parent=103 // pred_check_branch
          %819 = sbr.rel (%p817) target = $region108
        $region107: #{vit_forward.1} parent=103 // pred_region
          %v820 = vld [vmem:[%s0] sm:$0xff]
          %v821 = vld [vmem:[%s0 + $0x8] sm:$0xff]
          %v822 = vld [vmem:[%s0 + $0x10] sm:$0xff]
          %v823 = vld [vmem:[%s1] sm:$0xf]
          %v824 = vld [vmem:[%s1 + $0x4] sm:$0xf]
          %v825 = vld [vmem:[%s1 + $0x8] sm:$0xf]
          %v826 = vld [vmem:[%s1 + $0xc] sm:$0xf]
          %v827 = vld [vmem:[%s1 + $0x10] sm:$0xf]
          %v828 = vld [vmem:[%s1 + $0x14] sm:$0xf]
          %v829 = vld [vmem:[%s1 + $0x18] sm:$0xf]
          %v830 = vld [vmem:[%s1 + $0x1c] sm:$0xf]
          %v831 = vld [vmem:[%s1 + $0x20] sm:$0xf]
          %v832 = vld [vmem:[%s1 + $0x24] sm:$0xf]
          %v833 = vld [vmem:[%s1 + $0x28] sm:$0xf]
          %v834 = vld [vmem:[%s1 + $0x2c] sm:$0xf]
          %v835 = vld [vmem:[%s1 + $0x30] sm:$0xf]
          %v836 = vld [vmem:[%s1 + $0x34] sm:$0xf]
          %v837 = vld [vmem:[%s1 + $0x38] sm:$0xf]
          %v838 = vld [vmem:[%s1 + $0x3c] sm:$0xf]
          %v839 = vld [vmem:[%s1 + $0x40] sm:$0xf]
          %v840 = vld [vmem:[%s1 + $0x44] sm:$0xf]
          %v841 = vld [vmem:[%s1 + $0x48] sm:$0xf]
          %v842 = vld [vmem:[%s1 + $0x4c] sm:$0xf]
          %v843 = vld [vmem:[%s1 + $0x50] sm:$0xf]
          %v844 = vld [vmem:[%s1 + $0x54] sm:$0xf]
          %v845 = vld [vmem:[%s1 + $0x58] sm:$0xf]
          %v846 = vld [vmem:[%s1 + $0x5c] sm:$0xf]
          %v847 = vld [vmem:[%s1 + $0x60] sm:$0xf]
          %v848 = vld [vmem:[%s1 + $0x64] sm:$0xf]
          %v849 = vld [vmem:[%s1 + $0x68] sm:$0xf]
          %v850 = vld [vmem:[%s1 + $0x6c] sm:$0xf]
          %v851 = vld [vmem:[%s1 + $0x70] sm:$0xf]
          %v852 = vld [vmem:[%s1 + $0x74] sm:$0xf]
          %v853 = vld [vmem:[%s1 + $0x78] sm:$0xf]
          %v854 = vld [vmem:[%s1 + $0x7c] sm:$0xf]
          %v855 = vld [vmem:[%s1 + $0x80] sm:$0xf]
          %v856 = vld [vmem:[%s1 + $0x84] sm:$0xf]
          %v857 = vld [vmem:[%s1 + $0x88] sm:$0xf]
          %v858 = vld [vmem:[%s1 + $0x8c] sm:$0xf]
          %v859 = vld [vmem:[%s1 + $0x90] sm:$0xf]
          %v860 = vld [vmem:[%s1 + $0x94] sm:$0xf]
          %v861 = vld [vmem:[%s1 + $0x98] sm:$0xf]
          %v862 = vld [vmem:[%s1 + $0x9c] sm:$0xf]
          %v863 = vld [vmem:[%s1 + $0xa0] sm:$0xf]
          %v864 = vld [vmem:[%s1 + $0xa4] sm:$0xf]
          %v865 = vld [vmem:[%s1 + $0xa8] sm:$0xf]
          %v866 = vld [vmem:[%s1 + $0xac] sm:$0xf]
          %v867 = vld [vmem:[%s1 + $0xb0] sm:$0xf]
          %v868 = vld [vmem:[%s1 + $0xb4] sm:$0xf]
          %v869 = vld [vmem:[%s1 + $0xb8] sm:$0xf]
          %v870 = vld [vmem:[%s1 + $0xbc] sm:$0xf]
          %v871 = vld [vmem:[%s1 + $0xc0] sm:$0xf]
          %v872 = vld [vmem:[%s1 + $0xc4] sm:$0xf]
          %v873 = vld [vmem:[%s1 + $0xc8] sm:$0xf]
          %v874 = vld [vmem:[%s1 + $0xcc] sm:$0xf]
          %v875 = vld [vmem:[%s1 + $0xd0] sm:$0xf]
          %v876 = vld [vmem:[%s1 + $0xd4] sm:$0xf]
          %v877 = vld [vmem:[%s1 + $0xd8] sm:$0xf]
          %v878 = vld [vmem:[%s1 + $0xdc] sm:$0xf]
          %v879 = vld [vmem:[%s1 + $0xe0] sm:$0xf]
          %v880 = vld [vmem:[%s1 + $0xe4] sm:$0xf]
          %v881 = vld [vmem:[%s1 + $0xe8] sm:$0xf]
          %v882 = vld [vmem:[%s1 + $0xec] sm:$0xf]
          %v883 = vld [vmem:[%s1 + $0xf0] sm:$0xf]
          %v884 = vld [vmem:[%s1 + $0xf4] sm:$0xf]
          %v885 = vld [vmem:[%s1 + $0xf8] sm:$0xf]
          %v886 = vld [vmem:[%s1 + $0xfc] sm:$0xf]
          %v887 = vld [vmem:[%s1 + $0x100] sm:$0xf]
          %v888 = vld [vmem:[%s1 + $0x104] sm:$0xf]
          %v889 = vld [vmem:[%s1 + $0x108] sm:$0xf]
          %v890 = vld [vmem:[%s1 + $0x10c] sm:$0xf]
          %v891 = vld [vmem:[%s1 + $0x110] sm:$0xf]
          %v892 = vld [vmem:[%s1 + $0x114] sm:$0xf]
          %v893 = vld [vmem:[%s1 + $0x118] sm:$0xf]
          %v894 = vld [vmem:[%s1 + $0x11c] sm:$0xf]
          %v895 = vld [vmem:[%s1 + $0x120] sm:$0xf]
          %v896 = vld [vmem:[%s1 + $0x124] sm:$0xf]
          %v897 = vld [vmem:[%s1 + $0x128] sm:$0xf]
          %v898 = vld [vmem:[%s1 + $0x12c] sm:$0xf]
          %v899 = vld [vmem:[%s1 + $0x130] sm:$0xf]
          %v900 = vld [vmem:[%s1 + $0x134] sm:$0xf]
          %v901 = vld [vmem:[%s1 + $0x138] sm:$0xf]
          %v902 = vld [vmem:[%s1 + $0x13c] sm:$0xf]
          %v903 = vld [vmem:[%s1 + $0x140] sm:$0xf]
          %v904 = vld [vmem:[%s1 + $0x144] sm:$0xf]
          %v905 = vld [vmem:[%s1 + $0x148] sm:$0xf]
          %v906 = vld [vmem:[%s1 + $0x14c] sm:$0xf]
          %v907 = vld [vmem:[%s1 + $0x150] sm:$0xf]
          %v908 = vld [vmem:[%s1 + $0x154] sm:$0xf]
          %v909 = vld [vmem:[%s1 + $0x158] sm:$0xf]
          %v910 = vld [vmem:[%s1 + $0x15c] sm:$0xf]
          %v911 = vld [vmem:[%s1 + $0x160] sm:$0xf]
          %v912 = vld [vmem:[%s1 + $0x164] sm:$0xf]
          %v913 = vld [vmem:[%s1 + $0x168] sm:$0xf]
          %v914 = vld [vmem:[%s1 + $0x16c] sm:$0xf]
          %v915 = vld [vmem:[%s1 + $0x170] sm:$0xf]
          %v916 = vld [vmem:[%s1 + $0x174] sm:$0xf]
          %v917 = vld [vmem:[%s1 + $0x178] sm:$0xf]
          %v918 = vld [vmem:[%s1 + $0x17c] sm:$0xf]
          %v919 = vld [vmem:[%s2] sm:$0x1]
          %v921 = vlaneseq
          %v922 = vshrl.u32 %v921, 7
          %v923 = vsub.s32 0, %v922
          %v924 = vrot.slane %v919, %v923
          %v929 = vunpack.c.l.b16 %v820
          %v930 = vunpack.c.h.b16 %v820
          %v931 = vunpack.c.l.b16 %v821
          %v932 = vunpack.c.h.b16 %v821
          %v933 = vunpack.c.l.b16 %v822
          %v934 = vunpack.c.h.b16 %v822
          %v935 = vpack.c.b16 %v929, %v929
          %v936 = vpack.c.b16 %v930, %v930
          %v937 = vpack.c.b16 %v931, %v931
          %v938 = vpack.c.b16 %v932, %v932
          %v939 = vpack.c.b16 %v933, %v933
          %v940 = vpack.c.b16 %v934, %v934
          %v1043 = vunpack.c.l.b16 %v823
          %v1044 = vunpack.c.l.b16 %v824
          %v1045 = vunpack.c.l.b16 %v825
          %v1046 = vunpack.c.l.b16 %v826
          %v1047 = vunpack.c.l.b16 %v827
          %v1048 = vunpack.c.l.b16 %v828
          %v1049 = vunpack.c.l.b16 %v829
          %v1050 = vunpack.c.l.b16 %v830
          %v1051 = vunpack.c.l.b16 %v831
          %v1052 = vunpack.c.l.b16 %v832
          %v1053 = vunpack.c.l.b16 %v833
          %v1054 = vunpack.c.l.b16 %v834
          %v1055 = vunpack.c.l.b16 %v835
          %v1056 = vunpack.c.l.b16 %v836
          %v1057 = vunpack.c.l.b16 %v837
          %v1058 = vunpack.c.l.b16 %v838
          %v1059 = vunpack.c.l.b16 %v839
          %v1060 = vunpack.c.l.b16 %v840
          %v1061 = vunpack.c.l.b16 %v841
          %v1062 = vunpack.c.l.b16 %v842
          %v1063 = vunpack.c.l.b16 %v843
          %v1064 = vunpack.c.l.b16 %v844
          %v1065 = vunpack.c.l.b16 %v845
          %v1066 = vunpack.c.l.b16 %v846
          %v1067 = vunpack.c.l.b16 %v847
          %v1068 = vunpack.c.l.b16 %v848
          %v1069 = vunpack.c.l.b16 %v849
          %v1070 = vunpack.c.l.b16 %v850
          %v1071 = vunpack.c.l.b16 %v851
          %v1072 = vunpack.c.l.b16 %v852
          %v1073 = vunpack.c.l.b16 %v853
          %v1074 = vunpack.c.l.b16 %v854
          %v1075 = vunpack.c.l.b16 %v855
          %v1076 = vunpack.c.l.b16 %v856
          %v1077 = vunpack.c.l.b16 %v857
          %v1078 = vunpack.c.l.b16 %v858
          %v1079 = vunpack.c.l.b16 %v859
          %v1080 = vunpack.c.l.b16 %v860
          %v1081 = vunpack.c.l.b16 %v861
          %v1082 = vunpack.c.l.b16 %v862
          %v1083 = vunpack.c.l.b16 %v863
          %v1084 = vunpack.c.l.b16 %v864
          %v1085 = vunpack.c.l.b16 %v865
          %v1086 = vunpack.c.l.b16 %v866
          %v1087 = vunpack.c.l.b16 %v867
          %v1088 = vunpack.c.l.b16 %v868
          %v1089 = vunpack.c.l.b16 %v869
          %v1090 = vunpack.c.l.b16 %v870
          %v1091 = vunpack.c.l.b16 %v871
          %v1092 = vunpack.c.l.b16 %v872
          %v1093 = vunpack.c.l.b16 %v873
          %v1094 = vunpack.c.l.b16 %v874
          %v1095 = vunpack.c.l.b16 %v875
          %v1096 = vunpack.c.l.b16 %v876
          %v1097 = vunpack.c.l.b16 %v877
          %v1098 = vunpack.c.l.b16 %v878
          %v1099 = vunpack.c.l.b16 %v879
          %v1100 = vunpack.c.l.b16 %v880
          %v1101 = vunpack.c.l.b16 %v881
          %v1102 = vunpack.c.l.b16 %v882
          %v1103 = vunpack.c.l.b16 %v883
          %v1104 = vunpack.c.l.b16 %v884
          %v1105 = vunpack.c.l.b16 %v885
          %v1106 = vunpack.c.l.b16 %v886
          %v1107 = vunpack.c.l.b16 %v887
          %v1108 = vunpack.c.l.b16 %v888
          %v1109 = vunpack.c.l.b16 %v889
          %v1110 = vunpack.c.l.b16 %v890
          %v1111 = vunpack.c.l.b16 %v891
          %v1112 = vunpack.c.l.b16 %v892
          %v1113 = vunpack.c.l.b16 %v893
          %v1114 = vunpack.c.l.b16 %v894
          %v1115 = vunpack.c.l.b16 %v895
          %v1116 = vunpack.c.l.b16 %v896
          %v1117 = vunpack.c.l.b16 %v897
          %v1118 = vunpack.c.l.b16 %v898
          %v1119 = vunpack.c.l.b16 %v899
          %v1120 = vunpack.c.l.b16 %v900
          %v1121 = vunpack.c.l.b16 %v901
          %v1122 = vunpack.c.l.b16 %v902
          %v1123 = vunpack.c.l.b16 %v903
          %v1124 = vunpack.c.l.b16 %v904
          %v1125 = vunpack.c.l.b16 %v905
          %v1126 = vunpack.c.l.b16 %v906
          %v1127 = vunpack.c.l.b16 %v907
          %v1128 = vunpack.c.l.b16 %v908
          %v1129 = vunpack.c.l.b16 %v909
          %v1130 = vunpack.c.l.b16 %v910
          %v1131 = vunpack.c.l.b16 %v911
          %v1132 = vunpack.c.l.b16 %v912
          %v1133 = vunpack.c.l.b16 %v913
          %v1134 = vunpack.c.l.b16 %v914
          %v1135 = vunpack.c.l.b16 %v915
          %v1136 = vunpack.c.l.b16 %v916
          %v1137 = vunpack.c.l.b16 %v917
          %v1138 = vunpack.c.l.b16 %v918
          %v1139 = vpack.c.b16 %v1044, %v1043
          %v1140 = vpack.c.b16 %v1046, %v1045
          %v1141 = vpack.c.b16 %v1048, %v1047
          %v1142 = vpack.c.b16 %v1050, %v1049
          %v1143 = vpack.c.b16 %v1052, %v1051
          %v1144 = vpack.c.b16 %v1054, %v1053
          %v1145 = vpack.c.b16 %v1056, %v1055
          %v1146 = vpack.c.b16 %v1058, %v1057
          %v1147 = vpack.c.b16 %v1060, %v1059
          %v1148 = vpack.c.b16 %v1062, %v1061
          %v1149 = vpack.c.b16 %v1064, %v1063
          %v1150 = vpack.c.b16 %v1066, %v1065
          %v1151 = vpack.c.b16 %v1068, %v1067
          %v1152 = vpack.c.b16 %v1070, %v1069
          %v1153 = vpack.c.b16 %v1072, %v1071
          %v1154 = vpack.c.b16 %v1074, %v1073
          %v1155 = vpack.c.b16 %v1076, %v1075
          %v1156 = vpack.c.b16 %v1078, %v1077
          %v1157 = vpack.c.b16 %v1080, %v1079
          %v1158 = vpack.c.b16 %v1082, %v1081
          %v1159 = vpack.c.b16 %v1084, %v1083
          %v1160 = vpack.c.b16 %v1086, %v1085
          %v1161 = vpack.c.b16 %v1088, %v1087
          %v1162 = vpack.c.b16 %v1090, %v1089
          %v1163 = vpack.c.b16 %v1092, %v1091
          %v1164 = vpack.c.b16 %v1094, %v1093
          %v1165 = vpack.c.b16 %v1096, %v1095
          %v1166 = vpack.c.b16 %v1098, %v1097
          %v1167 = vpack.c.b16 %v1100, %v1099
          %v1168 = vpack.c.b16 %v1102, %v1101
          %v1169 = vpack.c.b16 %v1104, %v1103
          %v1170 = vpack.c.b16 %v1106, %v1105
          %v1171 = vpack.c.b16 %v1108, %v1107
          %v1172 = vpack.c.b16 %v1110, %v1109
          %v1173 = vpack.c.b16 %v1112, %v1111
          %v1174 = vpack.c.b16 %v1114, %v1113
          %v1175 = vpack.c.b16 %v1116, %v1115
          %v1176 = vpack.c.b16 %v1118, %v1117
          %v1177 = vpack.c.b16 %v1120, %v1119
          %v1178 = vpack.c.b16 %v1122, %v1121
          %v1179 = vpack.c.b16 %v1124, %v1123
          %v1180 = vpack.c.b16 %v1126, %v1125
          %v1181 = vpack.c.b16 %v1128, %v1127
          %v1182 = vpack.c.b16 %v1130, %v1129
          %v1183 = vpack.c.b16 %v1132, %v1131
          %v1184 = vpack.c.b16 %v1134, %v1133
          %v1185 = vpack.c.b16 %v1136, %v1135
          %v1186 = vpack.c.b16 %v1138, %v1137
          %1235 = vmatprep.subr.bf16.mxu0 0
          %1236 = vmatpush1.bf16.msra.mxu0 %v1139
          %1237 = vmatprep.subr.bf16.mxu0 0
          %1238 = vmatpush1.bf16.msra.mxu0 %v1140
          %1239 = vmatprep.subr.bf16.mxu0 0
          %1240 = vmatpush1.bf16.msra.mxu0 %v1141
          %1241 = vmatprep.subr.bf16.mxu0 0
          %1242 = vmatpush1.bf16.msra.mxu0 %v1142
          %1243 = vmatprep.subr.bf16.mxu0 0
          %1244 = vmatpush1.bf16.msra.mxu0 %v1143
          %1245 = vmatprep.subr.bf16.mxu0 0
          %1246 = vmatpush1.bf16.msra.mxu0 %v1144
          %1247 = vmatprep.subr.bf16.mxu0 0
          %1248 = vmatpush1.bf16.msra.mxu0 %v1145
          %1249 = vmatprep.subr.bf16.mxu0 0
          %1250 = vmatpush1.bf16.msra.mxu0 %v1146
          %1251 = vmatprep.subr.bf16.mxu0 0
          %1252 = vmatpush1.bf16.msra.mxu0 %v1147
          %1253 = vmatprep.subr.bf16.mxu0 0
          %1254 = vmatpush1.bf16.msra.mxu0 %v1148
          %1255 = vmatprep.subr.bf16.mxu0 0
          %1256 = vmatpush1.bf16.msra.mxu0 %v1149
          %1257 = vmatprep.subr.bf16.mxu0 0
          %1258 = vmatpush1.bf16.msra.mxu0 %v1150
          %1259 = vmatprep.subr.bf16.mxu0 0
          %1260 = vmatpush1.bf16.msra.mxu0 %v1151
          %1261 = vmatprep.subr.bf16.mxu0 0
          %1262 = vmatpush1.bf16.msra.mxu0 %v1152
          %1263 = vmatprep.subr.bf16.mxu0 0
          %1264 = vmatpush1.bf16.msra.mxu0 %v1153
          %1265 = vmatprep.subr.bf16.mxu0 0
          %1266 = vmatpush1.bf16.msra.mxu0 %v1154
          %1267 = vmatprep.mubr.bf16.mxu0 %v936
          %1268 = vmatmul.mubr.bf16.gmra.mrb[0].mxu0 %v935
          %v1269 = vpop.f32.mrb[0].mxu0
          %v1270 = vadd.f32 %v924, %v1269
          %v1271 = vpop.f32.mrb[0].mxu0
          %v1272 = vpop.f32.mrb[0].mxu0
          %v1273 = vpop.f32.mrb[0].mxu0
          %1274 = vdwg.mxu0
          %1275 = vmatprep.subr.bf16.mxu0 0
          %1276 = vmatpush1.bf16.msra.mxu0 %v1155
          %1277 = vmatprep.subr.bf16.mxu0 0
          %1278 = vmatpush1.bf16.msra.mxu0 %v1156
          %1279 = vmatprep.subr.bf16.mxu0 0
          %1280 = vmatpush1.bf16.msra.mxu0 %v1157
          %1281 = vmatprep.subr.bf16.mxu0 0
          %1282 = vmatpush1.bf16.msra.mxu0 %v1158
          %1283 = vmatprep.subr.bf16.mxu0 0
          %1284 = vmatpush1.bf16.msra.mxu0 %v1159
          %1285 = vmatprep.subr.bf16.mxu0 0
          %1286 = vmatpush1.bf16.msra.mxu0 %v1160
          %1287 = vmatprep.subr.bf16.mxu0 0
          %1288 = vmatpush1.bf16.msra.mxu0 %v1161
          %1289 = vmatprep.subr.bf16.mxu0 0
          %1290 = vmatpush1.bf16.msra.mxu0 %v1162
          %1291 = vmatprep.subr.bf16.mxu0 0
          %1292 = vmatpush1.bf16.msra.mxu0 %v1163
          %1293 = vmatprep.subr.bf16.mxu0 0
          %1294 = vmatpush1.bf16.msra.mxu0 %v1164
          %1295 = vmatprep.subr.bf16.mxu0 0
          %1296 = vmatpush1.bf16.msra.mxu0 %v1165
          %1297 = vmatprep.subr.bf16.mxu0 0
          %1298 = vmatpush1.bf16.msra.mxu0 %v1166
          %1299 = vmatprep.subr.bf16.mxu0 0
          %1300 = vmatpush1.bf16.msra.mxu0 %v1167
          %1301 = vmatprep.subr.bf16.mxu0 0
          %1302 = vmatpush1.bf16.msra.mxu0 %v1168
          %1303 = vmatprep.subr.bf16.mxu0 0
          %1304 = vmatpush1.bf16.msra.mxu0 %v1169
          %1305 = vmatprep.subr.bf16.mxu0 0
          %1306 = vmatpush1.bf16.msra.mxu0 %v1170
          %1307 = vmatprep.mubr.bf16.mxu0 %v938
          %1308 = vmatmul.mubr.bf16.gmra.mrb[0].mxu0 %v937
          %v1309 = vpop.f32.mrb[0].mxu0
          %v1310 = vadd.f32 %v1270, %v1309
          %v1311 = vpop.f32.mrb[0].mxu0
          %v1312 = vpop.f32.mrb[0].mxu0
          %v1313 = vpop.f32.mrb[0].mxu0
          %1314 = vdwg.mxu0
          %1315 = vmatprep.subr.bf16.mxu0 0
          %1316 = vmatpush1.bf16.msra.mxu0 %v1171
          %1317 = vmatprep.subr.bf16.mxu0 0
          %1318 = vmatpush1.bf16.msra.mxu0 %v1172
          %1319 = vmatprep.subr.bf16.mxu0 0
          %1320 = vmatpush1.bf16.msra.mxu0 %v1173
          %1321 = vmatprep.subr.bf16.mxu0 0
          %1322 = vmatpush1.bf16.msra.mxu0 %v1174
          %1323 = vmatprep.subr.bf16.mxu0 0
          %1324 = vmatpush1.bf16.msra.mxu0 %v1175
          %1325 = vmatprep.subr.bf16.mxu0 0
          %1326 = vmatpush1.bf16.msra.mxu0 %v1176
          %1327 = vmatprep.subr.bf16.mxu0 0
          %1328 = vmatpush1.bf16.msra.mxu0 %v1177
          %1329 = vmatprep.subr.bf16.mxu0 0
          %1330 = vmatpush1.bf16.msra.mxu0 %v1178
          %1331 = vmatprep.subr.bf16.mxu0 0
          %1332 = vmatpush1.bf16.msra.mxu0 %v1179
          %1333 = vmatprep.subr.bf16.mxu0 0
          %1334 = vmatpush1.bf16.msra.mxu0 %v1180
          %1335 = vmatprep.subr.bf16.mxu0 0
          %1336 = vmatpush1.bf16.msra.mxu0 %v1181
          %1337 = vmatprep.subr.bf16.mxu0 0
          %1338 = vmatpush1.bf16.msra.mxu0 %v1182
          %1339 = vmatprep.subr.bf16.mxu0 0
          %1340 = vmatpush1.bf16.msra.mxu0 %v1183
          %1341 = vmatprep.subr.bf16.mxu0 0
          %1342 = vmatpush1.bf16.msra.mxu0 %v1184
          %1343 = vmatprep.subr.bf16.mxu0 0
          %1344 = vmatpush1.bf16.msra.mxu0 %v1185
          %1345 = vmatprep.subr.bf16.mxu0 0
          %1346 = vmatpush1.bf16.msra.mxu0 %v1186
          %1347 = vmatprep.mubr.bf16.mxu0 %v940
          %1348 = vmatmul.mubr.bf16.gmra.mrb[0].mxu0 %v939
          %v1349 = vpop.f32.mrb[0].mxu0
          %v1350 = vadd.f32 %v1310, %v1349
          %v1351 = vpop.f32.mrb[0].mxu0
          %v1352 = vpop.f32.mrb[0].mxu0
          %v1353 = vpop.f32.mrb[0].mxu0
          %1354 = vdwg.mxu0
          %v1355 = vld [vmem:[%s3] sm:$0xff]
          %vm1356 = vcmask 261120
          %1357 = vst.msk [vmem:[#allocation2] sm:$0xff] %vm1356, %v1355
          %v1359 = vrot.slane %v1350, 7
          %v1361 = vadd.f32 %v1355, %v1359
          %vm1362 = vcmask 258049
          %1363 = vst.msk [vmem:[#allocation2] sm:$0x1e] %vm1362, %v1361
          %1364 = vst.msk [vmem:[#allocation2 + $0x8] sm:$0xff] %vm1356, %v1355
          %v1365 = vrot.slane %v1350, 3
          %v1367 = vadd.f32 %v1355, %v1365
          %1368 = vst.msk [vmem:[#allocation2 + $0x8] sm:$0x1e] %vm1362, %v1367
        $region108: #{vit_forward.1} parent=103 // pred_fallthru
          _
        %v1369 = vld [vmem:[#allocation2] sm:$0xff]
        %v1370 = vld [vmem:[#allocation2 + $0x8] sm:$0xff]
        %v1371 = vld [vmem:[%s773] sm:$0x1]
        %v1372 = vld [vmem:[%s776] sm:$0x1]
        %vm1373 = vcmask 261120
        %v1374 = vsel %vm1373, %v1369, 0.0
        %1375 = vadd.xlane.f32.xlu0 %v1374
        %v1376 = vpop.xlane.xlu0 %1375
        %v1377 = vsel %vm1373, %v1370, 0.0
        %1378 = vadd.xlane.f32.xlu0 %v1377
        %v1379 = vpop.xlane.xlu0 %1378
        %v1380 = vrcp.pop 32.0
        %v1381 = vmul.f32 %v1376, %v1380
        %v1382 = vmul.f32 %v1379, %v1380
        %v1383 = vsub.f32 %v1369, %v1381
        %v1384 = vsub.f32 %v1370, %v1382
        %v1385 = vmul.f32 %v1383, %v1383
        %v1386 = vmul.f32 %v1384, %v1384
        %v1387 = vsel %vm1373, %v1385, 0.0
        %1388 = vadd.xlane.f32.xlu0 %v1387
        %v1389 = vpop.xlane.xlu0 %1388
        %v1390 = vsel %vm1373, %v1386, 0.0
        %1391 = vadd.xlane.f32.xlu0 %v1390
        %v1392 = vpop.xlane.xlu0 %1391
        %v1393 = vmul.f32 %v1389, %v1380
        %v1394 = vmul.f32 %v1392, %v1380
        %v1395 = vadd.f32 %v1393, 1e-06
        %v1396 = vadd.f32 %v1394, 1e-06
        %v1397 = vrsqrt.pop %v1395
        %v1398 = vrsqrt.pop %v1396
        %v1399 = vmul.f32 %v1383, %v1397
        %v1400 = vmul.f32 %v1384, %v1398
        %v1402 = vlaneseq
        %v1403 = vshrl.u32 %v1402, 7
        %v1404 = vsub.s32 0, %v1403
        %v1405 = vrot.slane %v1371, %v1404
        %v1407 = vmul.f32 %v1399, %v1405
        %v1408 = vmul.f32 %v1400, %v1405
        %v1410 = vlaneseq
        %v1411 = vshrl.u32 %v1410, 7
        %v1412 = vsub.s32 0, %v1411
        %v1413 = vrot.slane %v1372, %v1412
        %v1415 = vadd.f32 %v1407, %v1413
        %v1416 = vadd.f32 %v1408, %v1413
        %v1417 = vpack.c.bf16 %v1416, %v1415
        %v1418 = vld [vmem:[%s781] sm:$0xf]
        %v1419 = vld [vmem:[%s781 + $0x4] sm:$0xf]
        %v1420 = vld [vmem:[%s781 + $0x8] sm:$0xf]
        %v1421 = vld [vmem:[%s781 + $0xc] sm:$0xf]
        %v1422 = vld [vmem:[%s784] sm:$0x1]
        %v1424 = vlaneseq
        %v1425 = vshrl.u32 %v1424, 7
        %v1426 = vsub.s32 0, %v1425
        %v1427 = vrot.slane %v1422, %v1426
        %v1433 = vunpack.c.l.b16 %v1418
        %v1434 = vunpack.c.l.b16 %v1419
        %v1435 = vunpack.c.l.b16 %v1420
        %v1436 = vunpack.c.l.b16 %v1421
        %v1437 = vpack.c.b16 %v1434, %v1433
        %v1438 = vpack.c.b16 %v1436, %v1435
        %v1442 = vsel %vm1373, %v1417, 0
        %1444 = vmatprep.subr.bf16.mxu0 0
        %1445 = vmatpush1.bf16.msra.mxu0 %v1437
        %1446 = vmatprep.subr.bf16.mxu0 0
        %1447 = vmatpush1.bf16.msra.mxu0 %v1438
        %1448 = vmatprep.subr.bf16.mxu0 0
        %1449 = vmatpush1.bf16.msra.mxu0 0
        %1450 = vmatprep.subr.bf16.mxu0 0
        %1451 = vmatpush1.bf16.msra.mxu0 0
        %1452 = vmatprep.subr.bf16.mxu0 0
        %1453 = vmatpush1.bf16.msra.mxu0 0
        %1454 = vmatprep.subr.bf16.mxu0 0
        %1455 = vmatpush1.bf16.msra.mxu0 0
        %1456 = vmatprep.subr.bf16.mxu0 0
        %1457 = vmatpush1.bf16.msra.mxu0 0
        %1458 = vmatprep.subr.bf16.mxu0 0
        %1459 = vmatpush1.bf16.msra.mxu0 0
        %1460 = vmatprep.subr.bf16.mxu0 0
        %1461 = vmatpush1.bf16.msra.mxu0 0
        %1462 = vmatprep.subr.bf16.mxu0 0
        %1463 = vmatpush1.bf16.msra.mxu0 0
        %1464 = vmatprep.subr.bf16.mxu0 0
        %1465 = vmatpush1.bf16.msra.mxu0 0
        %1466 = vmatprep.subr.bf16.mxu0 0
        %1467 = vmatpush1.bf16.msra.mxu0 0
        %1468 = vmatprep.subr.bf16.mxu0 0
        %1469 = vmatpush1.bf16.msra.mxu0 0
        %1470 = vmatprep.subr.bf16.mxu0 0
        %1471 = vmatpush1.bf16.msra.mxu0 0
        %1472 = vmatprep.subr.bf16.mxu0 0
        %1473 = vmatpush1.bf16.msra.mxu0 0
        %1474 = vmatprep.subr.bf16.mxu0 0
        %1475 = vmatpush1.bf16.msra.mxu0 0
        %1476 = vmatprep.mubr.bf16.mxu0 0
        %1477 = vmatmul.mubr.bf16.gmra.mrb[0].mxu0 %v1442
        %v1478 = vpop.f32.mrb[0].mxu0
        %v1479 = vadd.f32 %v1427, %v1478
        %v1480 = vpop.f32.mrb[0].mxu0
        %v1481 = vpop.f32.mrb[0].mxu0
        %v1482 = vadd.f32 %v1427, %v1481
        %v1483 = vpop.f32.mrb[0].mxu0
        %1484 = vdwg.mxu0
        %1487 = vrot.lane.b32.xlu0 %v1479, 120
        %v1488 = vpop.permute.xlu0 %1487
        %1489 = vrot.lane.b32.xlu0 %v1482, 120
        %v1490 = vpop.permute.xlu0 %1489
        %1493 = vrot.lane.b32.xlu0 %v1479, 112
        %v1494 = vpop.permute.xlu0 %1493
        %1495 = vrot.lane.b32.xlu0 %v1482, 112
        %v1496 = vpop.permute.xlu0 %1495
        %1499 = vrot.lane.b32.xlu0 %v1479, 104
        %v1500 = vpop.permute.xlu0 %1499
        %1501 = vrot.lane.b32.xlu0 %v1482, 104
        %v1502 = vpop.permute.xlu0 %1501
        %v1505 = vpack.c.bf16 %v1482, %v1479
        %v1506 = vpack.c.bf16 %v1490, %v1488
        %v1507 = vpack.c.bf16 %v1496, %v1494
        %v1508 = vpack.c.bf16 %v1502, %v1500
        %1510 = vrot.lane.b32.xlu0 %v1505, 96
        %v1511 = vpop.permute.xlu0 %1510
        %vm1512 = vcmask 64512
        %v1514 = vsel %vm1512, %v1505, 0
        %v1517 = vsel %vm1512, %v1511, 0
        %1519 = vmatprep.subr.bf16.mxu0 0
        %1520 = vmatpush1.bf16.xpose.msra.mxu0 %v1517
        %1521 = vmatprep.subr.bf16.mxu0 0
        %1522 = vmatpush1.bf16.xpose.msra.mxu0 0
        %1523 = vmatprep.subr.bf16.mxu0 0
        %1524 = vmatpush1.bf16.xpose.msra.mxu0 0
        %1525 = vmatprep.subr.bf16.mxu0 0
        %1526 = vmatpush1.bf16.xpose.msra.mxu0 0
        %1527 = vmatprep.subr.bf16.mxu0 0
        %1528 = vmatpush1.bf16.xpose.msra.mxu0 0
        %1529 = vmatprep.subr.bf16.mxu0 0
        %1530 = vmatpush1.bf16.xpose.msra.mxu0 0
        %1531 = vmatprep.subr.bf16.mxu0 0
        %1532 = vmatpush1.bf16.xpose.msra.mxu0 0
        %1533 = vmatprep.subr.bf16.mxu0 0
        %1534 = vmatpush1.bf16.xpose.msra.mxu0 0
        %1535 = vmatprep.subr.bf16.mxu0 0
        %1536 = vmatpush1.bf16.xpose.msra.mxu0 0
        %1537 = vmatprep.subr.bf16.mxu0 0
        %1538 = vmatpush1.bf16.xpose.msra.mxu0 0
        %1539 = vmatprep.subr.bf16.mxu0 0
        %1540 = vmatpush1.bf16.xpose.msra.mxu0 0
        %1541 = vmatprep.subr.bf16.mxu0 0
        %1542 = vmatpush1.bf16.xpose.msra.mxu0 0
        %1543 = vmatprep.subr.bf16.mxu0 0
        %1544 = vmatpush1.bf16.xpose.msra.mxu0 0
        %1545 = vmatprep.subr.bf16.mxu0 0
        %1546 = vmatpush1.bf16.xpose.msra.mxu0 0
        %1547 = vmatprep.subr.bf16.mxu0 0
        %1548 = vmatpush1.bf16.xpose.msra.mxu0 0
        %1549 = vmatprep.subr.bf16.mxu0 0
        %1550 = vmatpush1.bf16.xpose.msra.mxu0 0
        %1551 = vmatprep.mubr.bf16.mxu0 0
        %1552 = vmatmul.mubr.bf16.gmra.mrb[0].mxu0 %v1514
        %v1553 = vpop.f32.mrb[0].mxu0
        %v1554 = vadd.f32 0.0, %v1553
        %v1555 = vpop.f32.mrb[0].mxu0
        %v1556 = vpop.f32.mrb[0].mxu0
        %v1557 = vadd.f32 0.0, %v1556
        %v1558 = vpop.f32.mrb[0].mxu0
        %1559 = vdwg.mxu0
        %1561 = vrot.lane.b32.xlu0 %v1506, 96
        %v1562 = vpop.permute.xlu0 %1561
        %v1564 = vsel %vm1512, %v1506, 0
        %v1567 = vsel %vm1512, %v1562, 0
        %1569 = vmatprep.subr.bf16.mxu0 0
        %1570 = vmatpush1.bf16.xpose.msra.mxu0 %v1567
        %1571 = vmatprep.subr.bf16.mxu0 0
        %1572 = vmatpush1.bf16.xpose.msra.mxu0 0
        %1573 = vmatprep.subr.bf16.mxu0 0
        %1574 = vmatpush1.bf16.xpose.msra.mxu0 0
        %1575 = vmatprep.subr.bf16.mxu0 0
        %1576 = vmatpush1.bf16.xpose.msra.mxu0 0
        %1577 = vmatprep.subr.bf16.mxu0 0
        %1578 = vmatpush1.bf16.xpose.msra.mxu0 0
        %1579 = vmatprep.subr.bf16.mxu0 0
        %1580 = vmatpush1.bf16.xpose.msra.mxu0 0
        %1581 = vmatprep.subr.bf16.mxu0 0
        %1582 = vmatpush1.bf16.xpose.msra.mxu0 0
        %1583 = vmatprep.subr.bf16.mxu0 0
        %1584 = vmatpush1.bf16.xpose.msra.mxu0 0
        %1585 = vmatprep.subr.bf16.mxu0 0
        %1586 = vmatpush1.bf16.xpose.msra.mxu0 0
        %1587 = vmatprep.subr.bf16.mxu0 0
        %1588 = vmatpush1.bf16.xpose.msra.mxu0 0
        %1589 = vmatprep.subr.bf16.mxu0 0
        %1590 = vmatpush1.bf16.xpose.msra.mxu0 0
        %1591 = vmatprep.subr.bf16.mxu0 0
        %1592 = vmatpush1.bf16.xpose.msra.mxu0 0
        %1593 = vmatprep.subr.bf16.mxu0 0
        %1594 = vmatpush1.bf16.xpose.msra.mxu0 0
        %1595 = vmatprep.subr.bf16.mxu0 0
        %1596 = vmatpush1.bf16.xpose.msra.mxu0 0
        %1597 = vmatprep.subr.bf16.mxu0 0
        %1598 = vmatpush1.bf16.xpose.msra.mxu0 0
        %1599 = vmatprep.subr.bf16.mxu0 0
        %1600 = vmatpush1.bf16.xpose.msra.mxu0 0
        %1601 = vmatprep.mubr.bf16.mxu0 0
        %1602 = vmatmul.mubr.bf16.gmra.mrb[0].mxu0 %v1564
        %v1603 = vpop.f32.mrb[0].mxu0
        %v1604 = vadd.f32 0.0, %v1603
        %v1605 = vpop.f32.mrb[0].mxu0
        %v1606 = vpop.f32.mrb[0].mxu0
        %v1607 = vadd.f32 0.0, %v1606
        %v1608 = vpop.f32.mrb[0].mxu0
        %1609 = vdwg.mxu0
        %1611 = vrot.lane.b32.xlu0 %v1507, 96
        %v1612 = vpop.permute.xlu0 %1611
        %v1614 = vsel %vm1512, %v1507, 0
        %v1617 = vsel %vm1512, %v1612, 0
        %1619 = vmatprep.subr.bf16.mxu0 0
        %1620 = vmatpush1.bf16.xpose.msra.mxu0 %v1617
        %1621 = vmatprep.subr.bf16.mxu0 0
        %1622 = vmatpush1.bf16.xpose.msra.mxu0 0
        %1623 = vmatprep.subr.bf16.mxu0 0
        %1624 = vmatpush1.bf16.xpose.msra.mxu0 0
        %1625 = vmatprep.subr.bf16.mxu0 0
        %1626 = vmatpush1.bf16.xpose.msra.mxu0 0
        %1627 = vmatprep.subr.bf16.mxu0 0
        %1628 = vmatpush1.bf16.xpose.msra.mxu0 0
        %1629 = vmatprep.subr.bf16.mxu0 0
        %1630 = vmatpush1.bf16.xpose.msra.mxu0 0
        %1631 = vmatprep.subr.bf16.mxu0 0
        %1632 = vmatpush1.bf16.xpose.msra.mxu0 0
        %1633 = vmatprep.subr.bf16.mxu0 0
        %1634 = vmatpush1.bf16.xpose.msra.mxu0 0
        %1635 = vmatprep.subr.bf16.mxu0 0
        %1636 = vmatpush1.bf16.xpose.msra.mxu0 0
        %1637 = vmatprep.subr.bf16.mxu0 0
        %1638 = vmatpush1.bf16.xpose.msra.mxu0 0
        %1639 = vmatprep.subr.bf16.mxu0 0
        %1640 = vmatpush1.bf16.xpose.msra.mxu0 0
        %1641 = vmatprep.subr.bf16.mxu0 0
        %1642 = vmatpush1.bf16.xpose.msra.mxu0 0
        %1643 = vmatprep.subr.bf16.mxu0 0
        %1644 = vmatpush1.bf16.xpose.msra.mxu0 0
        %1645 = vmatprep.subr.bf16.mxu0 0
        %1646 = vmatpush1.bf16.xpose.msra.mxu0 0
        %1647 = vmatprep.subr.bf16.mxu0 0
        %1648 = vmatpush1.bf16.xpose.msra.mxu0 0
        %1649 = vmatprep.subr.bf16.mxu0 0
        %1650 = vmatpush1.bf16.xpose.msra.mxu0 0
        %1651 = vmatprep.mubr.bf16.mxu0 0
        %1652 = vmatmul.mubr.bf16.gmra.mrb[0].mxu0 %v1614
        %v1653 = vpop.f32.mrb[0].mxu0
        %v1654 = vadd.f32 0.0, %v1653
        %v1655 = vpop.f32.mrb[0].mxu0
        %v1656 = vpop.f32.mrb[0].mxu0
        %v1657 = vadd.f32 0.0, %v1656
        %v1658 = vpop.f32.mrb[0].mxu0
        %1659 = vdwg.mxu0
        %1661 = vrot.lane.b32.xlu0 %v1508, 96
        %v1662 = vpop.permute.xlu0 %1661
        %v1664 = vsel %vm1512, %v1508, 0
        %v1667 = vsel %vm1512, %v1662, 0
        %1669 = vmatprep.subr.bf16.mxu0 0
        %1670 = vmatpush1.bf16.xpose.msra.mxu0 %v1667
        %1671 = vmatprep.subr.bf16.mxu0 0
        %1672 = vmatpush1.bf16.xpose.msra.mxu0 0
        %1673 = vmatprep.subr.bf16.mxu0 0
        %1674 = vmatpush1.bf16.xpose.msra.mxu0 0
        %1675 = vmatprep.subr.bf16.mxu0 0
        %1676 = vmatpush1.bf16.xpose.msra.mxu0 0
        %1677 = vmatprep.subr.bf16.mxu0 0
        %1678 = vmatpush1.bf16.xpose.msra.mxu0 0
        %1679 = vmatprep.subr.bf16.mxu0 0
        %1680 = vmatpush1.bf16.xpose.msra.mxu0 0
        %1681 = vmatprep.subr.bf16.mxu0 0
        %1682 = vmatpush1.bf16.xpose.msra.mxu0 0
        %1683 = vmatprep.subr.bf16.mxu0 0
        %1684 = vmatpush1.bf16.xpose.msra.mxu0 0
        %1685 = vmatprep.subr.bf16.mxu0 0
        %1686 = vmatpush1.bf16.xpose.msra.mxu0 0
        %1687 = vmatprep.subr.bf16.mxu0 0
        %1688 = vmatpush1.bf16.xpose.msra.mxu0 0
        %1689 = vmatprep.subr.bf16.mxu0 0
        %1690 = vmatpush1.bf16.xpose.msra.mxu0 0
        %1691 = vmatprep.subr.bf16.mxu0 0
        %1692 = vmatpush1.bf16.xpose.msra.mxu0 0
        %1693 = vmatprep.subr.bf16.mxu0 0
        %1694 = vmatpush1.bf16.xpose.msra.mxu0 0
        %1695 = vmatprep.subr.bf16.mxu0 0
        %1696 = vmatpush1.bf16.xpose.msra.mxu0 0
        %1697 = vmatprep.subr.bf16.mxu0 0
        %1698 = vmatpush1.bf16.xpose.msra.mxu0 0
        %1699 = vmatprep.subr.bf16.mxu0 0
        %1700 = vmatpush1.bf16.xpose.msra.mxu0 0
        %1701 = vmatprep.mubr.bf16.mxu0 0
        %1702 = vmatmul.mubr.bf16.gmra.mrb[0].mxu0 %v1664
        %v1703 = vpop.f32.mrb[0].mxu0
        %v1704 = vadd.f32 0.0, %v1703
        %v1705 = vpop.f32.mrb[0].mxu0
        %v1706 = vpop.f32.mrb[0].mxu0
        %v1707 = vadd.f32 0.0, %v1706
        %v1708 = vpop.f32.mrb[0].mxu0
        %1709 = vdwg.mxu0
        %v1710 = vmul.f32 %v1554, 0.35355338
        %v1711 = vmul.f32 %v1557, 0.35355338
        %v1712 = vmul.f32 %v1604, 0.35355338
        %v1713 = vmul.f32 %v1607, 0.35355338
        %v1714 = vmul.f32 %v1654, 0.35355338
        %v1715 = vmul.f32 %v1657, 0.35355338
        %v1716 = vmul.f32 %v1704, 0.35355338
        %v1717 = vmul.f32 %v1707, 0.35355338
        %v1718 = vld [vmem:[%s4] sm:$0xff]
        %v1719 = vld [vmem:[%s4 + $0x8] sm:$0xff]
        %v1720 = vadd.f32 %v1710, %v1718
        %v1721 = vadd.f32 %v1711, %v1719
        %v1722 = vadd.f32 %v1712, %v1718
        %v1723 = vadd.f32 %v1713, %v1719
        %v1724 = vadd.f32 %v1714, %v1718
        %v1725 = vadd.f32 %v1715, %v1719
        %v1726 = vadd.f32 %v1716, %v1718
        %v1727 = vadd.f32 %v1717, %v1719
        %vm1728 = vcmask 130048
        %v1729 = vsel %vm1728, %v1720, -inf
        %1730 = vmax.xlane.f32.xlu0 %v1729
        %v1731 = vpop.xlane.xlu0 %1730
        %v1732 = vsel %vm1728, %v1721, -inf
        %1733 = vmax.xlane.f32.xlu0 %v1732
        %v1734 = vpop.xlane.xlu0 %1733
        %v1735 = vsel %vm1728, %v1722, -inf
        %1736 = vmax.xlane.f32.xlu0 %v1735
        %v1737 = vpop.xlane.xlu0 %1736
        %v1738 = vsel %vm1728, %v1723, -inf
        %1739 = vmax.xlane.f32.xlu0 %v1738
        %v1740 = vpop.xlane.xlu0 %1739
        %v1741 = vsel %vm1728, %v1724, -inf
        %1742 = vmax.xlane.f32.xlu0 %v1741
        %v1743 = vpop.xlane.xlu0 %1742
        %v1744 = vsel %vm1728, %v1725, -inf
        %1745 = vmax.xlane.f32.xlu0 %v1744
        %v1746 = vpop.xlane.xlu0 %1745
        %v1747 = vsel %vm1728, %v1726, -inf
        %1748 = vmax.xlane.f32.xlu0 %v1747
        %v1749 = vpop.xlane.xlu0 %1748
        %v1750 = vsel %vm1728, %v1727, -inf
        %1751 = vmax.xlane.f32.xlu0 %v1750
        %v1752 = vpop.xlane.xlu0 %1751
        %v1753 = vsub.f32 %v1720, %v1731
        %v1754 = vsub.f32 %v1721, %v1734
        %v1755 = vsub.f32 %v1722, %v1737
        %v1756 = vsub.f32 %v1723, %v1740
        %v1757 = vsub.f32 %v1724, %v1743
        %v1758 = vsub.f32 %v1725, %v1746
        %v1759 = vsub.f32 %v1726, %v1749
        %v1760 = vsub.f32 %v1727, %v1752
        %v1761 = vmul.f32 %v1753, 1.442695
        %v1762 = vpow.pop %v1761
        %v1763 = vmul.f32 %v1754, 1.442695
        %v1764 = vpow.pop %v1763
        %v1765 = vmul.f32 %v1755, 1.442695
        %v1766 = vpow.pop %v1765
        %v1767 = vmul.f32 %v1756, 1.442695
        %v1768 = vpow.pop %v1767
        %v1769 = vmul.f32 %v1757, 1.442695
        %v1770 = vpow.pop %v1769
        %v1771 = vmul.f32 %v1758, 1.442695
        %v1772 = vpow.pop %v1771
        %v1773 = vmul.f32 %v1759, 1.442695
        %v1774 = vpow.pop %v1773
        %v1775 = vmul.f32 %v1760, 1.442695
        %v1776 = vpow.pop %v1775
        %v1777 = vsel %vm1728, %v1762, 0.0
        %1778 = vadd.xlane.f32.xlu0 %v1777
        %v1779 = vpop.xlane.xlu0 %1778
        %v1780 = vsel %vm1728, %v1764, 0.0
        %1781 = vadd.xlane.f32.xlu0 %v1780
        %v1782 = vpop.xlane.xlu0 %1781
        %v1783 = vsel %vm1728, %v1766, 0.0
        %1784 = vadd.xlane.f32.xlu0 %v1783
        %v1785 = vpop.xlane.xlu0 %1784
        %v1786 = vsel %vm1728, %v1768, 0.0
        %1787 = vadd.xlane.f32.xlu0 %v1786
        %v1788 = vpop.xlane.xlu0 %1787
        %v1789 = vsel %vm1728, %v1770, 0.0
        %1790 = vadd.xlane.f32.xlu0 %v1789
        %v1791 = vpop.xlane.xlu0 %1790
        %v1792 = vsel %vm1728, %v1772, 0.0
        %1793 = vadd.xlane.f32.xlu0 %v1792
        %v1794 = vpop.xlane.xlu0 %1793
        %v1795 = vsel %vm1728, %v1774, 0.0
        %1796 = vadd.xlane.f32.xlu0 %v1795
        %v1797 = vpop.xlane.xlu0 %1796
        %v1798 = vsel %vm1728, %v1776, 0.0
        %1799 = vadd.xlane.f32.xlu0 %v1798
        %v1800 = vpop.xlane.xlu0 %1799
        %v1801 = vrcp.pop %v1779
        %v1802 = vrcp.pop %v1782
        %v1803 = vrcp.pop %v1785
        %v1804 = vrcp.pop %v1788
        %v1805 = vrcp.pop %v1791
        %v1806 = vrcp.pop %v1794
        %v1807 = vrcp.pop %v1797
        %v1808 = vrcp.pop %v1800
        %v1809 = vmul.f32 %v1762, %v1801
        %v1810 = vmul.f32 %v1764, %v1802
        %v1811 = vmul.f32 %v1766, %v1803
        %v1812 = vmul.f32 %v1768, %v1804
        %v1813 = vmul.f32 %v1770, %v1805
        %v1814 = vmul.f32 %v1772, %v1806
        %v1815 = vmul.f32 %v1774, %v1807
        %v1816 = vmul.f32 %v1776, %v1808
        %v1817 = vpack.c.bf16 %v1810, %v1809
        %v1818 = vpack.c.bf16 %v1812, %v1811
        %v1819 = vpack.c.bf16 %v1814, %v1813
        %v1820 = vpack.c.bf16 %v1816, %v1815
        %1821 = vrot.lane.b32.xlu0 %v1505, 64
        %v1822 = vpop.permute.xlu0 %1821
        %v1825 = vsel %vm1728, %v1817, 0
        %1827 = vmatprep.subr.bf16.mxu0 0
        %1828 = vmatpush1.bf16.msra.mxu0 %v1822
        %1829 = vmatprep.subr.bf16.mxu0 0
        %1830 = vmatpush1.bf16.msra.mxu0 0
        %1831 = vmatprep.subr.bf16.mxu0 0
        %1832 = vmatpush1.bf16.msra.mxu0 0
        %1833 = vmatprep.subr.bf16.mxu0 0
        %1834 = vmatpush1.bf16.msra.mxu0 0
        %1835 = vmatprep.subr.bf16.mxu0 0
        %1836 = vmatpush1.bf16.msra.mxu0 0
        %1837 = vmatprep.subr.bf16.mxu0 0
        %1838 = vmatpush1.bf16.msra.mxu0 0
        %1839 = vmatprep.subr.bf16.mxu0 0
        %1840 = vmatpush1.bf16.msra.mxu0 0
        %1841 = vmatprep.subr.bf16.mxu0 0
        %1842 = vmatpush1.bf16.msra.mxu0 0
        %1843 = vmatprep.subr.bf16.mxu0 0
        %1844 = vmatpush1.bf16.msra.mxu0 0
        %1845 = vmatprep.subr.bf16.mxu0 0
        %1846 = vmatpush1.bf16.msra.mxu0 0
        %1847 = vmatprep.subr.bf16.mxu0 0
        %1848 = vmatpush1.bf16.msra.mxu0 0
        %1849 = vmatprep.subr.bf16.mxu0 0
        %1850 = vmatpush1.bf16.msra.mxu0 0
        %1851 = vmatprep.subr.bf16.mxu0 0
        %1852 = vmatpush1.bf16.msra.mxu0 0
        %1853 = vmatprep.subr.bf16.mxu0 0
        %1854 = vmatpush1.bf16.msra.mxu0 0
        %1855 = vmatprep.subr.bf16.mxu0 0
        %1856 = vmatpush1.bf16.msra.mxu0 0
        %1857 = vmatprep.subr.bf16.mxu0 0
        %1858 = vmatpush1.bf16.msra.mxu0 0
        %1859 = vmatprep.mubr.bf16.mxu0 0
        %1860 = vmatmul.mubr.bf16.gmra.mrb[0].mxu0 %v1825
        %v1861 = vpop.f32.mrb[0].mxu0
        %v1862 = vadd.f32 0.0, %v1861
        %v1863 = vpop.f32.mrb[0].mxu0
        %v1864 = vpop.f32.mrb[0].mxu0
        %v1865 = vadd.f32 0.0, %v1864
        %v1866 = vpop.f32.mrb[0].mxu0
        %1867 = vdwg.mxu0
        %1868 = vrot.lane.b32.xlu0 %v1506, 64
        %v1869 = vpop.permute.xlu0 %1868
        %v1872 = vsel %vm1728, %v1818, 0
        %1874 = vmatprep.subr.bf16.mxu0 0
        %1875 = vmatpush1.bf16.msra.mxu0 %v1869
        %1876 = vmatprep.subr.bf16.mxu0 0
        %1877 = vmatpush1.bf16.msra.mxu0 0
        %1878 = vmatprep.subr.bf16.mxu0 0
        %1879 = vmatpush1.bf16.msra.mxu0 0
        %1880 = vmatprep.subr.bf16.mxu0 0
        %1881 = vmatpush1.bf16.msra.mxu0 0
        %1882 = vmatprep.subr.bf16.mxu0 0
        %1883 = vmatpush1.bf16.msra.mxu0 0
        %1884 = vmatprep.subr.bf16.mxu0 0
        %1885 = vmatpush1.bf16.msra.mxu0 0
        %1886 = vmatprep.subr.bf16.mxu0 0
        %1887 = vmatpush1.bf16.msra.mxu0 0
        %1888 = vmatprep.subr.bf16.mxu0 0
        %1889 = vmatpush1.bf16.msra.mxu0 0
        %1890 = vmatprep.subr.bf16.mxu0 0
        %1891 = vmatpush1.bf16.msra.mxu0 0
        %1892 = vmatprep.subr.bf16.mxu0 0
        %1893 = vmatpush1.bf16.msra.mxu0 0
        %1894 = vmatprep.subr.bf16.mxu0 0
        %1895 = vmatpush1.bf16.msra.mxu0 0
        %1896 = vmatprep.subr.bf16.mxu0 0
        %1897 = vmatpush1.bf16.msra.mxu0 0
        %1898 = vmatprep.subr.bf16.mxu0 0
        %1899 = vmatpush1.bf16.msra.mxu0 0
        %1900 = vmatprep.subr.bf16.mxu0 0
        %1901 = vmatpush1.bf16.msra.mxu0 0
        %1902 = vmatprep.subr.bf16.mxu0 0
        %1903 = vmatpush1.bf16.msra.mxu0 0
        %1904 = vmatprep.subr.bf16.mxu0 0
        %1905 = vmatpush1.bf16.msra.mxu0 0
        %1906 = vmatprep.mubr.bf16.mxu0 0
        %1907 = vmatmul.mubr.bf16.gmra.mrb[0].mxu0 %v1872
        %v1908 = vpop.f32.mrb[0].mxu0
        %v1909 = vadd.f32 0.0, %v1908
        %v1910 = vpop.f32.mrb[0].mxu0
        %v1911 = vpop.f32.mrb[0].mxu0
        %v1912 = vadd.f32 0.0, %v1911
        %v1913 = vpop.f32.mrb[0].mxu0
        %1914 = vdwg.mxu0
        %1915 = vrot.lane.b32.xlu0 %v1507, 64
        %v1916 = vpop.permute.xlu0 %1915
        %v1919 = vsel %vm1728, %v1819, 0
        %1921 = vmatprep.subr.bf16.mxu0 0
        %1922 = vmatpush1.bf16.msra.mxu0 %v1916
        %1923 = vmatprep.subr.bf16.mxu0 0
        %1924 = vmatpush1.bf16.msra.mxu0 0
        %1925 = vmatprep.subr.bf16.mxu0 0
        %1926 = vmatpush1.bf16.msra.mxu0 0
        %1927 = vmatprep.subr.bf16.mxu0 0
        %1928 = vmatpush1.bf16.msra.mxu0 0
        %1929 = vmatprep.subr.bf16.mxu0 0
        %1930 = vmatpush1.bf16.msra.mxu0 0
        %1931 = vmatprep.subr.bf16.mxu0 0
        %1932 = vmatpush1.bf16.msra.mxu0 0
        %1933 = vmatprep.subr.bf16.mxu0 0
        %1934 = vmatpush1.bf16.msra.mxu0 0
        %1935 = vmatprep.subr.bf16.mxu0 0
        %1936 = vmatpush1.bf16.msra.mxu0 0
        %1937 = vmatprep.subr.bf16.mxu0 0
        %1938 = vmatpush1.bf16.msra.mxu0 0
        %1939 = vmatprep.subr.bf16.mxu0 0
        %1940 = vmatpush1.bf16.msra.mxu0 0
        %1941 = vmatprep.subr.bf16.mxu0 0
        %1942 = vmatpush1.bf16.msra.mxu0 0
        %1943 = vmatprep.subr.bf16.mxu0 0
        %1944 = vmatpush1.bf16.msra.mxu0 0
        %1945 = vmatprep.subr.bf16.mxu0 0
        %1946 = vmatpush1.bf16.msra.mxu0 0
        %1947 = vmatprep.subr.bf16.mxu0 0
        %1948 = vmatpush1.bf16.msra.mxu0 0
        %1949 = vmatprep.subr.bf16.mxu0 0
        %1950 = vmatpush1.bf16.msra.mxu0 0
        %1951 = vmatprep.subr.bf16.mxu0 0
        %1952 = vmatpush1.bf16.msra.mxu0 0
        %1953 = vmatprep.mubr.bf16.mxu0 0
        %1954 = vmatmul.mubr.bf16.gmra.mrb[0].mxu0 %v1919
        %v1955 = vpop.f32.mrb[0].mxu0
        %v1956 = vadd.f32 0.0, %v1955
        %v1957 = vpop.f32.mrb[0].mxu0
        %v1958 = vpop.f32.mrb[0].mxu0
        %v1959 = vadd.f32 0.0, %v1958
        %v1960 = vpop.f32.mrb[0].mxu0
        %1961 = vdwg.mxu0
        %1962 = vrot.lane.b32.xlu0 %v1508, 64
        %v1963 = vpop.permute.xlu0 %1962
        %v1966 = vsel %vm1728, %v1820, 0
        %1968 = vmatprep.subr.bf16.mxu0 0
        %1969 = vmatpush1.bf16.msra.mxu0 %v1963
        %1970 = vmatprep.subr.bf16.mxu0 0
        %1971 = vmatpush1.bf16.msra.mxu0 0
        %1972 = vmatprep.subr.bf16.mxu0 0
        %1973 = vmatpush1.bf16.msra.mxu0 0
        %1974 = vmatprep.subr.bf16.mxu0 0
        %1975 = vmatpush1.bf16.msra.mxu0 0
        %1976 = vmatprep.subr.bf16.mxu0 0
        %1977 = vmatpush1.bf16.msra.mxu0 0
        %1978 = vmatprep.subr.bf16.mxu0 0
        %1979 = vmatpush1.bf16.msra.mxu0 0
        %1980 = vmatprep.subr.bf16.mxu0 0
        %1981 = vmatpush1.bf16.msra.mxu0 0
        %1982 = vmatprep.subr.bf16.mxu0 0
        %1983 = vmatpush1.bf16.msra.mxu0 0
        %1984 = vmatprep.subr.bf16.mxu0 0
        %1985 = vmatpush1.bf16.msra.mxu0 0
        %1986 = vmatprep.subr.bf16.mxu0 0
        %1987 = vmatpush1.bf16.msra.mxu0 0
        %1988 = vmatprep.subr.bf16.mxu0 0
        %1989 = vmatpush1.bf16.msra.mxu0 0
        %1990 = vmatprep.subr.bf16.mxu0 0
        %1991 = vmatpush1.bf16.msra.mxu0 0
        %1992 = vmatprep.subr.bf16.mxu0 0
        %1993 = vmatpush1.bf16.msra.mxu0 0
        %1994 = vmatprep.subr.bf16.mxu0 0
        %1995 = vmatpush1.bf16.msra.mxu0 0
        %1996 = vmatprep.subr.bf16.mxu0 0
        %1997 = vmatpush1.bf16.msra.mxu0 0
        %1998 = vmatprep.subr.bf16.mxu0 0
        %1999 = vmatpush1.bf16.msra.mxu0 0
        %2000 = vmatprep.mubr.bf16.mxu0 0
        %2001 = vmatmul.mubr.bf16.gmra.mrb[0].mxu0 %v1966
        %v2002 = vpop.f32.mrb[0].mxu0
        %v2003 = vadd.f32 0.0, %v2002
        %v2004 = vpop.f32.mrb[0].mxu0
        %v2005 = vpop.f32.mrb[0].mxu0
        %v2006 = vadd.f32 0.0, %v2005
        %v2007 = vpop.f32.mrb[0].mxu0
        %2008 = vdwg.mxu0
        %v2009 = vpack.c.bf16 %v1865, %v1862
        %v2010 = vpack.c.bf16 %v1912, %v1909
        %v2011 = vpack.c.bf16 %v1959, %v1956
        %v2012 = vpack.c.bf16 %v2006, %v2003
        %v2013 = vld [vmem:[%s789] sm:$0xf]
        %v2014 = vld [vmem:[%s789 + $0x4] sm:$0xf]
        %v2015 = vld [vmem:[%s789 + $0x8] sm:$0xf]
        %v2016 = vld [vmem:[%s789 + $0xc] sm:$0xf]
        %v2018 = vsel %vm1512, %v2009, 0
        %vm2020 = vcmask 1043456
        %v2022 = vsel %vm2020, %v2013, 0
        %2024 = vmatprep.subr.bf16.mxu0 0
        %2025 = vmatpush1.bf16.msra.mxu0 %v2022
        %2026 = vmatprep.subr.bf16.mxu0 0
        %2027 = vmatpush1.bf16.msra.mxu0 0
        %2028 = vmatprep.subr.bf16.mxu0 0
        %2029 = vmatpush1.bf16.msra.mxu0 0
        %2030 = vmatprep.subr.bf16.mxu0 0
        %2031 = vmatpush1.bf16.msra.mxu0 0
        %2032 = vmatprep.subr.bf16.mxu0 0
        %2033 = vmatpush1.bf16.msra.mxu0 0
        %2034 = vmatprep.subr.bf16.mxu0 0
        %2035 = vmatpush1.bf16.msra.mxu0 0
        %2036 = vmatprep.subr.bf16.mxu0 0
        %2037 = vmatpush1.bf16.msra.mxu0 0
        %2038 = vmatprep.subr.bf16.mxu0 0
        %2039 = vmatpush1.bf16.msra.mxu0 0
        %2040 = vmatprep.subr.bf16.mxu0 0
        %2041 = vmatpush1.bf16.msra.mxu0 0
        %2042 = vmatprep.subr.bf16.mxu0 0
        %2043 = vmatpush1.bf16.msra.mxu0 0
        %2044 = vmatprep.subr.bf16.mxu0 0
        %2045 = vmatpush1.bf16.msra.mxu0 0
        %2046 = vmatprep.subr.bf16.mxu0 0
        %2047 = vmatpush1.bf16.msra.mxu0 0
        %2048 = vmatprep.subr.bf16.mxu0 0
        %2049 = vmatpush1.bf16.msra.mxu0 0
        %2050 = vmatprep.subr.bf16.mxu0 0
        %2051 = vmatpush1.bf16.msra.mxu0 0
        %2052 = vmatprep.subr.bf16.mxu0 0
        %2053 = vmatpush1.bf16.msra.mxu0 0
        %2054 = vmatprep.subr.bf16.mxu0 0
        %2055 = vmatpush1.bf16.msra.mxu0 0
        %2056 = vmatprep.mubr.bf16.mxu0 0
        %2057 = vmatmul.mubr.bf16.gmra.mrb[0].mxu0 %v2018
        %v2058 = vpop.f32.mrb[0].mxu0
        %v2059 = vadd.f32 0.0, %v2058
        %v2060 = vpop.f32.mrb[0].mxu0
        %v2061 = vpop.f32.mrb[0].mxu0
        %v2062 = vadd.f32 0.0, %v2061
        %v2063 = vpop.f32.mrb[0].mxu0
        %2064 = vdwg.mxu0
        %v2066 = vsel %vm1512, %v2010, 0
        %v2069 = vsel %vm2020, %v2014, 0
        %2071 = vmatprep.subr.bf16.mxu0 0
        %2072 = vmatpush1.bf16.msra.mxu0 %v2069
        %2073 = vmatprep.subr.bf16.mxu0 0
        %2074 = vmatpush1.bf16.msra.mxu0 0
        %2075 = vmatprep.subr.bf16.mxu0 0
        %2076 = vmatpush1.bf16.msra.mxu0 0
        %2077 = vmatprep.subr.bf16.mxu0 0
        %2078 = vmatpush1.bf16.msra.mxu0 0
        %2079 = vmatprep.subr.bf16.mxu0 0
        %2080 = vmatpush1.bf16.msra.mxu0 0
        %2081 = vmatprep.subr.bf16.mxu0 0
        %2082 = vmatpush1.bf16.msra.mxu0 0
        %2083 = vmatprep.subr.bf16.mxu0 0
        %2084 = vmatpush1.bf16.msra.mxu0 0
        %2085 = vmatprep.subr.bf16.mxu0 0
        %2086 = vmatpush1.bf16.msra.mxu0 0
        %2087 = vmatprep.subr.bf16.mxu0 0
        %2088 = vmatpush1.bf16.msra.mxu0 0
        %2089 = vmatprep.subr.bf16.mxu0 0
        %2090 = vmatpush1.bf16.msra.mxu0 0
        %2091 = vmatprep.subr.bf16.mxu0 0
        %2092 = vmatpush1.bf16.msra.mxu0 0
        %2093 = vmatprep.subr.bf16.mxu0 0
        %2094 = vmatpush1.bf16.msra.mxu0 0
        %2095 = vmatprep.subr.bf16.mxu0 0
        %2096 = vmatpush1.bf16.msra.mxu0 0
        %2097 = vmatprep.subr.bf16.mxu0 0
        %2098 = vmatpush1.bf16.msra.mxu0 0
        %2099 = vmatprep.subr.bf16.mxu0 0
        %2100 = vmatpush1.bf16.msra.mxu0 0
        %2101 = vmatprep.subr.bf16.mxu0 0
        %2102 = vmatpush1.bf16.msra.mxu0 0
        %2103 = vmatprep.mubr.bf16.mxu0 0
        %2104 = vmatmul.mubr.bf16.gmra.mrb[0].mxu0 %v2066
        %v2105 = vpop.f32.mrb[0].mxu0
        %v2106 = vadd.f32 0.0, %v2105
        %v2107 = vpop.f32.mrb[0].mxu0
        %v2108 = vpop.f32.mrb[0].mxu0
        %v2109 = vadd.f32 0.0, %v2108
        %v2110 = vpop.f32.mrb[0].mxu0
        %2111 = vdwg.mxu0
        %v2113 = vsel %vm1512, %v2011, 0
        %v2116 = vsel %vm2020, %v2015, 0
        %2118 = vmatprep.subr.bf16.mxu0 0
        %2119 = vmatpush1.bf16.msra.mxu0 %v2116
        %2120 = vmatprep.subr.bf16.mxu0 0
        %2121 = vmatpush1.bf16.msra.mxu0 0
        %2122 = vmatprep.subr.bf16.mxu0 0
        %2123 = vmatpush1.bf16.msra.mxu0 0
        %2124 = vmatprep.subr.bf16.mxu0 0
        %2125 = vmatpush1.bf16.msra.mxu0 0
        %2126 = vmatprep.subr.bf16.mxu0 0
        %2127 = vmatpush1.bf16.msra.mxu0 0
        %2128 = vmatprep.subr.bf16.mxu0 0
        %2129 = vmatpush1.bf16.msra.mxu0 0
        %2130 = vmatprep.subr.bf16.mxu0 0
        %2131 = vmatpush1.bf16.msra.mxu0 0
        %2132 = vmatprep.subr.bf16.mxu0 0
        %2133 = vmatpush1.bf16.msra.mxu0 0
        %2134 = vmatprep.subr.bf16.mxu0 0
        %2135 = vmatpush1.bf16.msra.mxu0 0
        %2136 = vmatprep.subr.bf16.mxu0 0
        %2137 = vmatpush1.bf16.msra.mxu0 0
        %2138 = vmatprep.subr.bf16.mxu0 0
        %2139 = vmatpush1.bf16.msra.mxu0 0
        %2140 = vmatprep.subr.bf16.mxu0 0
        %2141 = vmatpush1.bf16.msra.mxu0 0
        %2142 = vmatprep.subr.bf16.mxu0 0
        %2143 = vmatpush1.bf16.msra.mxu0 0
        %2144 = vmatprep.subr.bf16.mxu0 0
        %2145 = vmatpush1.bf16.msra.mxu0 0
        %2146 = vmatprep.subr.bf16.mxu0 0
        %2147 = vmatpush1.bf16.msra.mxu0 0
        %2148 = vmatprep.subr.bf16.mxu0 0
        %2149 = vmatpush1.bf16.msra.mxu0 0
        %2150 = vmatprep.mubr.bf16.mxu0 0
        %2151 = vmatmul.mubr.bf16.gmra.mrb[0].mxu0 %v2113
        %v2152 = vpop.f32.mrb[0].mxu0
        %v2153 = vadd.f32 0.0, %v2152
        %v2154 = vpop.f32.mrb[0].mxu0
        %v2155 = vpop.f32.mrb[0].mxu0
        %v2156 = vadd.f32 0.0, %v2155
        %v2157 = vpop.f32.mrb[0].mxu0
        %2158 = vdwg.mxu0
        %v2160 = vsel %vm1512, %v2012, 0
        %v2163 = vsel %vm2020, %v2016, 0
        %2165 = vmatprep.subr.bf16.mxu0 0
        %2166 = vmatpush1.bf16.msra.mxu0 %v2163
        %2167 = vmatprep.subr.bf16.mxu0 0
        %2168 = vmatpush1.bf16.msra.mxu0 0
        %2169 = vmatprep.subr.bf16.mxu0 0
        %2170 = vmatpush1.bf16.msra.mxu0 0
        %2171 = vmatprep.subr.bf16.mxu0 0
        %2172 = vmatpush1.bf16.msra.mxu0 0
        %2173 = vmatprep.subr.bf16.mxu0 0
        %2174 = vmatpush1.bf16.msra.mxu0 0
        %2175 = vmatprep.subr.bf16.mxu0 0
        %2176 = vmatpush1.bf16.msra.mxu0 0
        %2177 = vmatprep.subr.bf16.mxu0 0
        %2178 = vmatpush1.bf16.msra.mxu0 0
        %2179 = vmatprep.subr.bf16.mxu0 0
        %2180 = vmatpush1.bf16.msra.mxu0 0
        %2181 = vmatprep.subr.bf16.mxu0 0
        %2182 = vmatpush1.bf16.msra.mxu0 0
        %2183 = vmatprep.subr.bf16.mxu0 0
        %2184 = vmatpush1.bf16.msra.mxu0 0
        %2185 = vmatprep.subr.bf16.mxu0 0
        %2186 = vmatpush1.bf16.msra.mxu0 0
        %2187 = vmatprep.subr.bf16.mxu0 0
        %2188 = vmatpush1.bf16.msra.mxu0 0
        %2189 = vmatprep.subr.bf16.mxu0 0
        %2190 = vmatpush1.bf16.msra.mxu0 0
        %2191 = vmatprep.subr.bf16.mxu0 0
        %2192 = vmatpush1.bf16.msra.mxu0 0
        %2193 = vmatprep.subr.bf16.mxu0 0
        %2194 = vmatpush1.bf16.msra.mxu0 0
        %2195 = vmatprep.subr.bf16.mxu0 0
        %2196 = vmatpush1.bf16.msra.mxu0 0
        %2197 = vmatprep.mubr.bf16.mxu0 0
        %2198 = vmatmul.mubr.bf16.gmra.mrb[0].mxu0 %v2160
        %v2199 = vpop.f32.mrb[0].mxu0
        %v2200 = vadd.f32 0.0, %v2199
        %v2201 = vpop.f32.mrb[0].mxu0
        %v2202 = vpop.f32.mrb[0].mxu0
        %v2203 = vadd.f32 0.0, %v2202
        %v2204 = vpop.f32.mrb[0].mxu0
        %2205 = vdwg.mxu0
        %v2206 = vsel %vm1373, %v2059, 0.0
        %v2207 = vsel %vm1373, %v2106, 0.0
        %v2208 = vadd.f32 %v2206, %v2207
        %v2209 = vsel %vm1373, %v2153, 0.0
        %v2210 = vadd.f32 %v2208, %v2209
        %v2211 = vsel %vm1373, %v2200, 0.0
        %v2212 = vadd.f32 %v2210, %v2211
        %v2213 = vsel %vm1373, %v2062, 0.0
        %v2214 = vsel %vm1373, %v2109, 0.0
        %v2215 = vadd.f32 %v2213, %v2214
        %v2216 = vsel %vm1373, %v2156, 0.0
        %v2217 = vadd.f32 %v2215, %v2216
        %v2218 = vsel %vm1373, %v2203, 0.0
        %v2219 = vadd.f32 %v2217, %v2218
        %v2220 = vadd.f32 %v1369, %v2212
        %v2221 = vadd.f32 %v1370, %v2219
        %v2222 = vld [vmem:[%s792] sm:$0x1]
        %v2224 = vlaneseq
        %v2225 = vshrl.u32 %v2224, 7
        %v2226 = vsub.s32 0, %v2225
        %v2227 = vrot.slane %v2222, %v2226
        %v2229 = vadd.f32 %v2220, %v2227
        %v2230 = vadd.f32 %v2221, %v2227
        %v2231 = vld [vmem:[%s795] sm:$0x1]
        %v2232 = vld [vmem:[%s798] sm:$0x1]
        %v2233 = vsel %vm1373, %v2229, 0.0
        %2234 = vadd.xlane.f32.xlu0 %v2233
        %v2235 = vpop.xlane.xlu0 %2234
        %v2236 = vsel %vm1373, %v2230, 0.0
        %2237 = vadd.xlane.f32.xlu0 %v2236
        %v2238 = vpop.xlane.xlu0 %2237
        %v2239 = vmul.f32 %v2235, %v1380
        %v2240 = vmul.f32 %v2238, %v1380
        %v2241 = vsub.f32 %v2229, %v2239
        %v2242 = vsub.f32 %v2230, %v2240
        %v2243 = vmul.f32 %v2241, %v2241
        %v2244 = vmul.f32 %v2242, %v2242
        %v2245 = vsel %vm1373, %v2243, 0.0
        %2246 = vadd.xlane.f32.xlu0 %v2245
        %v2247 = vpop.xlane.xlu0 %2246
        %v2248 = vsel %vm1373, %v2244, 0.0
        %2249 = vadd.xlane.f32.xlu0 %v2248
        %v2250 = vpop.xlane.xlu0 %2249
        %v2251 = vmul.f32 %v2247, %v1380
        %v2252 = vmul.f32 %v2250, %v1380
        %v2253 = vadd.f32 %v2251, 1e-06
        %v2254 = vadd.f32 %v2252, 1e-06
        %v2255 = vrsqrt.pop %v2253
        %v2256 = vrsqrt.pop %v2254
        %v2257 = vmul.f32 %v2241, %v2255
        %v2258 = vmul.f32 %v2242, %v2256
        %v2260 = vlaneseq
        %v2261 = vshrl.u32 %v2260, 7
        %v2262 = vsub.s32 0, %v2261
        %v2263 = vrot.slane %v2231, %v2262
        %v2265 = vmul.f32 %v2257, %v2263
        %v2266 = vmul.f32 %v2258, %v2263
        %v2268 = vlaneseq
        %v2269 = vshrl.u32 %v2268, 7
        %v2270 = vsub.s32 0, %v2269
        %v2271 = vrot.slane %v2232, %v2270
        %v2273 = vadd.f32 %v2265, %v2271
        %v2274 = vadd.f32 %v2266, %v2271
        %v2275 = vpack.c.bf16 %v2274, %v2273
        %v2276 = vld [vmem:[%s803] sm:$0xf]
        %v2277 = vld [vmem:[%s803 + $0x4] sm:$0xf]
        %v2278 = vld [vmem:[%s803 + $0x8] sm:$0xf]
        %v2279 = vld [vmem:[%s803 + $0xc] sm:$0xf]
        %v2280 = vld [vmem:[%s806] sm:$0x1]
        %v2282 = vlaneseq
        %v2283 = vshrl.u32 %v2282, 7
        %v2284 = vsub.s32 0, %v2283
        %v2285 = vrot.slane %v2280, %v2284
        %v2291 = vunpack.c.l.b16 %v2276
        %v2292 = vunpack.c.l.b16 %v2277
        %v2293 = vunpack.c.l.b16 %v2278
        %v2294 = vunpack.c.l.b16 %v2279
        %v2295 = vpack.c.b16 %v2292, %v2291
        %v2296 = vpack.c.b16 %v2294, %v2293
        %v2300 = vsel %vm1373, %v2275, 0
        %2302 = vmatprep.subr.bf16.mxu0 0
        %2303 = vmatpush1.bf16.msra.mxu0 %v2295
        %2304 = vmatprep.subr.bf16.mxu0 0
        %2305 = vmatpush1.bf16.msra.mxu0 %v2296
        %2306 = vmatprep.subr.bf16.mxu0 0
        %2307 = vmatpush1.bf16.msra.mxu0 0
        %2308 = vmatprep.subr.bf16.mxu0 0
        %2309 = vmatpush1.bf16.msra.mxu0 0
        %2310 = vmatprep.subr.bf16.mxu0 0
        %2311 = vmatpush1.bf16.msra.mxu0 0
        %2312 = vmatprep.subr.bf16.mxu0 0
        %2313 = vmatpush1.bf16.msra.mxu0 0
        %2314 = vmatprep.subr.bf16.mxu0 0
        %2315 = vmatpush1.bf16.msra.mxu0 0
        %2316 = vmatprep.subr.bf16.mxu0 0
        %2317 = vmatpush1.bf16.msra.mxu0 0
        %2318 = vmatprep.subr.bf16.mxu0 0
        %2319 = vmatpush1.bf16.msra.mxu0 0
        %2320 = vmatprep.subr.bf16.mxu0 0
        %2321 = vmatpush1.bf16.msra.mxu0 0
        %2322 = vmatprep.subr.bf16.mxu0 0
        %2323 = vmatpush1.bf16.msra.mxu0 0
        %2324 = vmatprep.subr.bf16.mxu0 0
        %2325 = vmatpush1.bf16.msra.mxu0 0
        %2326 = vmatprep.subr.bf16.mxu0 0
        %2327 = vmatpush1.bf16.msra.mxu0 0
        %2328 = vmatprep.subr.bf16.mxu0 0
        %2329 = vmatpush1.bf16.msra.mxu0 0
        %2330 = vmatprep.subr.bf16.mxu0 0
        %2331 = vmatpush1.bf16.msra.mxu0 0
        %2332 = vmatprep.subr.bf16.mxu0 0
        %2333 = vmatpush1.bf16.msra.mxu0 0
        %2334 = vmatprep.mubr.bf16.mxu0 0
        %2335 = vmatmul.mubr.bf16.gmra.mrb[0].mxu0 %v2300
        %v2336 = vpop.f32.mrb[0].mxu0
        %v2337 = vadd.f32 %v2285, %v2336
        %v2338 = vpop.f32.mrb[0].mxu0
        %v2339 = vpop.f32.mrb[0].mxu0
        %v2340 = vadd.f32 %v2285, %v2339
        %v2341 = vpop.f32.mrb[0].mxu0
        %2342 = vdwg.mxu0
        %v2343 = vmul.f32 %v2337, 0.5
        %v2344 = vmul.f32 %v2340, 0.5
        %v2345 = vmul.f32 %v2337, 0.044715
        %v2346 = vmul.f32 %v2340, 0.044715
        %v2347 = vmul.f32 %v2345, %v2337
        %v2348 = vmul.f32 %v2346, %v2340
        %v2349 = vmul.f32 %v2347, %v2337
        %v2350 = vmul.f32 %v2348, %v2340
        %v2351 = vadd.f32 %v2337, %v2349
        %v2352 = vadd.f32 %v2340, %v2350
        %v2353 = vmul.f32 %v2351, 0.7978846
        %v2354 = vmul.f32 %v2352, 0.7978846
        %v2355 = vtanh.pop %v2353
        %v2356 = vtanh.pop %v2354
        %v2357 = vadd.f32 %v2355, 1.0
        %v2358 = vadd.f32 %v2356, 1.0
        %v2359 = vmul.f32 %v2343, %v2357
        %v2360 = vmul.f32 %v2344, %v2358
        %v2361 = vpack.c.bf16 %v2360, %v2359
        %v2362 = vld [vmem:[%s811] sm:$0xf]
        %v2363 = vld [vmem:[%s811 + $0x4] sm:$0xf]
        %v2364 = vld [vmem:[%s811 + $0x8] sm:$0xf]
        %v2365 = vld [vmem:[%s811 + $0xc] sm:$0xf]
        %v2366 = vld [vmem:[%s811 + $0x10] sm:$0xf]
        %v2367 = vld [vmem:[%s811 + $0x14] sm:$0xf]
        %v2368 = vld [vmem:[%s811 + $0x18] sm:$0xf]
        %v2369 = vld [vmem:[%s811 + $0x1c] sm:$0xf]
        %v2370 = vld [vmem:[%s811 + $0x20] sm:$0xf]
        %v2371 = vld [vmem:[%s811 + $0x24] sm:$0xf]
        %v2372 = vld [vmem:[%s811 + $0x28] sm:$0xf]
        %v2373 = vld [vmem:[%s811 + $0x2c] sm:$0xf]
        %v2374 = vld [vmem:[%s811 + $0x30] sm:$0xf]
        %v2375 = vld [vmem:[%s811 + $0x34] sm:$0xf]
        %v2376 = vld [vmem:[%s811 + $0x38] sm:$0xf]
        %v2377 = vld [vmem:[%s811 + $0x3c] sm:$0xf]
        %v2378 = vld [vmem:[%s814] sm:$0x1]
        %v2380 = vlaneseq
        %v2381 = vshrl.u32 %v2380, 7
        %v2382 = vsub.s32 0, %v2381
        %v2383 = vrot.slane %v2378, %v2382
        %v2401 = vunpack.c.l.b16 %v2362
        %v2402 = vunpack.c.l.b16 %v2363
        %v2403 = vunpack.c.l.b16 %v2364
        %v2404 = vunpack.c.l.b16 %v2365
        %v2405 = vunpack.c.l.b16 %v2366
        %v2406 = vunpack.c.l.b16 %v2367
        %v2407 = vunpack.c.l.b16 %v2368
        %v2408 = vunpack.c.l.b16 %v2369
        %v2409 = vunpack.c.l.b16 %v2370
        %v2410 = vunpack.c.l.b16 %v2371
        %v2411 = vunpack.c.l.b16 %v2372
        %v2412 = vunpack.c.l.b16 %v2373
        %v2413 = vunpack.c.l.b16 %v2374
        %v2414 = vunpack.c.l.b16 %v2375
        %v2415 = vunpack.c.l.b16 %v2376
        %v2416 = vunpack.c.l.b16 %v2377
        %v2417 = vpack.c.b16 %v2402, %v2401
        %v2418 = vpack.c.b16 %v2404, %v2403
        %v2419 = vpack.c.b16 %v2406, %v2405
        %v2420 = vpack.c.b16 %v2408, %v2407
        %v2421 = vpack.c.b16 %v2410, %v2409
        %v2422 = vpack.c.b16 %v2412, %v2411
        %v2423 = vpack.c.b16 %v2414, %v2413
        %v2424 = vpack.c.b16 %v2416, %v2415
        %2433 = vmatprep.subr.bf16.mxu0 0
        %2434 = vmatpush1.bf16.msra.mxu0 %v2417
        %2435 = vmatprep.subr.bf16.mxu0 0
        %2436 = vmatpush1.bf16.msra.mxu0 %v2418
        %2437 = vmatprep.subr.bf16.mxu0 0
        %2438 = vmatpush1.bf16.msra.mxu0 %v2419
        %2439 = vmatprep.subr.bf16.mxu0 0
        %2440 = vmatpush1.bf16.msra.mxu0 %v2420
        %2441 = vmatprep.subr.bf16.mxu0 0
        %2442 = vmatpush1.bf16.msra.mxu0 %v2421
        %2443 = vmatprep.subr.bf16.mxu0 0
        %2444 = vmatpush1.bf16.msra.mxu0 %v2422
        %2445 = vmatprep.subr.bf16.mxu0 0
        %2446 = vmatpush1.bf16.msra.mxu0 %v2423
        %2447 = vmatprep.subr.bf16.mxu0 0
        %2448 = vmatpush1.bf16.msra.mxu0 %v2424
        %2449 = vmatprep.subr.bf16.mxu0 0
        %2450 = vmatpush1.bf16.msra.mxu0 0
        %2451 = vmatprep.subr.bf16.mxu0 0
        %2452 = vmatpush1.bf16.msra.mxu0 0
        %2453 = vmatprep.subr.bf16.mxu0 0
        %2454 = vmatpush1.bf16.msra.mxu0 0
        %2455 = vmatprep.subr.bf16.mxu0 0
        %2456 = vmatpush1.bf16.msra.mxu0 0
        %2457 = vmatprep.subr.bf16.mxu0 0
        %2458 = vmatpush1.bf16.msra.mxu0 0
        %2459 = vmatprep.subr.bf16.mxu0 0
        %2460 = vmatpush1.bf16.msra.mxu0 0
        %2461 = vmatprep.subr.bf16.mxu0 0
        %2462 = vmatpush1.bf16.msra.mxu0 0
        %2463 = vmatprep.subr.bf16.mxu0 0
        %2464 = vmatpush1.bf16.msra.mxu0 0
        %2465 = vmatprep.mubr.bf16.mxu0 0
        %2466 = vmatmul.mubr.bf16.gmra.mrb[0].mxu0 %v2361
        %v2467 = vpop.f32.mrb[0].mxu0
        %v2468 = vadd.f32 %v2383, %v2467
        %v2469 = vpop.f32.mrb[0].mxu0
        %v2470 = vpop.f32.mrb[0].mxu0
        %v2471 = vadd.f32 %v2383, %v2470
        %v2472 = vpop.f32.mrb[0].mxu0
        %2473 = vdwg.mxu0
        %v2474 = vadd.f32 %v2229, %v2468
        %v2475 = vadd.f32 %v2230, %v2471
        %2476 = vst.msk [vmem:[#allocation2] sm:$0xff] %vm1373, %v2474
        %2477 = vst.msk [vmem:[#allocation2 + $0x8] sm:$0xff] %vm1373, %v2475
        %p2478 = scmp.eq.s32.totalorder %s33, 1
        // Predicated region
        $region109: #{vit_forward.1} parent=103 // pred_check
          %p2479 = pneg %p2478
        $region110: #{vit_forward.1} parent=103 // pred_check_branch
          %2481 = sbr.rel (%p2479) target = $region112
        $region111: #{vit_forward.1} parent=103 // pred_region
          %v2483 = vrot.slane %v2475, 7
          %vm2485 = vcmask 1040384
          %v2486 = vsel %vm2485, %v2474, %v2483
          %v2487 = vld [vmem:[%s17] sm:$0x1]
          %v2488 = vld [vmem:[%s18] sm:$0x1]
          %vm2489 = vcmask 254976
          %v2490 = vsel %vm2489, %v2486, 0.0
          %2491 = vadd.xlane.f32.xlu0 %v2490
          %v2492 = vpop.xlane.xlu0 %2491
          %v2493 = vmul.f32 %v2492, %v1380
          %v2494 = vsub.f32 %v2486, %v2493
          %v2495 = vmul.f32 %v2494, %v2494
          %v2496 = vsel %vm2489, %v2495, 0.0
          %2497 = vadd.xlane.f32.xlu0 %v2496
          %v2498 = vpop.xlane.xlu0 %2497
          %v2499 = vmul.f32 %v2498, %v1380
          %v2500 = vadd.f32 %v2499, 1e-06
          %v2501 = vrsqrt.pop %v2500
          %v2502 = vmul.f32 %v2494, %v2501
          %v2504 = vlaneseq
          %v2505 = vshrl.u32 %v2504, 7
          %v2506 = vsub.s32 0, %v2505
          %v2507 = vrot.slane %v2487, %v2506
          %v2509 = vmul.f32 %v2502, %v2507
          %v2511 = vlaneseq
          %v2512 = vshrl.u32 %v2511, 7
          %v2513 = vsub.s32 0, %v2512
          %v2514 = vrot.slane %v2488, %v2513
          %v2516 = vadd.f32 %v2509, %v2514
          %v2517 = vpack.c.bf16 %v2516, %v2516
          %v2518 = vld [vmem:[%s19] sm:$0xf]
          %v2519 = vld [vmem:[%s19 + $0x4] sm:$0xf]
          %v2520 = vld [vmem:[%s19 + $0x8] sm:$0xf]
          %v2521 = vld [vmem:[%s19 + $0xc] sm:$0xf]
          %v2522 = vld [vmem:[%s20] sm:$0x1]
          %v2524 = vlaneseq
          %v2525 = vshrl.u32 %v2524, 7
          %v2526 = vsub.s32 0, %v2525
          %v2527 = vrot.slane %v2522, %v2526
          %v2533 = vunpack.c.l.b16 %v2518
          %v2534 = vunpack.c.l.b16 %v2519
          %v2535 = vunpack.c.l.b16 %v2520
          %v2536 = vunpack.c.l.b16 %v2521
          %v2537 = vpack.c.b16 %v2534, %v2533
          %v2538 = vpack.c.b16 %v2536, %v2535
          %v2542 = vsel %vm1373, %v2517, 0
          %2544 = vmatprep.subr.bf16.mxu0 0
          %2545 = vmatpush1.bf16.msra.mxu0 %v2537
          %2546 = vmatprep.subr.bf16.mxu0 0
          %2547 = vmatpush1.bf16.msra.mxu0 %v2538
          %2548 = vmatprep.subr.bf16.mxu0 0
          %2549 = vmatpush1.bf16.msra.mxu0 0
          %2550 = vmatprep.subr.bf16.mxu0 0
          %2551 = vmatpush1.bf16.msra.mxu0 0
          %2552 = vmatprep.subr.bf16.mxu0 0
          %2553 = vmatpush1.bf16.msra.mxu0 0
          %2554 = vmatprep.subr.bf16.mxu0 0
          %2555 = vmatpush1.bf16.msra.mxu0 0
          %2556 = vmatprep.subr.bf16.mxu0 0
          %2557 = vmatpush1.bf16.msra.mxu0 0
          %2558 = vmatprep.subr.bf16.mxu0 0
          %2559 = vmatpush1.bf16.msra.mxu0 0
          %2560 = vmatprep.subr.bf16.mxu0 0
          %2561 = vmatpush1.bf16.msra.mxu0 0
          %2562 = vmatprep.subr.bf16.mxu0 0
          %2563 = vmatpush1.bf16.msra.mxu0 0
          %2564 = vmatprep.subr.bf16.mxu0 0
          %2565 = vmatpush1.bf16.msra.mxu0 0
          %2566 = vmatprep.subr.bf16.mxu0 0
          %2567 = vmatpush1.bf16.msra.mxu0 0
          %2568 = vmatprep.subr.bf16.mxu0 0
          %2569 = vmatpush1.bf16.msra.mxu0 0
          %2570 = vmatprep.subr.bf16.mxu0 0
          %2571 = vmatpush1.bf16.msra.mxu0 0
          %2572 = vmatprep.subr.bf16.mxu0 0
          %2573 = vmatpush1.bf16.msra.mxu0 0
          %2574 = vmatprep.subr.bf16.mxu0 0
          %2575 = vmatpush1.bf16.msra.mxu0 0
          %2576 = vmatprep.mubr.bf16.mxu0 0
          %2577 = vmatmul.mubr.bf16.gmra.mrb[0].mxu0 %v2542
          %v2578 = vpop.f32.mrb[0].mxu0
          %v2579 = vadd.f32 %v2527, %v2578
          %v2580 = vpop.f32.mrb[0].mxu0
          %v2581 = vpop.f32.mrb[0].mxu0
          %v2582 = vpop.f32.mrb[0].mxu0
          %2583 = vdwg.mxu0
          %2584 = vst [vmem:[#allocation3] sm:$0x3] %v2579
        $region112: #{vit_forward.1} parent=103 // pred_fallthru
          _
        // Predicated region
        $region113: #{vit_forward.1} parent=103 // pred_check
          %p2585 = pneg %p547
        $region114: #{vit_forward.1} parent=103 // pred_check_branch
          %2587 = sbr.rel (%p2585) target = $region116
        $region115: #{vit_forward.1} parent=103 // pred_region
          %s2589 = ssub.s32 32, 32
          %2590 = vsyncadd [#allocation4], %s2589
          %s2592 = sshll.u32 [#allocation3], 4
          %s2593 = int_to_ptr.vmem [resolvable:$true] %s2592
          %2595 = dma.vmem_to_hbm [thread:$0]  %s2593, 32, %s21, [#allocation4]
        $region116: #{vit_forward.1} parent=103 // pred_fallthru
          _
        // Predicated region
        $region117: #{vit_forward.1} parent=103 // pred_check
          %p2596 = pneg %p547
        $region118: #{vit_forward.1} parent=103 // pred_check_branch
          %2598 = sbr.rel (%p2596) target = $region120
        $region119: #{vit_forward.1} parent=103 // pred_region
          %2599 = dma.done [#allocation4], 32
        $region120: #{vit_forward.1} parent=103 // pred_fallthru
          _
      $region104: #{vit_forward.1} parent=5 // pred_fallthru
        _
      %p2600 = scmp.le.s32.totalorder 2, %s28
      // Predicated region
      $region121: #{vit_forward.1} parent=5 // pred_check
        %p2601 = pneg %p2600
      $region122: #{vit_forward.1} parent=5 // pred_check_branch
        %2603 = sbr.rel (%p2601) target = $region124
      $region123: #{vit_forward.1} parent=5 // pred_region
        %s2604 = ssub.s32 %s28, 2
      $region124: #{vit_forward.1} parent=5 // pred_fallthru
        _
    $region6: #{vit_forward.1} parent=1 // loop_footer
      %s32 = sadd.s32 1, %s28
    $region7: #{vit_forward.1} parent=1 // loop_footer_branch
      %27 = sbr.rel target = $region3
    $region8: #{vit_forward.1} parent=1 // loop_exit
      _
    %2605 = vsyncpa [#allocation4], 1
    %s2606 = scalar_lea.sflag [#allocation4], 1
    %2607 = vsyncpa %s2606, 1

</llo_original>
